<compile_context>
chip_gen: v7x
topology: tpu7x:2x2x1
jax: 0.10.0
libtpu: 0.0.40
codegen_flags: <defaults>
</compile_context>

<pallas_src>
import functools

import numpy as np
import jax
import jax.numpy as jnp
from jax import lax
from jax.experimental import pallas as pl
from jax.experimental.pallas import tpu as pltpu


def _basic_block_kernel(x_ref, w1_ref, b1_ref, w2_ref, b2_ref, mask_ref, out_ref,
                        *, W):
    """Fused conv3x3 -> BN -> ELU -> conv3x3 -> BN -> +residual -> ELU.

    x_ref    : VMEM (C, L)       L = BT*H*W; batch+spatial on the lane axis (f32)
    w1_ref   : VMEM (9, C, C)    tap-major conv1 weights, BN1 scale folded (bf16)
    b1_ref   : VMEM (C, 1)       folded BN1 shift (f32)
    w2_ref   : VMEM (9, C, C)    tap-major conv2 weights, BN2 scale folded (bf16)
    b2_ref   : VMEM (C, 1)       folded BN2 shift (f32)
    mask_ref : VMEM (9, C, L)    per-tap boundary validity masks, pre-broadcast (f32)
    out_ref  : VMEM (C, L)       f32 output slab
    """
    f32, bf16 = jnp.float32, jnp.bfloat16
    L = x_ref.shape[-1]
    CENTER = 4                                  # tap (dy, dx) = (1, 1)

    # Tap k = dy*3+dx reads source pixel offset s = (dy-1)*W + (dx-1) on the
    # image-major flattened lane axis; a circular roll by -s brings it to the
    # output position.  Any source that falls outside its own image (including
    # wraps across image boundaries inside the slab) is zeroed by the masks.
    shifts = [(-((dy - 1) * W + (dx - 1))) % L for dy in range(3) for dx in range(3)]

    # Hoist parameter loads (once per grid step; weight blocks are grid-invariant).
    w1 = [w1_ref[k] for k in range(9)]          # each (C, C) bf16
    w2 = [w2_ref[k] for k in range(9)]          # each (C, C) bf16
    b1 = b1_ref[...]                            # (C, 1) f32
    b2 = b2_ref[...]                            # (C, 1) f32

    def elu(v):
        # ELU(alpha=1).  exp(v)-1 instead of expm1: guaranteed Mosaic lowering;
        # exp goes to the EUP slot (free alongside VPU/MXU work).
        return jnp.where(v > 0, v, jnp.exp(v) - 1.0)

    def conv3x3(inp_f32, inp_bf, w_taps):
        # One bf16 matmul per tap over the whole batch slab, f32 accumulation.
        # Accumulator is initialized from the center tap (no zeros + add); rolls
        # stay in f32 (safe lowering), windows are cast to bf16 at the dot.
        acc = jnp.dot(w_taps[CENTER], inp_bf, preferred_element_type=f32)
        for k in range(9):
            if k == CENTER:
                continue
            win = pltpu.roll(inp_f32, shift=shifts[k], axis=1) * mask_ref[k]
            acc = acc + jnp.dot(w_taps[k], win.astype(bf16),
                                preferred_element_type=f32)
        return acc

    x_f32 = x_ref[...]                          # exact residual path (f32)
    x_bf = x_f32.astype(bf16)

    h = elu(conv3x3(x_f32, x_bf, w1) + b1)                   # conv1 + bn1 + ELU
    o = elu(conv3x3(h, h.astype(bf16), w2) + b2 + x_f32)     # conv2 + bn2 + id + ELU
    out_ref[...] = o.astype(out_ref.dtype)


def _pick_bt(N, C, HW):
    """Images per grid step: largest divisor of N that (a) leaves >= 2 grid steps
    when N >= 2 (so "parallel" can shard across v7x's two TensorCores), (b) keeps
    the lane axis <= 2048 (vreg pressure), and (c) keeps the double-buffered
    tiles comfortably inside every generation's scoped-VMEM limit."""
    bt = 1
    for cand in range(1, N + 1):
        if N % cand:
            continue
        if N >= 2 and N // cand < 2:
            continue
        if cand * HW > 2048:
            continue
        tile_bytes = (2 * 2 * C * cand * HW * 4      # x + out, double-buffered
                      + 2 * 9 * C * cand * HW * 4)   # masks
        if tile_bytes > (12 << 20):
            continue
        bt = cand
    return bt


def basic_block_pallas(x, params, eps=1e-5):
    """x: (N, Cin, H, W) float32 NCHW. Returns (N, Cout, H, W) float32."""
    N, Cin, H, W = x.shape
    Cout = params["conv1_w"].shape[0]
    # Identity shortcut (downsample=None) requires matching channel counts.
    assert Cin == Cout, "BasicBlock with downsample=None requires inplanes == planes"
    C, HW = Cout, H * W
    assert HW % 128 == 0, "lane-dense layout assumes H*W is a multiple of 128"

    # Fold eval-mode BatchNorm: scale into the (bf16) conv weights, per-channel
    # f32 shift kept separately.  Tap-major layout (9, Cout, Cin), k = dy*3+dx.
    def fold(w, g, b, m, v):
        s = g / jnp.sqrt(v + eps)                                   # (Cout,)
        shift = (b - m * s).reshape(-1, 1).astype(jnp.float32)      # (Cout, 1)
        w_t = jnp.transpose(w, (2, 3, 0, 1)).reshape(9, w.shape[0], w.shape[1])
        w_t = (w_t * s[None, :, None]).astype(jnp.bfloat16)
        return w_t, shift

    w1, b1 = fold(params["conv1_w"], params["bn1_g"], params["bn1_b"],
                  params["bn1_m"], params["bn1_v"])
    w2, b2 = fold(params["conv2_w"], params["bn2_g"], params["bn2_b"],
                  params["bn2_m"], params["bn2_v"])

    BT = _pick_bt(N, C, HW)
    L = BT * HW

    # Per-tap boundary validity masks, tiled over the BT images of a slab and
    # pre-broadcast over channels (no broadcast_in_dim inside the kernel loop).
    idx = np.arange(HW)
    rr, cc = idx // W, idx % W
    base = np.stack([
        ((rr + dy - 1 >= 0) & (rr + dy - 1 < H) &
         (cc + dx - 1 >= 0) & (cc + dx - 1 < W)).astype(np.float32)
        for dy in range(3) for dx in range(3)])                      # (9, HW)
    masks = jnp.asarray(
        np.broadcast_to(np.tile(base, (1, BT))[:, None, :], (9, C, L)).copy())

    # Channel-major, batch+spatial flattened onto the lane axis.
    x_flat = jnp.transpose(x, (1, 0, 2, 3)).reshape(C, N * HW).astype(jnp.float32)

    kernel = functools.partial(_basic_block_kernel, W=W)

    out = pl.pallas_call(
        kernel,
        out_shape=jax.ShapeDtypeStruct((C, N * HW), jnp.float32),
        grid=(N // BT,),
        in_specs=[
            pl.BlockSpec((C, L), lambda n: (0, n)),           # x (f32)
            pl.BlockSpec((9, C, C), lambda n: (0, 0, 0)),     # w1 (bf16, BN folded)
            pl.BlockSpec((C, 1), lambda n: (0, 0)),           # b1 (f32)
            pl.BlockSpec((9, C, C), lambda n: (0, 0, 0)),     # w2 (bf16, BN folded)
            pl.BlockSpec((C, 1), lambda n: (0, 0)),           # b2 (f32)
            pl.BlockSpec((9, C, L), lambda n: (0, 0, 0)),     # tap masks (f32)
        ],
        out_specs=pl.BlockSpec((C, L), lambda n: (0, n)),
        compiler_params=pltpu.CompilerParams(
            dimension_semantics=("parallel",),
            vmem_limit_bytes=32 * 1024 * 1024),
    )(x_flat, w1, b1, w2, b2, masks)

    return jnp.transpose(out.reshape(C, N, H, W), (1, 0, 2, 3))


def basic_block_ref(x, params, eps=1e-5):
    """Strict f32 pure-JAX reference (NCHW), eval-mode BN, for correctness checks."""
    def conv(x_, w):
        return lax.conv_general_dilated(
            x_, w, window_strides=(1, 1), padding=((1, 1), (1, 1)),
            dimension_numbers=("NCHW", "OIHW", "NCHW"),
            precision=lax.Precision.HIGHEST)

    def bn(x_, g, b, m, v):
        g, b, m, v = (a[None, :, None, None] for a in (g, b, m, v))
        return (x_ - m) / jnp.sqrt(v + eps) * g + b

    out = jax.nn.elu(bn(conv(x, params["conv1_w"]),
                        params["bn1_g"], params["bn1_b"],
                        params["bn1_m"], params["bn1_v"]))
    out = bn(conv(out, params["conv2_w"]),
             params["bn2_g"], params["bn2_b"], params["bn2_m"], params["bn2_v"])
    return jax.nn.elu(out + x)


if __name__ == "__main__":
    # Small shapes consistent with BasicBlock(inplanes=4, planes=4, stride=1,
    # downsample=None); N=8 exercises the batched (BT=4, grid=(2,)) path.
    N, C, H, W = 8, 4, 16, 16

    key = jax.random.PRNGKey(0)
    ks = jax.random.split(key, 11)
    params = {
        "conv1_w": 0.2 * jax.random.normal(ks[0], (C, C, 3, 3), jnp.float32),
        "conv2_w": 0.2 * jax.random.normal(ks[1], (C, C, 3, 3), jnp.float32),
        "bn1_g": 1.0 + 0.1 * jax.random.normal(ks[2], (C,), jnp.float32),
        "bn1_b": 0.1 * jax.random.normal(ks[3], (C,), jnp.float32),
        "bn1_m": 0.1 * jax.random.normal(ks[4], (C,), jnp.float32),
        "bn1_v": 0.5 + jax.random.uniform(ks[5], (C,), jnp.float32),
        "bn2_g": 1.0 + 0.1 * jax.random.normal(ks[6], (C,), jnp.float32),
        "bn2_b": 0.1 * jax.random.normal(ks[7], (C,), jnp.float32),
        "bn2_m": 0.1 * jax.random.normal(ks[8], (C,), jnp.float32),
        "bn2_v": 0.5 + jax.random.uniform(ks[9], (C,), jnp.float32),
    }
    x = jax.random.normal(ks[10], (N, C, H, W), jnp.float32)

    out = jax.block_until_ready(basic_block_pallas(x, params))
    ref = basic_block_ref(x, params)

    assert out.shape == (N, C, H, W)
    err = jnp.abs(out - ref)
    # bf16 MXU operands (single-pass path): two chained 3x3 convs on unit-variance
    # data give ~1e-2-level worst-case absolute deviation vs the strict-f32
    # reference; tolerance is set accordingly and the mean error is also checked.
    assert jnp.allclose(out, ref, rtol=5e-2, atol=5e-2), float(jnp.max(err))
    assert float(jnp.mean(err)) < 1e-2, float(jnp.mean(err))

    print("KERNEL_OK")
</pallas_src>

<mosaic_0001>
module attributes {stable_mosaic.version = 11 : i64} {
  func.func @_basic_block_kernel(%arg0: i32, %arg1: memref<4x1024xf32, #tpu.memory_space<vmem>>, %arg2: memref<9x4x4xbf16, #tpu.memory_space<vmem>>, %arg3: memref<4x1xf32, #tpu.memory_space<vmem>>, %arg4: memref<9x4x4xbf16, #tpu.memory_space<vmem>>, %arg5: memref<4x1xf32, #tpu.memory_space<vmem>>, %arg6: memref<9x4x1024xf32, #tpu.memory_space<vmem>>, %arg7: memref<4x1024xf32, #tpu.memory_space<vmem>>) attributes {dimension_semantics = [#tpu.dimension_semantics<parallel>], iteration_bounds = array<i64: 2>, scalar_prefetch = 0 : i64, scratch_operands = 0 : i64, tpu.core_type = #tpu.core_type<tc>, window_params = [{transform_indices = @transform_0, window_bounds = array<i64: 4, 1024>}, {pipeline_mode = #tpu.pipeline_mode<synchronous>, transform_indices = @transform_1, window_bounds = array<i64: 9, 4, 4>}, {pipeline_mode = #tpu.pipeline_mode<synchronous>, transform_indices = @transform_2, window_bounds = array<i64: 4, 1>}, {pipeline_mode = #tpu.pipeline_mode<synchronous>, transform_indices = @transform_3, window_bounds = array<i64: 9, 4, 4>}, {pipeline_mode = #tpu.pipeline_mode<synchronous>, transform_indices = @transform_4, window_bounds = array<i64: 4, 1>}, {pipeline_mode = #tpu.pipeline_mode<synchronous>, transform_indices = @transform_5, window_bounds = array<i64: 9, 4, 1024>}, {transform_indices = @transform_6, window_bounds = array<i64: 4, 1024>}]} {
    %c0 = arith.constant 0 : index
    %c0_0 = arith.constant 0 : index
    %c0_1 = arith.constant 0 : index
    %0 = vector.load %arg2[%c0, %c0_0, %c0_1] : memref<9x4x4xbf16, #tpu.memory_space<vmem>>, vector<1x4x4xbf16>
    %1 = vector.shape_cast %0 : vector<1x4x4xbf16> to vector<4x4xbf16>
    %c1 = arith.constant 1 : index
    %c0_2 = arith.constant 0 : index
    %c0_3 = arith.constant 0 : index
    %2 = vector.load %arg2[%c1, %c0_2, %c0_3] : memref<9x4x4xbf16, #tpu.memory_space<vmem>>, vector<1x4x4xbf16>
    %3 = vector.shape_cast %2 : vector<1x4x4xbf16> to vector<4x4xbf16>
    %c2 = arith.constant 2 : index
    %c0_4 = arith.constant 0 : index
    %c0_5 = arith.constant 0 : index
    %4 = vector.load %arg2[%c2, %c0_4, %c0_5] : memref<9x4x4xbf16, #tpu.memory_space<vmem>>, vector<1x4x4xbf16>
    %5 = vector.shape_cast %4 : vector<1x4x4xbf16> to vector<4x4xbf16>
    %c3 = arith.constant 3 : index
    %c0_6 = arith.constant 0 : index
    %c0_7 = arith.constant 0 : index
    %6 = vector.load %arg2[%c3, %c0_6, %c0_7] : memref<9x4x4xbf16, #tpu.memory_space<vmem>>, vector<1x4x4xbf16>
    %7 = vector.shape_cast %6 : vector<1x4x4xbf16> to vector<4x4xbf16>
    %c4 = arith.constant 4 : index
    %c0_8 = arith.constant 0 : index
    %c0_9 = arith.constant 0 : index
    %8 = vector.load %arg2[%c4, %c0_8, %c0_9] : memref<9x4x4xbf16, #tpu.memory_space<vmem>>, vector<1x4x4xbf16>
    %9 = vector.shape_cast %8 : vector<1x4x4xbf16> to vector<4x4xbf16>
    %c5 = arith.constant 5 : index
    %c0_10 = arith.constant 0 : index
    %c0_11 = arith.constant 0 : index
    %10 = vector.load %arg2[%c5, %c0_10, %c0_11] : memref<9x4x4xbf16, #tpu.memory_space<vmem>>, vector<1x4x4xbf16>
    %11 = vector.shape_cast %10 : vector<1x4x4xbf16> to vector<4x4xbf16>
    %c6 = arith.constant 6 : index
    %c0_12 = arith.constant 0 : index
    %c0_13 = arith.constant 0 : index
    %12 = vector.load %arg2[%c6, %c0_12, %c0_13] : memref<9x4x4xbf16, #tpu.memory_space<vmem>>, vector<1x4x4xbf16>
    %13 = vector.shape_cast %12 : vector<1x4x4xbf16> to vector<4x4xbf16>
    %c7 = arith.constant 7 : index
    %c0_14 = arith.constant 0 : index
    %c0_15 = arith.constant 0 : index
    %14 = vector.load %arg2[%c7, %c0_14, %c0_15] : memref<9x4x4xbf16, #tpu.memory_space<vmem>>, vector<1x4x4xbf16>
    %15 = vector.shape_cast %14 : vector<1x4x4xbf16> to vector<4x4xbf16>
    %c8 = arith.constant 8 : index
    %c0_16 = arith.constant 0 : index
    %c0_17 = arith.constant 0 : index
    %16 = vector.load %arg2[%c8, %c0_16, %c0_17] : memref<9x4x4xbf16, #tpu.memory_space<vmem>>, vector<1x4x4xbf16>
    %17 = vector.shape_cast %16 : vector<1x4x4xbf16> to vector<4x4xbf16>
    %c0_18 = arith.constant 0 : index
    %c0_19 = arith.constant 0 : index
    %c0_20 = arith.constant 0 : index
    %18 = vector.load %arg4[%c0_18, %c0_19, %c0_20] : memref<9x4x4xbf16, #tpu.memory_space<vmem>>, vector<1x4x4xbf16>
    %19 = vector.shape_cast %18 : vector<1x4x4xbf16> to vector<4x4xbf16>
    %c1_21 = arith.constant 1 : index
    %c0_22 = arith.constant 0 : index
    %c0_23 = arith.constant 0 : index
    %20 = vector.load %arg4[%c1_21, %c0_22, %c0_23] : memref<9x4x4xbf16, #tpu.memory_space<vmem>>, vector<1x4x4xbf16>
    %21 = vector.shape_cast %20 : vector<1x4x4xbf16> to vector<4x4xbf16>
    %c2_24 = arith.constant 2 : index
    %c0_25 = arith.constant 0 : index
    %c0_26 = arith.constant 0 : index
    %22 = vector.load %arg4[%c2_24, %c0_25, %c0_26] : memref<9x4x4xbf16, #tpu.memory_space<vmem>>, vector<1x4x4xbf16>
    %23 = vector.shape_cast %22 : vector<1x4x4xbf16> to vector<4x4xbf16>
    %c3_27 = arith.constant 3 : index
    %c0_28 = arith.constant 0 : index
    %c0_29 = arith.constant 0 : index
    %24 = vector.load %arg4[%c3_27, %c0_28, %c0_29] : memref<9x4x4xbf16, #tpu.memory_space<vmem>>, vector<1x4x4xbf16>
    %25 = vector.shape_cast %24 : vector<1x4x4xbf16> to vector<4x4xbf16>
    %c4_30 = arith.constant 4 : index
    %c0_31 = arith.constant 0 : index
    %c0_32 = arith.constant 0 : index
    %26 = vector.load %arg4[%c4_30, %c0_31, %c0_32] : memref<9x4x4xbf16, #tpu.memory_space<vmem>>, vector<1x4x4xbf16>
    %27 = vector.shape_cast %26 : vector<1x4x4xbf16> to vector<4x4xbf16>
    %c5_33 = arith.constant 5 : index
    %c0_34 = arith.constant 0 : index
    %c0_35 = arith.constant 0 : index
    %28 = vector.load %arg4[%c5_33, %c0_34, %c0_35] : memref<9x4x4xbf16, #tpu.memory_space<vmem>>, vector<1x4x4xbf16>
    %29 = vector.shape_cast %28 : vector<1x4x4xbf16> to vector<4x4xbf16>
    %c6_36 = arith.constant 6 : index
    %c0_37 = arith.constant 0 : index
    %c0_38 = arith.constant 0 : index
    %30 = vector.load %arg4[%c6_36, %c0_37, %c0_38] : memref<9x4x4xbf16, #tpu.memory_space<vmem>>, vector<1x4x4xbf16>
    %31 = vector.shape_cast %30 : vector<1x4x4xbf16> to vector<4x4xbf16>
    %c7_39 = arith.constant 7 : index
    %c0_40 = arith.constant 0 : index
    %c0_41 = arith.constant 0 : index
    %32 = vector.load %arg4[%c7_39, %c0_40, %c0_41] : memref<9x4x4xbf16, #tpu.memory_space<vmem>>, vector<1x4x4xbf16>
    %33 = vector.shape_cast %32 : vector<1x4x4xbf16> to vector<4x4xbf16>
    %c8_42 = arith.constant 8 : index
    %c0_43 = arith.constant 0 : index
    %c0_44 = arith.constant 0 : index
    %34 = vector.load %arg4[%c8_42, %c0_43, %c0_44] : memref<9x4x4xbf16, #tpu.memory_space<vmem>>, vector<1x4x4xbf16>
    %35 = vector.shape_cast %34 : vector<1x4x4xbf16> to vector<4x4xbf16>
    %c0_45 = arith.constant 0 : index
    %c0_46 = arith.constant 0 : index
    %36 = vector.load %arg3[%c0_45, %c0_46] : memref<4x1xf32, #tpu.memory_space<vmem>>, vector<4x1xf32>
    %c0_47 = arith.constant 0 : index
    %c0_48 = arith.constant 0 : index
    %37 = vector.load %arg5[%c0_47, %c0_48] : memref<4x1xf32, #tpu.memory_space<vmem>>, vector<4x1xf32>
    %c0_49 = arith.constant 0 : index
    %c0_50 = arith.constant 0 : index
    %38 = vector.load %arg1[%c0_49, %c0_50] : memref<4x1024xf32, #tpu.memory_space<vmem>>, vector<4x1024xf32>
    %39 = arith.truncf %38 : vector<4x1024xf32> to vector<4x1024xbf16>
    %cst = arith.constant dense<0.000000e+00> : vector<4x1024xf32>
    %40 = tpu.matmul %9, %39, %cst {dimension_numbers = #tpu.dot_dimension_numbers<[1], [0], [0], [1], [0, 0, 1, 1], [], []>} : vector<4x4xbf16>, vector<4x1024xbf16>, vector<4x1024xf32> -> vector<4x1024xf32>
    %c17_i32 = arith.constant 17 : i32
    %41 = tpu.dynamic_rotate %38 by %c17_i32 dim 1 : vector<4x1024xf32>, i32 -> vector<4x1024xf32>
    %c0_51 = arith.constant 0 : index
    %c0_52 = arith.constant 0 : index
    %c0_53 = arith.constant 0 : index
    %42 = vector.load %arg6[%c0_51, %c0_52, %c0_53] : memref<9x4x1024xf32, #tpu.memory_space<vmem>>, vector<1x4x1024xf32>
    %43 = vector.shape_cast %42 : vector<1x4x1024xf32> to vector<4x1024xf32>
    %44 = arith.mulf %41, %43 : vector<4x1024xf32>
    %45 = arith.truncf %44 : vector<4x1024xf32> to vector<4x1024xbf16>
    %cst_54 = arith.constant dense<0.000000e+00> : vector<4x1024xf32>
    %46 = tpu.matmul %1, %45, %cst_54 {dimension_numbers = #tpu.dot_dimension_numbers<[1], [0], [0], [1], [0, 0, 1, 1], [], []>} : vector<4x4xbf16>, vector<4x1024xbf16>, vector<4x1024xf32> -> vector<4x1024xf32>
    %47 = arith.addf %40, %46 : vector<4x1024xf32>
    %c16_i32 = arith.constant 16 : i32
    %48 = tpu.dynamic_rotate %38 by %c16_i32 dim 1 : vector<4x1024xf32>, i32 -> vector<4x1024xf32>
    %c1_55 = arith.constant 1 : index
    %c0_56 = arith.constant 0 : index
    %c0_57 = arith.constant 0 : index
    %49 = vector.load %arg6[%c1_55, %c0_56, %c0_57] : memref<9x4x1024xf32, #tpu.memory_space<vmem>>, vector<1x4x1024xf32>
    %50 = vector.shape_cast %49 : vector<1x4x1024xf32> to vector<4x1024xf32>
    %51 = arith.mulf %48, %50 : vector<4x1024xf32>
    %52 = arith.truncf %51 : vector<4x1024xf32> to vector<4x1024xbf16>
    %cst_58 = arith.constant dense<0.000000e+00> : vector<4x1024xf32>
    %53 = tpu.matmul %3, %52, %cst_58 {dimension_numbers = #tpu.dot_dimension_numbers<[1], [0], [0], [1], [0, 0, 1, 1], [], []>} : vector<4x4xbf16>, vector<4x1024xbf16>, vector<4x1024xf32> -> vector<4x1024xf32>
    %54 = arith.addf %47, %53 : vector<4x1024xf32>
    %c15_i32 = arith.constant 15 : i32
    %55 = tpu.dynamic_rotate %38 by %c15_i32 dim 1 : vector<4x1024xf32>, i32 -> vector<4x1024xf32>
    %c2_59 = arith.constant 2 : index
    %c0_60 = arith.constant 0 : index
    %c0_61 = arith.constant 0 : index
    %56 = vector.load %arg6[%c2_59, %c0_60, %c0_61] : memref<9x4x1024xf32, #tpu.memory_space<vmem>>, vector<1x4x1024xf32>
    %57 = vector.shape_cast %56 : vector<1x4x1024xf32> to vector<4x1024xf32>
    %58 = arith.mulf %55, %57 : vector<4x1024xf32>
    %59 = arith.truncf %58 : vector<4x1024xf32> to vector<4x1024xbf16>
    %cst_62 = arith.constant dense<0.000000e+00> : vector<4x1024xf32>
    %60 = tpu.matmul %5, %59, %cst_62 {dimension_numbers = #tpu.dot_dimension_numbers<[1], [0], [0], [1], [0, 0, 1, 1], [], []>} : vector<4x4xbf16>, vector<4x1024xbf16>, vector<4x1024xf32> -> vector<4x1024xf32>
    %61 = arith.addf %54, %60 : vector<4x1024xf32>
    %c1_i32 = arith.constant 1 : i32
    %62 = tpu.dynamic_rotate %38 by %c1_i32 dim 1 : vector<4x1024xf32>, i32 -> vector<4x1024xf32>
    %c3_63 = arith.constant 3 : index
    %c0_64 = arith.constant 0 : index
    %c0_65 = arith.constant 0 : index
    %63 = vector.load %arg6[%c3_63, %c0_64, %c0_65] : memref<9x4x1024xf32, #tpu.memory_space<vmem>>, vector<1x4x1024xf32>
    %64 = vector.shape_cast %63 : vector<1x4x1024xf32> to vector<4x1024xf32>
    %65 = arith.mulf %62, %64 : vector<4x1024xf32>
    %66 = arith.truncf %65 : vector<4x1024xf32> to vector<4x1024xbf16>
    %cst_66 = arith.constant dense<0.000000e+00> : vector<4x1024xf32>
    %67 = tpu.matmul %7, %66, %cst_66 {dimension_numbers = #tpu.dot_dimension_numbers<[1], [0], [0], [1], [0, 0, 1, 1], [], []>} : vector<4x4xbf16>, vector<4x1024xbf16>, vector<4x1024xf32> -> vector<4x1024xf32>
    %68 = arith.addf %61, %67 : vector<4x1024xf32>
    %c1023_i32 = arith.constant 1023 : i32
    %69 = tpu.dynamic_rotate %38 by %c1023_i32 dim 1 : vector<4x1024xf32>, i32 -> vector<4x1024xf32>
    %c5_67 = arith.constant 5 : index
    %c0_68 = arith.constant 0 : index
    %c0_69 = arith.constant 0 : index
    %70 = vector.load %arg6[%c5_67, %c0_68, %c0_69] : memref<9x4x1024xf32, #tpu.memory_space<vmem>>, vector<1x4x1024xf32>
    %71 = vector.shape_cast %70 : vector<1x4x1024xf32> to vector<4x1024xf32>
    %72 = arith.mulf %69, %71 : vector<4x1024xf32>
    %73 = arith.truncf %72 : vector<4x1024xf32> to vector<4x1024xbf16>
    %cst_70 = arith.constant dense<0.000000e+00> : vector<4x1024xf32>
    %74 = tpu.matmul %11, %73, %cst_70 {dimension_numbers = #tpu.dot_dimension_numbers<[1], [0], [0], [1], [0, 0, 1, 1], [], []>} : vector<4x4xbf16>, vector<4x1024xbf16>, vector<4x1024xf32> -> vector<4x1024xf32>
    %75 = arith.addf %68, %74 : vector<4x1024xf32>
    %c1009_i32 = arith.constant 1009 : i32
    %76 = tpu.dynamic_rotate %38 by %c1009_i32 dim 1 : vector<4x1024xf32>, i32 -> vector<4x1024xf32>
    %c6_71 = arith.constant 6 : index
    %c0_72 = arith.constant 0 : index
    %c0_73 = arith.constant 0 : index
    %77 = vector.load %arg6[%c6_71, %c0_72, %c0_73] : memref<9x4x1024xf32, #tpu.memory_space<vmem>>, vector<1x4x1024xf32>
    %78 = vector.shape_cast %77 : vector<1x4x1024xf32> to vector<4x1024xf32>
    %79 = arith.mulf %76, %78 : vector<4x1024xf32>
    %80 = arith.truncf %79 : vector<4x1024xf32> to vector<4x1024xbf16>
    %cst_74 = arith.constant dense<0.000000e+00> : vector<4x1024xf32>
    %81 = tpu.matmul %13, %80, %cst_74 {dimension_numbers = #tpu.dot_dimension_numbers<[1], [0], [0], [1], [0, 0, 1, 1], [], []>} : vector<4x4xbf16>, vector<4x1024xbf16>, vector<4x1024xf32> -> vector<4x1024xf32>
    %82 = arith.addf %75, %81 : vector<4x1024xf32>
    %c1008_i32 = arith.constant 1008 : i32
    %83 = tpu.dynamic_rotate %38 by %c1008_i32 dim 1 : vector<4x1024xf32>, i32 -> vector<4x1024xf32>
    %c7_75 = arith.constant 7 : index
    %c0_76 = arith.constant 0 : index
    %c0_77 = arith.constant 0 : index
    %84 = vector.load %arg6[%c7_75, %c0_76, %c0_77] : memref<9x4x1024xf32, #tpu.memory_space<vmem>>, vector<1x4x1024xf32>
    %85 = vector.shape_cast %84 : vector<1x4x1024xf32> to vector<4x1024xf32>
    %86 = arith.mulf %83, %85 : vector<4x1024xf32>
    %87 = arith.truncf %86 : vector<4x1024xf32> to vector<4x1024xbf16>
    %cst_78 = arith.constant dense<0.000000e+00> : vector<4x1024xf32>
    %88 = tpu.matmul %15, %87, %cst_78 {dimension_numbers = #tpu.dot_dimension_numbers<[1], [0], [0], [1], [0, 0, 1, 1], [], []>} : vector<4x4xbf16>, vector<4x1024xbf16>, vector<4x1024xf32> -> vector<4x1024xf32>
    %89 = arith.addf %82, %88 : vector<4x1024xf32>
    %c1007_i32 = arith.constant 1007 : i32
    %90 = tpu.dynamic_rotate %38 by %c1007_i32 dim 1 : vector<4x1024xf32>, i32 -> vector<4x1024xf32>
    %c8_79 = arith.constant 8 : index
    %c0_80 = arith.constant 0 : index
    %c0_81 = arith.constant 0 : index
    %91 = vector.load %arg6[%c8_79, %c0_80, %c0_81] : memref<9x4x1024xf32, #tpu.memory_space<vmem>>, vector<1x4x1024xf32>
    %92 = vector.shape_cast %91 : vector<1x4x1024xf32> to vector<4x1024xf32>
    %93 = arith.mulf %90, %92 : vector<4x1024xf32>
    %94 = arith.truncf %93 : vector<4x1024xf32> to vector<4x1024xbf16>
    %cst_82 = arith.constant dense<0.000000e+00> : vector<4x1024xf32>
    %95 = tpu.matmul %17, %94, %cst_82 {dimension_numbers = #tpu.dot_dimension_numbers<[1], [0], [0], [1], [0, 0, 1, 1], [], []>} : vector<4x4xbf16>, vector<4x1024xbf16>, vector<4x1024xf32> -> vector<4x1024xf32>
    %96 = arith.addf %89, %95 : vector<4x1024xf32>
    %97 = vector.broadcast %36 : vector<4x1xf32> to vector<4x1024xf32>
    %98 = arith.addf %96, %97 : vector<4x1024xf32>
    %cst_83 = arith.constant 0.000000e+00 : f32
    %99 = vector.broadcast %cst_83 : f32 to vector<4x1024xf32>
    %100 = arith.cmpf ogt, %98, %99 : vector<4x1024xf32>
    %101 = math.exp %98 : vector<4x1024xf32>
    %cst_84 = arith.constant 1.000000e+00 : f32
    %102 = vector.broadcast %cst_84 : f32 to vector<4x1024xf32>
    %103 = arith.subf %101, %102 : vector<4x1024xf32>
    %104 = arith.select %100, %98, %103 : vector<4x1024xi1>, vector<4x1024xf32>
    %105 = arith.truncf %104 : vector<4x1024xf32> to vector<4x1024xbf16>
    %cst_85 = arith.constant dense<0.000000e+00> : vector<4x1024xf32>
    %106 = tpu.matmul %27, %105, %cst_85 {dimension_numbers = #tpu.dot_dimension_numbers<[1], [0], [0], [1], [0, 0, 1, 1], [], []>} : vector<4x4xbf16>, vector<4x1024xbf16>, vector<4x1024xf32> -> vector<4x1024xf32>
    %c17_i32_86 = arith.constant 17 : i32
    %107 = tpu.dynamic_rotate %104 by %c17_i32_86 dim 1 : vector<4x1024xf32>, i32 -> vector<4x1024xf32>
    %c0_87 = arith.constant 0 : index
    %c0_88 = arith.constant 0 : index
    %c0_89 = arith.constant 0 : index
    %108 = vector.load %arg6[%c0_87, %c0_88, %c0_89] : memref<9x4x1024xf32, #tpu.memory_space<vmem>>, vector<1x4x1024xf32>
    %109 = vector.shape_cast %108 : vector<1x4x1024xf32> to vector<4x1024xf32>
    %110 = arith.mulf %107, %109 : vector<4x1024xf32>
    %111 = arith.truncf %110 : vector<4x1024xf32> to vector<4x1024xbf16>
    %cst_90 = arith.constant dense<0.000000e+00> : vector<4x1024xf32>
    %112 = tpu.matmul %19, %111, %cst_90 {dimension_numbers = #tpu.dot_dimension_numbers<[1], [0], [0], [1], [0, 0, 1, 1], [], []>} : vector<4x4xbf16>, vector<4x1024xbf16>, vector<4x1024xf32> -> vector<4x1024xf32>
    %113 = arith.addf %106, %112 : vector<4x1024xf32>
    %c16_i32_91 = arith.constant 16 : i32
    %114 = tpu.dynamic_rotate %104 by %c16_i32_91 dim 1 : vector<4x1024xf32>, i32 -> vector<4x1024xf32>
    %c1_92 = arith.constant 1 : index
    %c0_93 = arith.constant 0 : index
    %c0_94 = arith.constant 0 : index
    %115 = vector.load %arg6[%c1_92, %c0_93, %c0_94] : memref<9x4x1024xf32, #tpu.memory_space<vmem>>, vector<1x4x1024xf32>
    %116 = vector.shape_cast %115 : vector<1x4x1024xf32> to vector<4x1024xf32>
    %117 = arith.mulf %114, %116 : vector<4x1024xf32>
    %118 = arith.truncf %117 : vector<4x1024xf32> to vector<4x1024xbf16>
    %cst_95 = arith.constant dense<0.000000e+00> : vector<4x1024xf32>
    %119 = tpu.matmul %21, %118, %cst_95 {dimension_numbers = #tpu.dot_dimension_numbers<[1], [0], [0], [1], [0, 0, 1, 1], [], []>} : vector<4x4xbf16>, vector<4x1024xbf16>, vector<4x1024xf32> -> vector<4x1024xf32>
    %120 = arith.addf %113, %119 : vector<4x1024xf32>
    %c15_i32_96 = arith.constant 15 : i32
    %121 = tpu.dynamic_rotate %104 by %c15_i32_96 dim 1 : vector<4x1024xf32>, i32 -> vector<4x1024xf32>
    %c2_97 = arith.constant 2 : index
    %c0_98 = arith.constant 0 : index
    %c0_99 = arith.constant 0 : index
    %122 = vector.load %arg6[%c2_97, %c0_98, %c0_99] : memref<9x4x1024xf32, #tpu.memory_space<vmem>>, vector<1x4x1024xf32>
    %123 = vector.shape_cast %122 : vector<1x4x1024xf32> to vector<4x1024xf32>
    %124 = arith.mulf %121, %123 : vector<4x1024xf32>
    %125 = arith.truncf %124 : vector<4x1024xf32> to vector<4x1024xbf16>
    %cst_100 = arith.constant dense<0.000000e+00> : vector<4x1024xf32>
    %126 = tpu.matmul %23, %125, %cst_100 {dimension_numbers = #tpu.dot_dimension_numbers<[1], [0], [0], [1], [0, 0, 1, 1], [], []>} : vector<4x4xbf16>, vector<4x1024xbf16>, vector<4x1024xf32> -> vector<4x1024xf32>
    %127 = arith.addf %120, %126 : vector<4x1024xf32>
    %c1_i32_101 = arith.constant 1 : i32
    %128 = tpu.dynamic_rotate %104 by %c1_i32_101 dim 1 : vector<4x1024xf32>, i32 -> vector<4x1024xf32>
    %c3_102 = arith.constant 3 : index
    %c0_103 = arith.constant 0 : index
    %c0_104 = arith.constant 0 : index
    %129 = vector.load %arg6[%c3_102, %c0_103, %c0_104] : memref<9x4x1024xf32, #tpu.memory_space<vmem>>, vector<1x4x1024xf32>
    %130 = vector.shape_cast %129 : vector<1x4x1024xf32> to vector<4x1024xf32>
    %131 = arith.mulf %128, %130 : vector<4x1024xf32>
    %132 = arith.truncf %131 : vector<4x1024xf32> to vector<4x1024xbf16>
    %cst_105 = arith.constant dense<0.000000e+00> : vector<4x1024xf32>
    %133 = tpu.matmul %25, %132, %cst_105 {dimension_numbers = #tpu.dot_dimension_numbers<[1], [0], [0], [1], [0, 0, 1, 1], [], []>} : vector<4x4xbf16>, vector<4x1024xbf16>, vector<4x1024xf32> -> vector<4x1024xf32>
    %134 = arith.addf %127, %133 : vector<4x1024xf32>
    %c1023_i32_106 = arith.constant 1023 : i32
    %135 = tpu.dynamic_rotate %104 by %c1023_i32_106 dim 1 : vector<4x1024xf32>, i32 -> vector<4x1024xf32>
    %c5_107 = arith.constant 5 : index
    %c0_108 = arith.constant 0 : index
    %c0_109 = arith.constant 0 : index
    %136 = vector.load %arg6[%c5_107, %c0_108, %c0_109] : memref<9x4x1024xf32, #tpu.memory_space<vmem>>, vector<1x4x1024xf32>
    %137 = vector.shape_cast %136 : vector<1x4x1024xf32> to vector<4x1024xf32>
    %138 = arith.mulf %135, %137 : vector<4x1024xf32>
    %139 = arith.truncf %138 : vector<4x1024xf32> to vector<4x1024xbf16>
    %cst_110 = arith.constant dense<0.000000e+00> : vector<4x1024xf32>
    %140 = tpu.matmul %29, %139, %cst_110 {dimension_numbers = #tpu.dot_dimension_numbers<[1], [0], [0], [1], [0, 0, 1, 1], [], []>} : vector<4x4xbf16>, vector<4x1024xbf16>, vector<4x1024xf32> -> vector<4x1024xf32>
    %141 = arith.addf %134, %140 : vector<4x1024xf32>
    %c1009_i32_111 = arith.constant 1009 : i32
    %142 = tpu.dynamic_rotate %104 by %c1009_i32_111 dim 1 : vector<4x1024xf32>, i32 -> vector<4x1024xf32>
    %c6_112 = arith.constant 6 : index
    %c0_113 = arith.constant 0 : index
    %c0_114 = arith.constant 0 : index
    %143 = vector.load %arg6[%c6_112, %c0_113, %c0_114] : memref<9x4x1024xf32, #tpu.memory_space<vmem>>, vector<1x4x1024xf32>
    %144 = vector.shape_cast %143 : vector<1x4x1024xf32> to vector<4x1024xf32>
    %145 = arith.mulf %142, %144 : vector<4x1024xf32>
    %146 = arith.truncf %145 : vector<4x1024xf32> to vector<4x1024xbf16>
    %cst_115 = arith.constant dense<0.000000e+00> : vector<4x1024xf32>
    %147 = tpu.matmul %31, %146, %cst_115 {dimension_numbers = #tpu.dot_dimension_numbers<[1], [0], [0], [1], [0, 0, 1, 1], [], []>} : vector<4x4xbf16>, vector<4x1024xbf16>, vector<4x1024xf32> -> vector<4x1024xf32>
    %148 = arith.addf %141, %147 : vector<4x1024xf32>
    %c1008_i32_116 = arith.constant 1008 : i32
    %149 = tpu.dynamic_rotate %104 by %c1008_i32_116 dim 1 : vector<4x1024xf32>, i32 -> vector<4x1024xf32>
    %c7_117 = arith.constant 7 : index
    %c0_118 = arith.constant 0 : index
    %c0_119 = arith.constant 0 : index
    %150 = vector.load %arg6[%c7_117, %c0_118, %c0_119] : memref<9x4x1024xf32, #tpu.memory_space<vmem>>, vector<1x4x1024xf32>
    %151 = vector.shape_cast %150 : vector<1x4x1024xf32> to vector<4x1024xf32>
    %152 = arith.mulf %149, %151 : vector<4x1024xf32>
    %153 = arith.truncf %152 : vector<4x1024xf32> to vector<4x1024xbf16>
    %cst_120 = arith.constant dense<0.000000e+00> : vector<4x1024xf32>
    %154 = tpu.matmul %33, %153, %cst_120 {dimension_numbers = #tpu.dot_dimension_numbers<[1], [0], [0], [1], [0, 0, 1, 1], [], []>} : vector<4x4xbf16>, vector<4x1024xbf16>, vector<4x1024xf32> -> vector<4x1024xf32>
    %155 = arith.addf %148, %154 : vector<4x1024xf32>
    %c1007_i32_121 = arith.constant 1007 : i32
    %156 = tpu.dynamic_rotate %104 by %c1007_i32_121 dim 1 : vector<4x1024xf32>, i32 -> vector<4x1024xf32>
    %c8_122 = arith.constant 8 : index
    %c0_123 = arith.constant 0 : index
    %c0_124 = arith.constant 0 : index
    %157 = vector.load %arg6[%c8_122, %c0_123, %c0_124] : memref<9x4x1024xf32, #tpu.memory_space<vmem>>, vector<1x4x1024xf32>
    %158 = vector.shape_cast %157 : vector<1x4x1024xf32> to vector<4x1024xf32>
    %159 = arith.mulf %156, %158 : vector<4x1024xf32>
    %160 = arith.truncf %159 : vector<4x1024xf32> to vector<4x1024xbf16>
    %cst_125 = arith.constant dense<0.000000e+00> : vector<4x1024xf32>
    %161 = tpu.matmul %35, %160, %cst_125 {dimension_numbers = #tpu.dot_dimension_numbers<[1], [0], [0], [1], [0, 0, 1, 1], [], []>} : vector<4x4xbf16>, vector<4x1024xbf16>, vector<4x1024xf32> -> vector<4x1024xf32>
    %162 = arith.addf %155, %161 : vector<4x1024xf32>
    %163 = vector.broadcast %37 : vector<4x1xf32> to vector<4x1024xf32>
    %164 = arith.addf %162, %163 : vector<4x1024xf32>
    %165 = arith.addf %164, %38 : vector<4x1024xf32>
    %cst_126 = arith.constant 0.000000e+00 : f32
    %166 = vector.broadcast %cst_126 : f32 to vector<4x1024xf32>
    %167 = arith.cmpf ogt, %165, %166 : vector<4x1024xf32>
    %168 = math.exp %165 : vector<4x1024xf32>
    %cst_127 = arith.constant 1.000000e+00 : f32
    %169 = vector.broadcast %cst_127 : f32 to vector<4x1024xf32>
    %170 = arith.subf %168, %169 : vector<4x1024xf32>
    %171 = arith.select %167, %165, %170 : vector<4x1024xi1>, vector<4x1024xf32>
    %c0_128 = arith.constant 0 : index
    %c0_129 = arith.constant 0 : index
    %172 = vector.load %arg7[%c0_128, %c0_129] : memref<4x1024xf32, #tpu.memory_space<vmem>>, vector<4x1024xf32>
    tpu.vector_store %arg7[%c0_128, %c0_129], %171 {strides = array<i32>} : memref<4x1024xf32, #tpu.memory_space<vmem>>, vector<4x1024xf32>,
    return
  }
  func.func @transform_0(%arg0: i32) -> (i32, i32) {
    %c0_i32 = arith.constant 0 : i32
    %c0_i32_0 = arith.constant 0 : i32
    return %c0_i32, %arg0 : i32, i32
  }
  func.func @transform_1(%arg0: i32) -> (i32, i32, i32) {
    %c0_i32 = arith.constant 0 : i32
    %c0_i32_0 = arith.constant 0 : i32
    %c0_i32_1 = arith.constant 0 : i32
    %c0_i32_2 = arith.constant 0 : i32
    return %c0_i32, %c0_i32_0, %c0_i32_1 : i32, i32, i32
  }
  func.func @transform_2(%arg0: i32) -> (i32, i32) {
    %c0_i32 = arith.constant 0 : i32
    %c0_i32_0 = arith.constant 0 : i32
    %c0_i32_1 = arith.constant 0 : i32
    return %c0_i32, %c0_i32_0 : i32, i32
  }
  func.func @transform_3(%arg0: i32) -> (i32, i32, i32) {
    %c0_i32 = arith.constant 0 : i32
    %c0_i32_0 = arith.constant 0 : i32
    %c0_i32_1 = arith.constant 0 : i32
    %c0_i32_2 = arith.constant 0 : i32
    return %c0_i32, %c0_i32_0, %c0_i32_1 : i32, i32, i32
  }
  func.func @transform_4(%arg0: i32) -> (i32, i32) {
    %c0_i32 = arith.constant 0 : i32
    %c0_i32_0 = arith.constant 0 : i32
    %c0_i32_1 = arith.constant 0 : i32
    return %c0_i32, %c0_i32_0 : i32, i32
  }
  func.func @transform_5(%arg0: i32) -> (i32, i32, i32) {
    %c0_i32 = arith.constant 0 : i32
    %c0_i32_0 = arith.constant 0 : i32
    %c0_i32_1 = arith.constant 0 : i32
    %c0_i32_2 = arith.constant 0 : i32
    return %c0_i32, %c0_i32_0, %c0_i32_1 : i32, i32, i32
  }
  func.func @transform_6(%arg0: i32) -> (i32, i32) {
    %c0_i32 = arith.constant 0 : i32
    %c0_i32_0 = arith.constant 0 : i32
    return %c0_i32, %arg0 : i32, i32
  }
}

</mosaic_0001>

<llo_original>
// kernel: tpu_custom_call.1
$region0: #{tpu_custom_call.1}
  #allocation0 [shape = 'u32[]', space=smem, size = 0x4, offset = 0x4, fixed_abs, tag = 'smem constant byte address 0x4 - core index']
  #allocation1 [shape = 'u32[144,128]{1,0:T(1,128)}', space=vmem, size = 0x12000, scoped, tag = 'internal scratch']
  %s0 = inlined_call_operand.hbm [shape: f32[4,2048], index: 0, kind: input, shape index: {}]
  %s1 = inlined_call_operand.vmem [shape: bf16[9,4,4], index: 1, kind: input, shape index: {}]
  %s2 = inlined_call_operand.vmem [shape: f32[4,1], index: 2, kind: input, shape index: {}]
  %s3 = inlined_call_operand.vmem [shape: bf16[9,4,4], index: 3, kind: input, shape index: {}]
  %s4 = inlined_call_operand.vmem [shape: f32[4,1], index: 4, kind: input, shape index: {}]
  %s5 = inlined_call_operand.hbm [shape: f32[9,4,1024], index: 5, kind: input, shape index: {}]
  %s6 = inlined_call_operand.hbm [shape: f32[4,2048], index: 6, kind: output, shape index: {}]
  %s7 = sld [smem:[#allocation0]]
  $region65: #{tpu_custom_call.1} parent=0
    _
  %s9 = ssub.s32 1, %s7
  %s10 = scalar_select 0, %s9, %s7
  $region1: #{tpu_custom_call.1} parent=0
    #allocation2 [shape = 'u8[32768]{0}', space=vmem, size = 0x8000, scoped, tag = 'input window, operand 0']
    #allocation3 [shape = 's32[2]{0}', space=sflag, size = 0x8, scoped, tag = 'scoped memory for tpu_custom_call.1']
    #allocation4 [shape = 's32[2]{0}', space=sflag, size = 0x8, scoped, tag = 'scoped memory for tpu_custom_call.1']
    #allocation5 [shape = 'u8[147456]{0}', space=vmem, size = 0x24000, scoped, tag = 'input window, operand 5, single buffered']
    #allocation6 [shape = 's32[1]{0}', space=sflag, size = 0x4, scoped, tag = 'scoped memory for tpu_custom_call.1']
    #allocation7 [shape = 'u8[32768]{0}', space=vmem, size = 0x8000, scoped, tag = 'output window, operand 0']
    %11 = vsyncpa [#allocation3], 0
    %s12 = scalar_lea.sflag [#allocation3], 1
    %13 = vsyncpa %s12, 0
    %14 = vsyncpa [#allocation6], 0
    %15 = vsyncpa [#allocation4], 0
    %s16 = scalar_lea.sflag [#allocation4], 1
    %17 = vsyncpa %s16, 0
    loop: start=0, step=1, limit=4
    $region2: #{tpu_custom_call.1} parent=1 // loop_pre_header
      _
    $region3: #{tpu_custom_call.1} parent=1 // loop_header
      %s19 = sphi 0, %s23
      %p20 = scmp.ge.s32.totalorder %s19, 4
      %s29 = sphi 0, %s31
      %s32 = sphi 0, %s29
      %s33 = sphi 0, %s32
      %s49 = sphi 0, %s33
      %s53 = sphi 0, %s53
      %s55 = sphi 0, %s53
      %s56 = sphi 0, %s55
      %s70 = sphi 0, %s56
      %s74 = sphi 0, %s74
      %s76 = sphi 0, %s74
      %s77 = sphi 0, %s76
      %s91 = sphi 0, %s77
      %s95 = sphi 0, %s95
      %s97 = sphi 0, %s95
      %s98 = sphi 0, %s97
      %s112 = sphi 0, %s98
      %s116 = sphi 0, %s116
      %s118 = sphi 0, %s116
      %s119 = sphi 0, %s118
      %s133 = sphi 0, %s119
      %s137 = sphi 0, %s137
      %s139 = sphi 0, %s137
      %s140 = sphi 0, %s139
      %s154 = sphi 0, %s140
      %s160 = sphi 0, %s162
      %s163 = sphi 0, %s160
      %s164 = sphi 0, %s163
      %s180 = sphi 0, %s164
    $region4: #{tpu_custom_call.1} parent=1 // loop_header_branch
      %22 = sbr.rel (%p20) target = $region8
    $region5: #{tpu_custom_call.1} parent=1 // loop_body
      %s24 = ssub.s32 %s19, 1
      %s25 = ssub.s32 %s19, 2
      %s26 = sadd.s32 %s19, 1
      %s27 = ssub.s32 %s19, %s26
      %p28 = scmp.eq.s32.totalorder %s27, 0
      %s30 = sadd.s32 %s29, 1
      %s31 = scalar_select %p28, %s29, %s30
      %p34 = pneg %p28
      %p35 = scmp.eq.s32.totalorder %s19, 1
      %p36 = por %p34, %p35
      %p37 = scmp.ne.s32.totalorder %s29, %s32
      %p38 = scmp.eq.s32.totalorder %s19, 0
      %p39 = por %p37, %p38
      %p40 = scmp.ne.s32.totalorder %s29, %s32
      %p41 = scmp.eq.s32.totalorder %s24, 1
      %p42 = por %p40, %p41
      %p43 = scmp.ne.s32.totalorder %s32, %s33
      %p44 = scmp.eq.s32.totalorder %s24, 0
      %p45 = por %p43, %p44
      %p46 = scmp.ne.s32.totalorder %s32, %s33
      %p47 = scmp.eq.s32.totalorder %s25, 1
      %p48 = por %p46, %p47
      %p50 = scmp.ne.s32.totalorder %s33, %s49
      %p51 = scmp.eq.s32.totalorder %s25, 0
      %p52 = por %p50, %p51
      %s54 = sadd.s32 %s53, 1
      %p57 = scmp.eq.s32.totalorder %s19, 1
      %p58 = scmp.ne.s32.totalorder %s53, %s55
      %p59 = scmp.eq.s32.totalorder %s19, 0
      %p60 = por %p58, %p59
      %p61 = scmp.ne.s32.totalorder %s53, %s55
      %p62 = scmp.eq.s32.totalorder %s24, 1
      %p63 = por %p61, %p62
      %p64 = scmp.ne.s32.totalorder %s55, %s56
      %p65 = scmp.eq.s32.totalorder %s24, 0
      %p66 = por %p64, %p65
      %p67 = scmp.ne.s32.totalorder %s55, %s56
      %p68 = scmp.eq.s32.totalorder %s25, 1
      %p69 = por %p67, %p68
      %p71 = scmp.ne.s32.totalorder %s56, %s70
      %p72 = scmp.eq.s32.totalorder %s25, 0
      %p73 = por %p71, %p72
      %s75 = sadd.s32 %s74, 1
      %p78 = scmp.eq.s32.totalorder %s19, 1
      %p79 = scmp.ne.s32.totalorder %s74, %s76
      %p80 = scmp.eq.s32.totalorder %s19, 0
      %p81 = por %p79, %p80
      %p82 = scmp.ne.s32.totalorder %s74, %s76
      %p83 = scmp.eq.s32.totalorder %s24, 1
      %p84 = por %p82, %p83
      %p85 = scmp.ne.s32.totalorder %s76, %s77
      %p86 = scmp.eq.s32.totalorder %s24, 0
      %p87 = por %p85, %p86
      %p88 = scmp.ne.s32.totalorder %s76, %s77
      %p89 = scmp.eq.s32.totalorder %s25, 1
      %p90 = por %p88, %p89
      %p92 = scmp.ne.s32.totalorder %s77, %s91
      %p93 = scmp.eq.s32.totalorder %s25, 0
      %p94 = por %p92, %p93
      %s96 = sadd.s32 %s95, 1
      %p99 = scmp.eq.s32.totalorder %s19, 1
      %p100 = scmp.ne.s32.totalorder %s95, %s97
      %p101 = scmp.eq.s32.totalorder %s19, 0
      %p102 = por %p100, %p101
      %p103 = scmp.ne.s32.totalorder %s95, %s97
      %p104 = scmp.eq.s32.totalorder %s24, 1
      %p105 = por %p103, %p104
      %p106 = scmp.ne.s32.totalorder %s97, %s98
      %p107 = scmp.eq.s32.totalorder %s24, 0
      %p108 = por %p106, %p107
      %p109 = scmp.ne.s32.totalorder %s97, %s98
      %p110 = scmp.eq.s32.totalorder %s25, 1
      %p111 = por %p109, %p110
      %p113 = scmp.ne.s32.totalorder %s98, %s112
      %p114 = scmp.eq.s32.totalorder %s25, 0
      %p115 = por %p113, %p114
      %s117 = sadd.s32 %s116, 1
      %p120 = scmp.eq.s32.totalorder %s19, 1
      %p121 = scmp.ne.s32.totalorder %s116, %s118
      %p122 = scmp.eq.s32.totalorder %s19, 0
      %p123 = por %p121, %p122
      %p124 = scmp.ne.s32.totalorder %s116, %s118
      %p125 = scmp.eq.s32.totalorder %s24, 1
      %p126 = por %p124, %p125
      %p127 = scmp.ne.s32.totalorder %s118, %s119
      %p128 = scmp.eq.s32.totalorder %s24, 0
      %p129 = por %p127, %p128
      %p130 = scmp.ne.s32.totalorder %s118, %s119
      %p131 = scmp.eq.s32.totalorder %s25, 1
      %p132 = por %p130, %p131
      %p134 = scmp.ne.s32.totalorder %s119, %s133
      %p135 = scmp.eq.s32.totalorder %s25, 0
      %p136 = por %p134, %p135
      %s138 = sadd.s32 %s137, 1
      %p141 = scmp.eq.s32.totalorder %s19, 1
      %p142 = scmp.ne.s32.totalorder %s137, %s139
      %p143 = scmp.eq.s32.totalorder %s19, 0
      %p144 = por %p142, %p143
      %p145 = scmp.ne.s32.totalorder %s137, %s139
      %p146 = scmp.eq.s32.totalorder %s24, 1
      %p147 = por %p145, %p146
      %p148 = scmp.ne.s32.totalorder %s139, %s140
      %p149 = scmp.eq.s32.totalorder %s24, 0
      %p150 = por %p148, %p149
      %p151 = scmp.ne.s32.totalorder %s139, %s140
      %p152 = scmp.eq.s32.totalorder %s25, 1
      %p153 = por %p151, %p152
      %p155 = scmp.ne.s32.totalorder %s140, %s154
      %p156 = scmp.eq.s32.totalorder %s25, 0
      %p157 = por %p155, %p156
      %s158 = ssub.s32 %s19, %s26
      %p159 = scmp.eq.s32.totalorder %s158, 0
      %s161 = sadd.s32 %s160, 1
      %s162 = scalar_select %p159, %s160, %s161
      %p165 = pneg %p159
      %p166 = scmp.eq.s32.totalorder %s19, 1
      %p167 = por %p165, %p166
      %p168 = scmp.ne.s32.totalorder %s160, %s163
      %p169 = scmp.eq.s32.totalorder %s19, 0
      %p170 = por %p168, %p169
      %p171 = scmp.ne.s32.totalorder %s160, %s163
      %p172 = scmp.eq.s32.totalorder %s24, 1
      %p173 = por %p171, %p172
      %p174 = scmp.ne.s32.totalorder %s163, %s164
      %p175 = scmp.eq.s32.totalorder %s24, 0
      %p176 = por %p174, %p175
      %p177 = scmp.ne.s32.totalorder %s163, %s164
      %p178 = scmp.eq.s32.totalorder %s25, 1
      %p179 = por %p177, %p178
      %p181 = scmp.ne.s32.totalorder %s164, %s180
      %p182 = scmp.eq.s32.totalorder %s25, 0
      %p183 = por %p181, %p182
      %p184 = scmp.le.s32.totalorder 1, %s19
      %p185 = scmp.lt.s32.totalorder %s19, 3
      %p186 = pnand %p184, %p185
      %p187 = pneg %p186
      // Predicated region
      $region9: #{tpu_custom_call.1} parent=5 // pred_check
        _
      $region10: #{tpu_custom_call.1} parent=5 // pred_check_branch
        %189 = sbr.rel (%p186) target = $region12
      $region11: #{tpu_custom_call.1} parent=5 // pred_region
        %s190 = ssub.s32 %s19, 1
        // Predicated region
        $region13: #{tpu_custom_call.1} parent=11 // pred_check
          %p191 = pneg %p66
        $region14: #{tpu_custom_call.1} parent=11 // pred_check_branch
          %193 = sbr.rel (%p191) target = $region16
        $region15: #{tpu_custom_call.1} parent=11 // pred_region
          _
        $region16: #{tpu_custom_call.1} parent=11 // pred_fallthru
          _
        // Predicated region
        $region17: #{tpu_custom_call.1} parent=11 // pred_check
          %p194 = pneg %p87
        $region18: #{tpu_custom_call.1} parent=11 // pred_check_branch
          %196 = sbr.rel (%p194) target = $region20
        $region19: #{tpu_custom_call.1} parent=11 // pred_region
          _
        $region20: #{tpu_custom_call.1} parent=11 // pred_fallthru
          _
        // Predicated region
        $region21: #{tpu_custom_call.1} parent=11 // pred_check
          %p197 = pneg %p108
        $region22: #{tpu_custom_call.1} parent=11 // pred_check_branch
          %199 = sbr.rel (%p197) target = $region24
        $region23: #{tpu_custom_call.1} parent=11 // pred_region
          _
        $region24: #{tpu_custom_call.1} parent=11 // pred_fallthru
          _
        // Predicated region
        $region25: #{tpu_custom_call.1} parent=11 // pred_check
          %p200 = pneg %p129
        $region26: #{tpu_custom_call.1} parent=11 // pred_check_branch
          %202 = sbr.rel (%p200) target = $region28
        $region27: #{tpu_custom_call.1} parent=11 // pred_region
          _
        $region28: #{tpu_custom_call.1} parent=11 // pred_fallthru
          _
        // Predicated region
        $region29: #{tpu_custom_call.1} parent=11 // pred_check
          %p203 = pneg %p150
        $region30: #{tpu_custom_call.1} parent=11 // pred_check_branch
          %205 = sbr.rel (%p203) target = $region32
        $region31: #{tpu_custom_call.1} parent=11 // pred_region
          %s207 = ssub.s32 4608, 4608
          %208 = vsyncadd [#allocation6], %s207
          %s209 = sshll.u32 [#allocation5], 4
          %s210 = int_to_ptr.vmem [resolvable:$true] %s209
          %215 = dma.hbm_to_vmem [thread:$0]  %s5, 4608, %s210, [#allocation6], 512, 512, 32
        $region32: #{tpu_custom_call.1} parent=11 // pred_fallthru
          _
      $region12: #{tpu_custom_call.1} parent=5 // pred_fallthru
        _
      %p216 = scmp.lt.s32.totalorder %s19, 2
      // Predicated region
      $region33: #{tpu_custom_call.1} parent=5 // pred_check
        %p217 = pneg %p216
      $region34: #{tpu_custom_call.1} parent=5 // pred_check_branch
        %219 = sbr.rel (%p217) target = $region36
      $region35: #{tpu_custom_call.1} parent=5 // pred_region
        // Predicated region
        $region37: #{tpu_custom_call.1} parent=35 // pred_check
          %p220 = pneg %p39
        $region38: #{tpu_custom_call.1} parent=35 // pred_check_branch
          %222 = sbr.rel (%p220) target = $region40
        $region39: #{tpu_custom_call.1} parent=35 // pred_region
          %s223 = sand.u32 %s29, 1
          %s224 = scalar_lea.sflag [#allocation3], %s223
          %s225 = sand.u32 %s29, 1
          %s226 = smul.addr %s225, 32
          %s227 = scalar_lea.vmem [#allocation2], %s226
          %s228 = smul.u32 8, %s19
          %s230 = ssub.s32 512, 512
          %231 = vsyncadd %s224, %s230
          %s232 = smul.addr %s228, 64
          %s233 = scalar_lea.hbm %s0, %s232
          %s235 = sshll.u32 %s227, 4
          %s236 = int_to_ptr.vmem [resolvable:$true] %s235
          %238 = dma.hbm_to_vmem [thread:$0]  %s233, 512, %s236, %s224
        $region40: #{tpu_custom_call.1} parent=35 // pred_fallthru
          _
      $region36: #{tpu_custom_call.1} parent=5 // pred_fallthru
        _
      %p239 = scmp.le.s32.totalorder 1, %s19
      %p240 = scmp.lt.s32.totalorder %s19, 3
      %p241 = pnand %p239, %p240
      %p242 = pneg %p241
      // Predicated region
      $region41: #{tpu_custom_call.1} parent=5 // pred_check
        _
      $region42: #{tpu_custom_call.1} parent=5 // pred_check_branch
        %244 = sbr.rel (%p241) target = $region44
      $region43: #{tpu_custom_call.1} parent=5 // pred_region
        %s245 = ssub.s32 %s19, 1
        %s246 = sand.u32 %s32, 1
        %s247 = scalar_lea.sflag [#allocation3], %s246
        %s248 = sand.u32 %s32, 1
        %s249 = smul.addr %s248, 32
        %s250 = scalar_lea.vmem [#allocation2], %s249
        // Predicated region
        $region45: #{tpu_custom_call.1} parent=43 // pred_check
          %p251 = pneg %p45
        $region46: #{tpu_custom_call.1} parent=43 // pred_check_branch
          %253 = sbr.rel (%p251) target = $region48
        $region47: #{tpu_custom_call.1} parent=43 // pred_region
          %254 = dma.done %s247, 512
        $region48: #{tpu_custom_call.1} parent=43 // pred_fallthru
          _
        // Predicated region
        $region49: #{tpu_custom_call.1} parent=43 // pred_check
          %p255 = pneg %p150
        $region50: #{tpu_custom_call.1} parent=43 // pred_check_branch
          %257 = sbr.rel (%p255) target = $region52
        $region51: #{tpu_custom_call.1} parent=43 // pred_region
          %258 = dma.done [#allocation6], 4608
        $region52: #{tpu_custom_call.1} parent=43 // pred_fallthru
          _
        %s259 = sand.u32 %s32, 1
        %s260 = scalar_lea.sflag [#allocation3], %s259
        %s261 = sand.u32 %s32, 1
        %s262 = smul.addr %s261, 32
        %s263 = scalar_lea.vmem [#allocation2], %s262
        %p264 = pneg %p45
        %p265 = pneg %p42
        %p266 = pneg %p66
        %p267 = pneg %p63
        %p268 = pneg %p87
        %p269 = pneg %p84
        %p270 = pneg %p108
        %p271 = pneg %p105
        %p272 = pneg %p129
        %p273 = pneg %p126
        %p274 = pneg %p150
        %p275 = pneg %p147
        %p276 = pneg %p176
        %p277 = pneg %p173
        %s278 = sand.u32 %s163, 1
        %s279 = scalar_lea.sflag [#allocation4], %s278
        %s280 = sand.u32 %s163, 1
        %s281 = smul.addr %s280, 32
        %s282 = scalar_lea.vmem [#allocation7], %s281
        %s283 = smul.u32 8, %s24
        %s284 = smul.u32 8, %s24
        %v286 = vld [vmem:[%s1] sm:$0x3]
        %s287 = scalar_lea.vmem %s1, 2
        %v288 = vld [vmem:[%s287] sm:$0x3]
        %s289 = scalar_lea.vmem %s1, 4
        %v290 = vld [vmem:[%s289] sm:$0x3]
        %s291 = scalar_lea.vmem %s1, 6
        %v292 = vld [vmem:[%s291] sm:$0x3]
        %s293 = scalar_lea.vmem %s1, 8
        %v294 = vld [vmem:[%s293] sm:$0x3]
        %s295 = scalar_lea.vmem %s1, 10
        %v296 = vld [vmem:[%s295] sm:$0x3]
        %s297 = scalar_lea.vmem %s1, 12
        %v298 = vld [vmem:[%s297] sm:$0x3]
        %s299 = scalar_lea.vmem %s1, 14
        %v300 = vld [vmem:[%s299] sm:$0x3]
        %s301 = scalar_lea.vmem %s1, 16
        %v302 = vld [vmem:[%s301] sm:$0x3]
        %v303 = vld [vmem:[%s3] sm:$0x3]
        %s304 = scalar_lea.vmem %s3, 2
        %v305 = vld [vmem:[%s304] sm:$0x3]
        %s306 = scalar_lea.vmem %s3, 4
        %v307 = vld [vmem:[%s306] sm:$0x3]
        %s308 = scalar_lea.vmem %s3, 6
        %v309 = vld [vmem:[%s308] sm:$0x3]
        %s310 = scalar_lea.vmem %s3, 8
        %v311 = vld [vmem:[%s310] sm:$0x3]
        %s312 = scalar_lea.vmem %s3, 10
        %v313 = vld [vmem:[%s312] sm:$0x3]
        %s314 = scalar_lea.vmem %s3, 12
        %v315 = vld [vmem:[%s314] sm:$0x3]
        %s316 = scalar_lea.vmem %s3, 14
        %v317 = vld [vmem:[%s316] sm:$0x3]
        %s318 = scalar_lea.vmem %s3, 16
        %v319 = vld [vmem:[%s318] sm:$0x3]
        %v320 = vld [vmem:[%s2] sm:$0xf]
        %v321 = vld [vmem:[%s4] sm:$0xf]
        %v322 = vld [vmem:[%s250] sm:$0xff]
        %v323 = vld [vmem:[%s250 + $0x8] sm:$0xff]
        %v324 = vld [vmem:[%s250 + $0x10] sm:$0xff]
        %v325 = vld [vmem:[%s250 + $0x18] sm:$0xff]
        %v330 = vcombine.high %v322, %v322
        %v331 = vcombine.high %v323, %v323
        %v332 = vcombine.high %v324, %v324
        %v333 = vcombine.high %v325, %v325
        %v338 = vpack.c.bf16 %v322, %v322
        %v339 = vpack.c.bf16 %v330, %v330
        %v340 = vpack.c.bf16 %v323, %v323
        %v341 = vpack.c.bf16 %v331, %v331
        %v342 = vpack.c.bf16 %v324, %v324
        %v343 = vpack.c.bf16 %v332, %v332
        %v344 = vpack.c.bf16 %v325, %v325
        %v345 = vpack.c.bf16 %v333, %v333
        %346 = vrot.lane.b32.xlu0 %v322, 17
        %v347 = vpop.permute.xlu0 %346
        %348 = vrot.lane.b32.xlu0 %v330, 17
        %v349 = vpop.permute.xlu0 %348
        %350 = vrot.lane.b32.xlu0 %v323, 17
        %v351 = vpop.permute.xlu0 %350
        %352 = vrot.lane.b32.xlu0 %v331, 17
        %v353 = vpop.permute.xlu0 %352
        %354 = vrot.lane.b32.xlu0 %v324, 17
        %v355 = vpop.permute.xlu0 %354
        %356 = vrot.lane.b32.xlu0 %v332, 17
        %v357 = vpop.permute.xlu0 %356
        %358 = vrot.lane.b32.xlu0 %v325, 17
        %v359 = vpop.permute.xlu0 %358
        %360 = vrot.lane.b32.xlu0 %v333, 17
        %v361 = vpop.permute.xlu0 %360
        %v362 = vlaneseq
        %v363 = vand.u32 %v362, 127
        %vm364 = vcmp.lt.s32.totalorder %v363, 17
        %v365 = vsel %vm364, %v359, %v361
        %v366 = vsel %vm364, %v357, %v359
        %v367 = vsel %vm364, %v355, %v357
        %v368 = vsel %vm364, %v353, %v355
        %v369 = vsel %vm364, %v351, %v353
        %v370 = vsel %vm364, %v349, %v351
        %v371 = vsel %vm364, %v347, %v349
        %v372 = vsel %vm364, %v361, %v347
        %v373 = vld [vmem:[#allocation5] sm:$0xff]
        %v374 = vld [vmem:[#allocation5 + $0x8] sm:$0xff]
        %v375 = vld [vmem:[#allocation5 + $0x10] sm:$0xff]
        %v376 = vld [vmem:[#allocation5 + $0x18] sm:$0xff]
        %v381 = vcombine.high %v373, %v373
        %v382 = vcombine.high %v374, %v374
        %v383 = vcombine.high %v375, %v375
        %v384 = vcombine.high %v376, %v376
        %v389 = vmul.f32 %v372, %v373
        %v390 = vmul.f32 %v371, %v381
        %v391 = vmul.f32 %v370, %v374
        %v392 = vmul.f32 %v369, %v382
        %v393 = vmul.f32 %v368, %v375
        %v394 = vmul.f32 %v367, %v383
        %v395 = vmul.f32 %v366, %v376
        %v396 = vmul.f32 %v365, %v384
        %v397 = vpack.c.bf16 %v389, %v389
        %v398 = vpack.c.bf16 %v390, %v390
        %v399 = vpack.c.bf16 %v391, %v391
        %v400 = vpack.c.bf16 %v392, %v392
        %v401 = vpack.c.bf16 %v393, %v393
        %v402 = vpack.c.bf16 %v394, %v394
        %v403 = vpack.c.bf16 %v395, %v395
        %v404 = vpack.c.bf16 %v396, %v396
        %vm405 = vcmask 31744
        %v407 = vsel %vm405, %v286, 0
        %vm409 = vcmask 1041408
        %v411 = vsel %vm409, %v397, 0
        %v414 = vsel %vm409, %v398, 0
        %v417 = vsel %vm409, %v399, 0
        %v420 = vsel %vm409, %v400, 0
        %v423 = vsel %vm409, %v401, 0
        %v426 = vsel %vm409, %v402, 0
        %v429 = vsel %vm409, %v403, 0
        %v432 = vsel %vm409, %v404, 0
        %434 = vmatprep.subr.bf16.mxu0 %v414
        %435 = vmatpush1.bf16.msra.mxu0 %v411
        %436 = vmatprep.subr.bf16.mxu0 0
        %437 = vmatpush1.bf16.msra.mxu0 0
        %438 = vmatprep.subr.bf16.mxu0 0
        %439 = vmatpush1.bf16.msra.mxu0 0
        %440 = vmatprep.subr.bf16.mxu0 0
        %441 = vmatpush1.bf16.msra.mxu0 0
        %442 = vmatprep.subr.bf16.mxu0 0
        %443 = vmatpush1.bf16.msra.mxu0 0
        %444 = vmatprep.subr.bf16.mxu0 0
        %445 = vmatpush1.bf16.msra.mxu0 0
        %446 = vmatprep.subr.bf16.mxu0 0
        %447 = vmatpush1.bf16.msra.mxu0 0
        %448 = vmatprep.subr.bf16.mxu0 0
        %449 = vmatpush1.bf16.msra.mxu0 0
        %450 = vmatprep.subr.bf16.mxu0 0
        %451 = vmatpush1.bf16.msra.mxu0 0
        %452 = vmatprep.subr.bf16.mxu0 0
        %453 = vmatpush1.bf16.msra.mxu0 0
        %454 = vmatprep.subr.bf16.mxu0 0
        %455 = vmatpush1.bf16.msra.mxu0 0
        %456 = vmatprep.subr.bf16.mxu0 0
        %457 = vmatpush1.bf16.msra.mxu0 0
        %458 = vmatprep.subr.bf16.mxu0 0
        %459 = vmatpush1.bf16.msra.mxu0 0
        %460 = vmatprep.subr.bf16.mxu0 0
        %461 = vmatpush1.bf16.msra.mxu0 0
        %462 = vmatprep.subr.bf16.mxu0 0
        %463 = vmatpush1.bf16.msra.mxu0 0
        %464 = vmatprep.subr.bf16.mxu0 0
        %465 = vmatpush1.bf16.msra.mxu0 0
        %466 = vmatprep.mubr.bf16.mxu0 0
        %467 = vmatmul.mubr.bf16.gmra.mrb[0].mxu0 %v407
        %v468 = vpop.f32.mrb[0].mxu0
        %v469 = vadd.f32 0.0, %v468
        %v470 = vpop.f32.mrb[0].mxu0
        %v471 = vadd.f32 0.0, %v470
        %v472 = vpop.f32.mrb[0].mxu0
        %v473 = vpop.f32.mrb[0].mxu0
        %474 = vdwg.mxu0
        %475 = vmatprep.subr.bf16.mxu0 %v420
        %476 = vmatpush1.bf16.msra.mxu0 %v417
        %477 = vmatprep.subr.bf16.mxu0 0
        %478 = vmatpush1.bf16.msra.mxu0 0
        %479 = vmatprep.subr.bf16.mxu0 0
        %480 = vmatpush1.bf16.msra.mxu0 0
        %481 = vmatprep.subr.bf16.mxu0 0
        %482 = vmatpush1.bf16.msra.mxu0 0
        %483 = vmatprep.subr.bf16.mxu0 0
        %484 = vmatpush1.bf16.msra.mxu0 0
        %485 = vmatprep.subr.bf16.mxu0 0
        %486 = vmatpush1.bf16.msra.mxu0 0
        %487 = vmatprep.subr.bf16.mxu0 0
        %488 = vmatpush1.bf16.msra.mxu0 0
        %489 = vmatprep.subr.bf16.mxu0 0
        %490 = vmatpush1.bf16.msra.mxu0 0
        %491 = vmatprep.subr.bf16.mxu0 0
        %492 = vmatpush1.bf16.msra.mxu0 0
        %493 = vmatprep.subr.bf16.mxu0 0
        %494 = vmatpush1.bf16.msra.mxu0 0
        %495 = vmatprep.subr.bf16.mxu0 0
        %496 = vmatpush1.bf16.msra.mxu0 0
        %497 = vmatprep.subr.bf16.mxu0 0
        %498 = vmatpush1.bf16.msra.mxu0 0
        %499 = vmatprep.subr.bf16.mxu0 0
        %500 = vmatpush1.bf16.msra.mxu0 0
        %501 = vmatprep.subr.bf16.mxu0 0
        %502 = vmatpush1.bf16.msra.mxu0 0
        %503 = vmatprep.subr.bf16.mxu0 0
        %504 = vmatpush1.bf16.msra.mxu0 0
        %505 = vmatprep.subr.bf16.mxu0 0
        %506 = vmatpush1.bf16.msra.mxu0 0
        %507 = vmatprep.mubr.bf16.mxu0 0
        %508 = vmatmul.mubr.bf16.gmra.mrb[0].mxu0 %v407
        %v509 = vpop.f32.mrb[0].mxu0
        %v510 = vadd.f32 0.0, %v509
        %v511 = vpop.f32.mrb[0].mxu0
        %v512 = vadd.f32 0.0, %v511
        %v513 = vpop.f32.mrb[0].mxu0
        %v514 = vpop.f32.mrb[0].mxu0
        %515 = vdwg.mxu0
        %516 = vmatprep.subr.bf16.mxu0 %v426
        %517 = vmatpush1.bf16.msra.mxu0 %v423
        %518 = vmatprep.subr.bf16.mxu0 0
        %519 = vmatpush1.bf16.msra.mxu0 0
        %520 = vmatprep.subr.bf16.mxu0 0
        %521 = vmatpush1.bf16.msra.mxu0 0
        %522 = vmatprep.subr.bf16.mxu0 0
        %523 = vmatpush1.bf16.msra.mxu0 0
        %524 = vmatprep.subr.bf16.mxu0 0
        %525 = vmatpush1.bf16.msra.mxu0 0
        %526 = vmatprep.subr.bf16.mxu0 0
        %527 = vmatpush1.bf16.msra.mxu0 0
        %528 = vmatprep.subr.bf16.mxu0 0
        %529 = vmatpush1.bf16.msra.mxu0 0
        %530 = vmatprep.subr.bf16.mxu0 0
        %531 = vmatpush1.bf16.msra.mxu0 0
        %532 = vmatprep.subr.bf16.mxu0 0
        %533 = vmatpush1.bf16.msra.mxu0 0
        %534 = vmatprep.subr.bf16.mxu0 0
        %535 = vmatpush1.bf16.msra.mxu0 0
        %536 = vmatprep.subr.bf16.mxu0 0
        %537 = vmatpush1.bf16.msra.mxu0 0
        %538 = vmatprep.subr.bf16.mxu0 0
        %539 = vmatpush1.bf16.msra.mxu0 0
        %540 = vmatprep.subr.bf16.mxu0 0
        %541 = vmatpush1.bf16.msra.mxu0 0
        %542 = vmatprep.subr.bf16.mxu0 0
        %543 = vmatpush1.bf16.msra.mxu0 0
        %544 = vmatprep.subr.bf16.mxu0 0
        %545 = vmatpush1.bf16.msra.mxu0 0
        %546 = vmatprep.subr.bf16.mxu0 0
        %547 = vmatpush1.bf16.msra.mxu0 0
        %548 = vmatprep.mubr.bf16.mxu0 0
        %549 = vmatmul.mubr.bf16.gmra.mrb[0].mxu0 %v407
        %v550 = vpop.f32.mrb[0].mxu0
        %v551 = vadd.f32 0.0, %v550
        %v552 = vpop.f32.mrb[0].mxu0
        %v553 = vadd.f32 0.0, %v552
        %v554 = vpop.f32.mrb[0].mxu0
        %v555 = vpop.f32.mrb[0].mxu0
        %556 = vdwg.mxu0
        %557 = vmatprep.subr.bf16.mxu0 %v432
        %558 = vmatpush1.bf16.msra.mxu0 %v429
        %559 = vmatprep.subr.bf16.mxu0 0
        %560 = vmatpush1.bf16.msra.mxu0 0
        %561 = vmatprep.subr.bf16.mxu0 0
        %562 = vmatpush1.bf16.msra.mxu0 0
        %563 = vmatprep.subr.bf16.mxu0 0
        %564 = vmatpush1.bf16.msra.mxu0 0
        %565 = vmatprep.subr.bf16.mxu0 0
        %566 = vmatpush1.bf16.msra.mxu0 0
        %567 = vmatprep.subr.bf16.mxu0 0
        %568 = vmatpush1.bf16.msra.mxu0 0
        %569 = vmatprep.subr.bf16.mxu0 0
        %570 = vmatpush1.bf16.msra.mxu0 0
        %571 = vmatprep.subr.bf16.mxu0 0
        %572 = vmatpush1.bf16.msra.mxu0 0
        %573 = vmatprep.subr.bf16.mxu0 0
        %574 = vmatpush1.bf16.msra.mxu0 0
        %575 = vmatprep.subr.bf16.mxu0 0
        %576 = vmatpush1.bf16.msra.mxu0 0
        %577 = vmatprep.subr.bf16.mxu0 0
        %578 = vmatpush1.bf16.msra.mxu0 0
        %579 = vmatprep.subr.bf16.mxu0 0
        %580 = vmatpush1.bf16.msra.mxu0 0
        %581 = vmatprep.subr.bf16.mxu0 0
        %582 = vmatpush1.bf16.msra.mxu0 0
        %583 = vmatprep.subr.bf16.mxu0 0
        %584 = vmatpush1.bf16.msra.mxu0 0
        %585 = vmatprep.subr.bf16.mxu0 0
        %586 = vmatpush1.bf16.msra.mxu0 0
        %587 = vmatprep.subr.bf16.mxu0 0
        %588 = vmatpush1.bf16.msra.mxu0 0
        %589 = vmatprep.mubr.bf16.mxu0 0
        %590 = vmatmul.mubr.bf16.gmra.mrb[0].mxu0 %v407
        %v591 = vpop.f32.mrb[0].mxu0
        %v592 = vadd.f32 0.0, %v591
        %v593 = vpop.f32.mrb[0].mxu0
        %v594 = vadd.f32 0.0, %v593
        %v595 = vpop.f32.mrb[0].mxu0
        %v596 = vpop.f32.mrb[0].mxu0
        %597 = vdwg.mxu0
        %v599 = vsel %vm405, %v294, 0
        %v602 = vsel %vm409, %v338, 0
        %v605 = vsel %vm409, %v339, 0
        %v608 = vsel %vm409, %v340, 0
        %v611 = vsel %vm409, %v341, 0
        %v614 = vsel %vm409, %v342, 0
        %v617 = vsel %vm409, %v343, 0
        %v620 = vsel %vm409, %v344, 0
        %v623 = vsel %vm409, %v345, 0
        %625 = vmatprep.subr.bf16.mxu0 %v605
        %626 = vmatpush1.bf16.msra.mxu0 %v602
        %627 = vmatprep.subr.bf16.mxu0 0
        %628 = vmatpush1.bf16.msra.mxu0 0
        %629 = vmatprep.subr.bf16.mxu0 0
        %630 = vmatpush1.bf16.msra.mxu0 0
        %631 = vmatprep.subr.bf16.mxu0 0
        %632 = vmatpush1.bf16.msra.mxu0 0
        %633 = vmatprep.subr.bf16.mxu0 0
        %634 = vmatpush1.bf16.msra.mxu0 0
        %635 = vmatprep.subr.bf16.mxu0 0
        %636 = vmatpush1.bf16.msra.mxu0 0
        %637 = vmatprep.subr.bf16.mxu0 0
        %638 = vmatpush1.bf16.msra.mxu0 0
        %639 = vmatprep.subr.bf16.mxu0 0
        %640 = vmatpush1.bf16.msra.mxu0 0
        %641 = vmatprep.subr.bf16.mxu0 0
        %642 = vmatpush1.bf16.msra.mxu0 0
        %643 = vmatprep.subr.bf16.mxu0 0
        %644 = vmatpush1.bf16.msra.mxu0 0
        %645 = vmatprep.subr.bf16.mxu0 0
        %646 = vmatpush1.bf16.msra.mxu0 0
        %647 = vmatprep.subr.bf16.mxu0 0
        %648 = vmatpush1.bf16.msra.mxu0 0
        %649 = vmatprep.subr.bf16.mxu0 0
        %650 = vmatpush1.bf16.msra.mxu0 0
        %651 = vmatprep.subr.bf16.mxu0 0
        %652 = vmatpush1.bf16.msra.mxu0 0
        %653 = vmatprep.subr.bf16.mxu0 0
        %654 = vmatpush1.bf16.msra.mxu0 0
        %655 = vmatprep.subr.bf16.mxu0 0
        %656 = vmatpush1.bf16.msra.mxu0 0
        %657 = vmatprep.mubr.bf16.mxu0 0
        %658 = vmatmul.mubr.bf16.gmra.mrb[0].mxu0 %v599
        %v659 = vpop.f32.mrb[0].mxu0
        %v660 = vadd.f32 %v469, %v659
        %v661 = vpop.f32.mrb[0].mxu0
        %v662 = vadd.f32 %v471, %v661
        %v663 = vpop.f32.mrb[0].mxu0
        %v664 = vpop.f32.mrb[0].mxu0
        %665 = vdwg.mxu0
        %666 = vmatprep.subr.bf16.mxu0 %v611
        %667 = vmatpush1.bf16.msra.mxu0 %v608
        %668 = vmatprep.subr.bf16.mxu0 0
        %669 = vmatpush1.bf16.msra.mxu0 0
        %670 = vmatprep.subr.bf16.mxu0 0
        %671 = vmatpush1.bf16.msra.mxu0 0
        %672 = vmatprep.subr.bf16.mxu0 0
        %673 = vmatpush1.bf16.msra.mxu0 0
        %674 = vmatprep.subr.bf16.mxu0 0
        %675 = vmatpush1.bf16.msra.mxu0 0
        %676 = vmatprep.subr.bf16.mxu0 0
        %677 = vmatpush1.bf16.msra.mxu0 0
        %678 = vmatprep.subr.bf16.mxu0 0
        %679 = vmatpush1.bf16.msra.mxu0 0
        %680 = vmatprep.subr.bf16.mxu0 0
        %681 = vmatpush1.bf16.msra.mxu0 0
        %682 = vmatprep.subr.bf16.mxu0 0
        %683 = vmatpush1.bf16.msra.mxu0 0
        %684 = vmatprep.subr.bf16.mxu0 0
        %685 = vmatpush1.bf16.msra.mxu0 0
        %686 = vmatprep.subr.bf16.mxu0 0
        %687 = vmatpush1.bf16.msra.mxu0 0
        %688 = vmatprep.subr.bf16.mxu0 0
        %689 = vmatpush1.bf16.msra.mxu0 0
        %690 = vmatprep.subr.bf16.mxu0 0
        %691 = vmatpush1.bf16.msra.mxu0 0
        %692 = vmatprep.subr.bf16.mxu0 0
        %693 = vmatpush1.bf16.msra.mxu0 0
        %694 = vmatprep.subr.bf16.mxu0 0
        %695 = vmatpush1.bf16.msra.mxu0 0
        %696 = vmatprep.subr.bf16.mxu0 0
        %697 = vmatpush1.bf16.msra.mxu0 0
        %698 = vmatprep.mubr.bf16.mxu0 0
        %699 = vmatmul.mubr.bf16.gmra.mrb[0].mxu0 %v599
        %v700 = vpop.f32.mrb[0].mxu0
        %v701 = vadd.f32 %v510, %v700
        %v702 = vpop.f32.mrb[0].mxu0
        %v703 = vadd.f32 %v512, %v702
        %v704 = vpop.f32.mrb[0].mxu0
        %v705 = vpop.f32.mrb[0].mxu0
        %706 = vdwg.mxu0
        %707 = vmatprep.subr.bf16.mxu0 %v617
        %708 = vmatpush1.bf16.msra.mxu0 %v614
        %709 = vmatprep.subr.bf16.mxu0 0
        %710 = vmatpush1.bf16.msra.mxu0 0
        %711 = vmatprep.subr.bf16.mxu0 0
        %712 = vmatpush1.bf16.msra.mxu0 0
        %713 = vmatprep.subr.bf16.mxu0 0
        %714 = vmatpush1.bf16.msra.mxu0 0
        %715 = vmatprep.subr.bf16.mxu0 0
        %716 = vmatpush1.bf16.msra.mxu0 0
        %717 = vmatprep.subr.bf16.mxu0 0
        %718 = vmatpush1.bf16.msra.mxu0 0
        %719 = vmatprep.subr.bf16.mxu0 0
        %720 = vmatpush1.bf16.msra.mxu0 0
        %721 = vmatprep.subr.bf16.mxu0 0
        %722 = vmatpush1.bf16.msra.mxu0 0
        %723 = vmatprep.subr.bf16.mxu0 0
        %724 = vmatpush1.bf16.msra.mxu0 0
        %725 = vmatprep.subr.bf16.mxu0 0
        %726 = vmatpush1.bf16.msra.mxu0 0
        %727 = vmatprep.subr.bf16.mxu0 0
        %728 = vmatpush1.bf16.msra.mxu0 0
        %729 = vmatprep.subr.bf16.mxu0 0
        %730 = vmatpush1.bf16.msra.mxu0 0
        %731 = vmatprep.subr.bf16.mxu0 0
        %732 = vmatpush1.bf16.msra.mxu0 0
        %733 = vmatprep.subr.bf16.mxu0 0
        %734 = vmatpush1.bf16.msra.mxu0 0
        %735 = vmatprep.subr.bf16.mxu0 0
        %736 = vmatpush1.bf16.msra.mxu0 0
        %737 = vmatprep.subr.bf16.mxu0 0
        %738 = vmatpush1.bf16.msra.mxu0 0
        %739 = vmatprep.mubr.bf16.mxu0 0
        %740 = vmatmul.mubr.bf16.gmra.mrb[0].mxu0 %v599
        %v741 = vpop.f32.mrb[0].mxu0
        %v742 = vadd.f32 %v551, %v741
        %v743 = vpop.f32.mrb[0].mxu0
        %v744 = vadd.f32 %v553, %v743
        %v745 = vpop.f32.mrb[0].mxu0
        %v746 = vpop.f32.mrb[0].mxu0
        %747 = vdwg.mxu0
        %748 = vmatprep.subr.bf16.mxu0 %v623
        %749 = vmatpush1.bf16.msra.mxu0 %v620
        %750 = vmatprep.subr.bf16.mxu0 0
        %751 = vmatpush1.bf16.msra.mxu0 0
        %752 = vmatprep.subr.bf16.mxu0 0
        %753 = vmatpush1.bf16.msra.mxu0 0
        %754 = vmatprep.subr.bf16.mxu0 0
        %755 = vmatpush1.bf16.msra.mxu0 0
        %756 = vmatprep.subr.bf16.mxu0 0
        %757 = vmatpush1.bf16.msra.mxu0 0
        %758 = vmatprep.subr.bf16.mxu0 0
        %759 = vmatpush1.bf16.msra.mxu0 0
        %760 = vmatprep.subr.bf16.mxu0 0
        %761 = vmatpush1.bf16.msra.mxu0 0
        %762 = vmatprep.subr.bf16.mxu0 0
        %763 = vmatpush1.bf16.msra.mxu0 0
        %764 = vmatprep.subr.bf16.mxu0 0
        %765 = vmatpush1.bf16.msra.mxu0 0
        %766 = vmatprep.subr.bf16.mxu0 0
        %767 = vmatpush1.bf16.msra.mxu0 0
        %768 = vmatprep.subr.bf16.mxu0 0
        %769 = vmatpush1.bf16.msra.mxu0 0
        %770 = vmatprep.subr.bf16.mxu0 0
        %771 = vmatpush1.bf16.msra.mxu0 0
        %772 = vmatprep.subr.bf16.mxu0 0
        %773 = vmatpush1.bf16.msra.mxu0 0
        %774 = vmatprep.subr.bf16.mxu0 0
        %775 = vmatpush1.bf16.msra.mxu0 0
        %776 = vmatprep.subr.bf16.mxu0 0
        %777 = vmatpush1.bf16.msra.mxu0 0
        %778 = vmatprep.subr.bf16.mxu0 0
        %779 = vmatpush1.bf16.msra.mxu0 0
        %780 = vmatprep.mubr.bf16.mxu0 0
        %781 = vmatmul.mubr.bf16.gmra.mrb[0].mxu0 %v599
        %v782 = vpop.f32.mrb[0].mxu0
        %v783 = vadd.f32 %v592, %v782
        %v784 = vpop.f32.mrb[0].mxu0
        %v785 = vadd.f32 %v594, %v784
        %v786 = vpop.f32.mrb[0].mxu0
        %v787 = vpop.f32.mrb[0].mxu0
        %788 = vdwg.mxu0
        %789 = vrot.lane.b32.xlu0 %v322, 16
        %v790 = vpop.permute.xlu0 %789
        %791 = vrot.lane.b32.xlu0 %v330, 16
        %v792 = vpop.permute.xlu0 %791
        %793 = vrot.lane.b32.xlu0 %v323, 16
        %v794 = vpop.permute.xlu0 %793
        %795 = vrot.lane.b32.xlu0 %v331, 16
        %v796 = vpop.permute.xlu0 %795
        %797 = vrot.lane.b32.xlu0 %v324, 16
        %v798 = vpop.permute.xlu0 %797
        %799 = vrot.lane.b32.xlu0 %v332, 16
        %v800 = vpop.permute.xlu0 %799
        %801 = vrot.lane.b32.xlu0 %v325, 16
        %v802 = vpop.permute.xlu0 %801
        %803 = vrot.lane.b32.xlu0 %v333, 16
        %v804 = vpop.permute.xlu0 %803
        %vm805 = vcmp.lt.s32.totalorder %v363, 16
        %v806 = vsel %vm805, %v802, %v804
        %v807 = vsel %vm805, %v800, %v802
        %v808 = vsel %vm805, %v798, %v800
        %v809 = vsel %vm805, %v796, %v798
        %v810 = vsel %vm805, %v794, %v796
        %v811 = vsel %vm805, %v792, %v794
        %v812 = vsel %vm805, %v790, %v792
        %v813 = vsel %vm805, %v804, %v790
        %s814 = scalar_lea.vmem [#allocation5], 32
        %v815 = vld [vmem:[%s814] sm:$0xff]
        %v816 = vld [vmem:[%s814 + $0x8] sm:$0xff]
        %v817 = vld [vmem:[%s814 + $0x10] sm:$0xff]
        %v818 = vld [vmem:[%s814 + $0x18] sm:$0xff]
        %v823 = vcombine.high %v815, %v815
        %v824 = vcombine.high %v816, %v816
        %v825 = vcombine.high %v817, %v817
        %v826 = vcombine.high %v818, %v818
        %v831 = vmul.f32 %v813, %v815
        %v832 = vmul.f32 %v812, %v823
        %v833 = vmul.f32 %v811, %v816
        %v834 = vmul.f32 %v810, %v824
        %v835 = vmul.f32 %v809, %v817
        %v836 = vmul.f32 %v808, %v825
        %v837 = vmul.f32 %v807, %v818
        %v838 = vmul.f32 %v806, %v826
        %v839 = vpack.c.bf16 %v831, %v831
        %v840 = vpack.c.bf16 %v832, %v832
        %v841 = vpack.c.bf16 %v833, %v833
        %v842 = vpack.c.bf16 %v834, %v834
        %v843 = vpack.c.bf16 %v835, %v835
        %v844 = vpack.c.bf16 %v836, %v836
        %v845 = vpack.c.bf16 %v837, %v837
        %v846 = vpack.c.bf16 %v838, %v838
        %v848 = vsel %vm405, %v288, 0
        %v851 = vsel %vm409, %v839, 0
        %v854 = vsel %vm409, %v840, 0
        %v857 = vsel %vm409, %v841, 0
        %v860 = vsel %vm409, %v842, 0
        %v863 = vsel %vm409, %v843, 0
        %v866 = vsel %vm409, %v844, 0
        %v869 = vsel %vm409, %v845, 0
        %v872 = vsel %vm409, %v846, 0
        %874 = vmatprep.subr.bf16.mxu0 %v854
        %875 = vmatpush1.bf16.msra.mxu0 %v851
        %876 = vmatprep.subr.bf16.mxu0 0
        %877 = vmatpush1.bf16.msra.mxu0 0
        %878 = vmatprep.subr.bf16.mxu0 0
        %879 = vmatpush1.bf16.msra.mxu0 0
        %880 = vmatprep.subr.bf16.mxu0 0
        %881 = vmatpush1.bf16.msra.mxu0 0
        %882 = vmatprep.subr.bf16.mxu0 0
        %883 = vmatpush1.bf16.msra.mxu0 0
        %884 = vmatprep.subr.bf16.mxu0 0
        %885 = vmatpush1.bf16.msra.mxu0 0
        %886 = vmatprep.subr.bf16.mxu0 0
        %887 = vmatpush1.bf16.msra.mxu0 0
        %888 = vmatprep.subr.bf16.mxu0 0
        %889 = vmatpush1.bf16.msra.mxu0 0
        %890 = vmatprep.subr.bf16.mxu0 0
        %891 = vmatpush1.bf16.msra.mxu0 0
        %892 = vmatprep.subr.bf16.mxu0 0
        %893 = vmatpush1.bf16.msra.mxu0 0
        %894 = vmatprep.subr.bf16.mxu0 0
        %895 = vmatpush1.bf16.msra.mxu0 0
        %896 = vmatprep.subr.bf16.mxu0 0
        %897 = vmatpush1.bf16.msra.mxu0 0
        %898 = vmatprep.subr.bf16.mxu0 0
        %899 = vmatpush1.bf16.msra.mxu0 0
        %900 = vmatprep.subr.bf16.mxu0 0
        %901 = vmatpush1.bf16.msra.mxu0 0
        %902 = vmatprep.subr.bf16.mxu0 0
        %903 = vmatpush1.bf16.msra.mxu0 0
        %904 = vmatprep.subr.bf16.mxu0 0
        %905 = vmatpush1.bf16.msra.mxu0 0
        %906 = vmatprep.mubr.bf16.mxu0 0
        %907 = vmatmul.mubr.bf16.gmra.mrb[0].mxu0 %v848
        %v908 = vpop.f32.mrb[0].mxu0
        %v909 = vadd.f32 0.0, %v908
        %v910 = vpop.f32.mrb[0].mxu0
        %v911 = vadd.f32 0.0, %v910
        %v912 = vpop.f32.mrb[0].mxu0
        %v913 = vpop.f32.mrb[0].mxu0
        %914 = vdwg.mxu0
        %915 = vmatprep.subr.bf16.mxu0 %v860
        %916 = vmatpush1.bf16.msra.mxu0 %v857
        %917 = vmatprep.subr.bf16.mxu0 0
        %918 = vmatpush1.bf16.msra.mxu0 0
        %919 = vmatprep.subr.bf16.mxu0 0
        %920 = vmatpush1.bf16.msra.mxu0 0
        %921 = vmatprep.subr.bf16.mxu0 0
        %922 = vmatpush1.bf16.msra.mxu0 0
        %923 = vmatprep.subr.bf16.mxu0 0
        %924 = vmatpush1.bf16.msra.mxu0 0
        %925 = vmatprep.subr.bf16.mxu0 0
        %926 = vmatpush1.bf16.msra.mxu0 0
        %927 = vmatprep.subr.bf16.mxu0 0
        %928 = vmatpush1.bf16.msra.mxu0 0
        %929 = vmatprep.subr.bf16.mxu0 0
        %930 = vmatpush1.bf16.msra.mxu0 0
        %931 = vmatprep.subr.bf16.mxu0 0
        %932 = vmatpush1.bf16.msra.mxu0 0
        %933 = vmatprep.subr.bf16.mxu0 0
        %934 = vmatpush1.bf16.msra.mxu0 0
        %935 = vmatprep.subr.bf16.mxu0 0
        %936 = vmatpush1.bf16.msra.mxu0 0
        %937 = vmatprep.subr.bf16.mxu0 0
        %938 = vmatpush1.bf16.msra.mxu0 0
        %939 = vmatprep.subr.bf16.mxu0 0
        %940 = vmatpush1.bf16.msra.mxu0 0
        %941 = vmatprep.subr.bf16.mxu0 0
        %942 = vmatpush1.bf16.msra.mxu0 0
        %943 = vmatprep.subr.bf16.mxu0 0
        %944 = vmatpush1.bf16.msra.mxu0 0
        %945 = vmatprep.subr.bf16.mxu0 0
        %946 = vmatpush1.bf16.msra.mxu0 0
        %947 = vmatprep.mubr.bf16.mxu0 0
        %948 = vmatmul.mubr.bf16.gmra.mrb[0].mxu0 %v848
        %v949 = vpop.f32.mrb[0].mxu0
        %v950 = vadd.f32 0.0, %v949
        %v951 = vpop.f32.mrb[0].mxu0
        %v952 = vadd.f32 0.0, %v951
        %v953 = vpop.f32.mrb[0].mxu0
        %v954 = vpop.f32.mrb[0].mxu0
        %955 = vdwg.mxu0
        %956 = vmatprep.subr.bf16.mxu0 %v866
        %957 = vmatpush1.bf16.msra.mxu0 %v863
        %958 = vmatprep.subr.bf16.mxu0 0
        %959 = vmatpush1.bf16.msra.mxu0 0
        %960 = vmatprep.subr.bf16.mxu0 0
        %961 = vmatpush1.bf16.msra.mxu0 0
        %962 = vmatprep.subr.bf16.mxu0 0
        %963 = vmatpush1.bf16.msra.mxu0 0
        %964 = vmatprep.subr.bf16.mxu0 0
        %965 = vmatpush1.bf16.msra.mxu0 0
        %966 = vmatprep.subr.bf16.mxu0 0
        %967 = vmatpush1.bf16.msra.mxu0 0
        %968 = vmatprep.subr.bf16.mxu0 0
        %969 = vmatpush1.bf16.msra.mxu0 0
        %970 = vmatprep.subr.bf16.mxu0 0
        %971 = vmatpush1.bf16.msra.mxu0 0
        %972 = vmatprep.subr.bf16.mxu0 0
        %973 = vmatpush1.bf16.msra.mxu0 0
        %974 = vmatprep.subr.bf16.mxu0 0
        %975 = vmatpush1.bf16.msra.mxu0 0
        %976 = vmatprep.subr.bf16.mxu0 0
        %977 = vmatpush1.bf16.msra.mxu0 0
        %978 = vmatprep.subr.bf16.mxu0 0
        %979 = vmatpush1.bf16.msra.mxu0 0
        %980 = vmatprep.subr.bf16.mxu0 0
        %981 = vmatpush1.bf16.msra.mxu0 0
        %982 = vmatprep.subr.bf16.mxu0 0
        %983 = vmatpush1.bf16.msra.mxu0 0
        %984 = vmatprep.subr.bf16.mxu0 0
        %985 = vmatpush1.bf16.msra.mxu0 0
        %986 = vmatprep.subr.bf16.mxu0 0
        %987 = vmatpush1.bf16.msra.mxu0 0
        %988 = vmatprep.mubr.bf16.mxu0 0
        %989 = vmatmul.mubr.bf16.gmra.mrb[0].mxu0 %v848
        %v990 = vpop.f32.mrb[0].mxu0
        %v991 = vadd.f32 0.0, %v990
        %v992 = vpop.f32.mrb[0].mxu0
        %v993 = vadd.f32 0.0, %v992
        %v994 = vpop.f32.mrb[0].mxu0
        %v995 = vpop.f32.mrb[0].mxu0
        %996 = vdwg.mxu0
        %997 = vmatprep.subr.bf16.mxu0 %v872
        %998 = vmatpush1.bf16.msra.mxu0 %v869
        %999 = vmatprep.subr.bf16.mxu0 0
        %1000 = vmatpush1.bf16.msra.mxu0 0
        %1001 = vmatprep.subr.bf16.mxu0 0
        %1002 = vmatpush1.bf16.msra.mxu0 0
        %1003 = vmatprep.subr.bf16.mxu0 0
        %1004 = vmatpush1.bf16.msra.mxu0 0
        %1005 = vmatprep.subr.bf16.mxu0 0
        %1006 = vmatpush1.bf16.msra.mxu0 0
        %1007 = vmatprep.subr.bf16.mxu0 0
        %1008 = vmatpush1.bf16.msra.mxu0 0
        %1009 = vmatprep.subr.bf16.mxu0 0
        %1010 = vmatpush1.bf16.msra.mxu0 0
        %1011 = vmatprep.subr.bf16.mxu0 0
        %1012 = vmatpush1.bf16.msra.mxu0 0
        %1013 = vmatprep.subr.bf16.mxu0 0
        %1014 = vmatpush1.bf16.msra.mxu0 0
        %1015 = vmatprep.subr.bf16.mxu0 0
        %1016 = vmatpush1.bf16.msra.mxu0 0
        %1017 = vmatprep.subr.bf16.mxu0 0
        %1018 = vmatpush1.bf16.msra.mxu0 0
        %1019 = vmatprep.subr.bf16.mxu0 0
        %1020 = vmatpush1.bf16.msra.mxu0 0
        %1021 = vmatprep.subr.bf16.mxu0 0
        %1022 = vmatpush1.bf16.msra.mxu0 0
        %1023 = vmatprep.subr.bf16.mxu0 0
        %1024 = vmatpush1.bf16.msra.mxu0 0
        %1025 = vmatprep.subr.bf16.mxu0 0
        %1026 = vmatpush1.bf16.msra.mxu0 0
        %1027 = vmatprep.subr.bf16.mxu0 0
        %1028 = vmatpush1.bf16.msra.mxu0 0
        %1029 = vmatprep.mubr.bf16.mxu0 0
        %1030 = vmatmul.mubr.bf16.gmra.mrb[0].mxu0 %v848
        %v1031 = vpop.f32.mrb[0].mxu0
        %v1032 = vadd.f32 0.0, %v1031
        %v1033 = vpop.f32.mrb[0].mxu0
        %v1034 = vadd.f32 0.0, %v1033
        %v1035 = vpop.f32.mrb[0].mxu0
        %v1036 = vpop.f32.mrb[0].mxu0
        %1037 = vdwg.mxu0
        %v1038 = vadd.f32 %v660, %v909
        %v1039 = vadd.f32 %v662, %v911
        %v1040 = vadd.f32 %v701, %v950
        %v1041 = vadd.f32 %v703, %v952
        %v1042 = vadd.f32 %v742, %v991
        %v1043 = vadd.f32 %v744, %v993
        %v1044 = vadd.f32 %v783, %v1032
        %v1045 = vadd.f32 %v785, %v1034
        %1046 = vrot.lane.b32.xlu0 %v322, 15
        %v1047 = vpop.permute.xlu0 %1046
        %1048 = vrot.lane.b32.xlu0 %v330, 15
        %v1049 = vpop.permute.xlu0 %1048
        %1050 = vrot.lane.b32.xlu0 %v323, 15
        %v1051 = vpop.permute.xlu0 %1050
        %1052 = vrot.lane.b32.xlu0 %v331, 15
        %v1053 = vpop.permute.xlu0 %1052
        %1054 = vrot.lane.b32.xlu0 %v324, 15
        %v1055 = vpop.permute.xlu0 %1054
        %1056 = vrot.lane.b32.xlu0 %v332, 15
        %v1057 = vpop.permute.xlu0 %1056
        %1058 = vrot.lane.b32.xlu0 %v325, 15
        %v1059 = vpop.permute.xlu0 %1058
        %1060 = vrot.lane.b32.xlu0 %v333, 15
        %v1061 = vpop.permute.xlu0 %1060
        %vm1062 = vcmp.lt.s32.totalorder %v363, 15
        %v1063 = vsel %vm1062, %v1059, %v1061
        %v1064 = vsel %vm1062, %v1057, %v1059
        %v1065 = vsel %vm1062, %v1055, %v1057
        %v1066 = vsel %vm1062, %v1053, %v1055
        %v1067 = vsel %vm1062, %v1051, %v1053
        %v1068 = vsel %vm1062, %v1049, %v1051
        %v1069 = vsel %vm1062, %v1047, %v1049
        %v1070 = vsel %vm1062, %v1061, %v1047
        %s1071 = scalar_lea.vmem [#allocation5], 64
        %v1072 = vld [vmem:[%s1071] sm:$0xff]
        %v1073 = vld [vmem:[%s1071 + $0x8] sm:$0xff]
        %v1074 = vld [vmem:[%s1071 + $0x10] sm:$0xff]
        %v1075 = vld [vmem:[%s1071 + $0x18] sm:$0xff]
        %v1080 = vcombine.high %v1072, %v1072
        %v1081 = vcombine.high %v1073, %v1073
        %v1082 = vcombine.high %v1074, %v1074
        %v1083 = vcombine.high %v1075, %v1075
        %v1088 = vmul.f32 %v1070, %v1072
        %v1089 = vmul.f32 %v1069, %v1080
        %v1090 = vmul.f32 %v1068, %v1073
        %v1091 = vmul.f32 %v1067, %v1081
        %v1092 = vmul.f32 %v1066, %v1074
        %v1093 = vmul.f32 %v1065, %v1082
        %v1094 = vmul.f32 %v1064, %v1075
        %v1095 = vmul.f32 %v1063, %v1083
        %v1096 = vpack.c.bf16 %v1088, %v1088
        %v1097 = vpack.c.bf16 %v1089, %v1089
        %v1098 = vpack.c.bf16 %v1090, %v1090
        %v1099 = vpack.c.bf16 %v1091, %v1091
        %v1100 = vpack.c.bf16 %v1092, %v1092
        %v1101 = vpack.c.bf16 %v1093, %v1093
        %v1102 = vpack.c.bf16 %v1094, %v1094
        %v1103 = vpack.c.bf16 %v1095, %v1095
        %v1105 = vsel %vm405, %v290, 0
        %v1108 = vsel %vm409, %v1096, 0
        %v1111 = vsel %vm409, %v1097, 0
        %v1114 = vsel %vm409, %v1098, 0
        %v1117 = vsel %vm409, %v1099, 0
        %v1120 = vsel %vm409, %v1100, 0
        %v1123 = vsel %vm409, %v1101, 0
        %v1126 = vsel %vm409, %v1102, 0
        %v1129 = vsel %vm409, %v1103, 0
        %1131 = vmatprep.subr.bf16.mxu0 %v1111
        %1132 = vmatpush1.bf16.msra.mxu0 %v1108
        %1133 = vmatprep.subr.bf16.mxu0 0
        %1134 = vmatpush1.bf16.msra.mxu0 0
        %1135 = vmatprep.subr.bf16.mxu0 0
        %1136 = vmatpush1.bf16.msra.mxu0 0
        %1137 = vmatprep.subr.bf16.mxu0 0
        %1138 = vmatpush1.bf16.msra.mxu0 0
        %1139 = vmatprep.subr.bf16.mxu0 0
        %1140 = vmatpush1.bf16.msra.mxu0 0
        %1141 = vmatprep.subr.bf16.mxu0 0
        %1142 = vmatpush1.bf16.msra.mxu0 0
        %1143 = vmatprep.subr.bf16.mxu0 0
        %1144 = vmatpush1.bf16.msra.mxu0 0
        %1145 = vmatprep.subr.bf16.mxu0 0
        %1146 = vmatpush1.bf16.msra.mxu0 0
        %1147 = vmatprep.subr.bf16.mxu0 0
        %1148 = vmatpush1.bf16.msra.mxu0 0
        %1149 = vmatprep.subr.bf16.mxu0 0
        %1150 = vmatpush1.bf16.msra.mxu0 0
        %1151 = vmatprep.subr.bf16.mxu0 0
        %1152 = vmatpush1.bf16.msra.mxu0 0
        %1153 = vmatprep.subr.bf16.mxu0 0
        %1154 = vmatpush1.bf16.msra.mxu0 0
        %1155 = vmatprep.subr.bf16.mxu0 0
        %1156 = vmatpush1.bf16.msra.mxu0 0
        %1157 = vmatprep.subr.bf16.mxu0 0
        %1158 = vmatpush1.bf16.msra.mxu0 0
        %1159 = vmatprep.subr.bf16.mxu0 0
        %1160 = vmatpush1.bf16.msra.mxu0 0
        %1161 = vmatprep.subr.bf16.mxu0 0
        %1162 = vmatpush1.bf16.msra.mxu0 0
        %1163 = vmatprep.mubr.bf16.mxu0 0
        %1164 = vmatmul.mubr.bf16.gmra.mrb[0].mxu0 %v1105
        %v1165 = vpop.f32.mrb[0].mxu0
        %v1166 = vadd.f32 0.0, %v1165
        %v1167 = vpop.f32.mrb[0].mxu0
        %v1168 = vadd.f32 0.0, %v1167
        %v1169 = vpop.f32.mrb[0].mxu0
        %v1170 = vpop.f32.mrb[0].mxu0
        %1171 = vdwg.mxu0
        %1172 = vmatprep.subr.bf16.mxu0 %v1117
        %1173 = vmatpush1.bf16.msra.mxu0 %v1114
        %1174 = vmatprep.subr.bf16.mxu0 0
        %1175 = vmatpush1.bf16.msra.mxu0 0
        %1176 = vmatprep.subr.bf16.mxu0 0
        %1177 = vmatpush1.bf16.msra.mxu0 0
        %1178 = vmatprep.subr.bf16.mxu0 0
        %1179 = vmatpush1.bf16.msra.mxu0 0
        %1180 = vmatprep.subr.bf16.mxu0 0
        %1181 = vmatpush1.bf16.msra.mxu0 0
        %1182 = vmatprep.subr.bf16.mxu0 0
        %1183 = vmatpush1.bf16.msra.mxu0 0
        %1184 = vmatprep.subr.bf16.mxu0 0
        %1185 = vmatpush1.bf16.msra.mxu0 0
        %1186 = vmatprep.subr.bf16.mxu0 0
        %1187 = vmatpush1.bf16.msra.mxu0 0
        %1188 = vmatprep.subr.bf16.mxu0 0
        %1189 = vmatpush1.bf16.msra.mxu0 0
        %1190 = vmatprep.subr.bf16.mxu0 0
        %1191 = vmatpush1.bf16.msra.mxu0 0
        %1192 = vmatprep.subr.bf16.mxu0 0
        %1193 = vmatpush1.bf16.msra.mxu0 0
        %1194 = vmatprep.subr.bf16.mxu0 0
        %1195 = vmatpush1.bf16.msra.mxu0 0
        %1196 = vmatprep.subr.bf16.mxu0 0
        %1197 = vmatpush1.bf16.msra.mxu0 0
        %1198 = vmatprep.subr.bf16.mxu0 0
        %1199 = vmatpush1.bf16.msra.mxu0 0
        %1200 = vmatprep.subr.bf16.mxu0 0
        %1201 = vmatpush1.bf16.msra.mxu0 0
        %1202 = vmatprep.subr.bf16.mxu0 0
        %1203 = vmatpush1.bf16.msra.mxu0 0
        %1204 = vmatprep.mubr.bf16.mxu0 0
        %1205 = vmatmul.mubr.bf16.gmra.mrb[0].mxu0 %v1105
        %v1206 = vpop.f32.mrb[0].mxu0
        %v1207 = vadd.f32 0.0, %v1206
        %v1208 = vpop.f32.mrb[0].mxu0
        %v1209 = vadd.f32 0.0, %v1208
        %v1210 = vpop.f32.mrb[0].mxu0
        %v1211 = vpop.f32.mrb[0].mxu0
        %1212 = vdwg.mxu0
        %1213 = vmatprep.subr.bf16.mxu0 %v1123
        %1214 = vmatpush1.bf16.msra.mxu0 %v1120
        %1215 = vmatprep.subr.bf16.mxu0 0
        %1216 = vmatpush1.bf16.msra.mxu0 0
        %1217 = vmatprep.subr.bf16.mxu0 0
        %1218 = vmatpush1.bf16.msra.mxu0 0
        %1219 = vmatprep.subr.bf16.mxu0 0
        %1220 = vmatpush1.bf16.msra.mxu0 0
        %1221 = vmatprep.subr.bf16.mxu0 0
        %1222 = vmatpush1.bf16.msra.mxu0 0
        %1223 = vmatprep.subr.bf16.mxu0 0
        %1224 = vmatpush1.bf16.msra.mxu0 0
        %1225 = vmatprep.subr.bf16.mxu0 0
        %1226 = vmatpush1.bf16.msra.mxu0 0
        %1227 = vmatprep.subr.bf16.mxu0 0
        %1228 = vmatpush1.bf16.msra.mxu0 0
        %1229 = vmatprep.subr.bf16.mxu0 0
        %1230 = vmatpush1.bf16.msra.mxu0 0
        %1231 = vmatprep.subr.bf16.mxu0 0
        %1232 = vmatpush1.bf16.msra.mxu0 0
        %1233 = vmatprep.subr.bf16.mxu0 0
        %1234 = vmatpush1.bf16.msra.mxu0 0
        %1235 = vmatprep.subr.bf16.mxu0 0
        %1236 = vmatpush1.bf16.msra.mxu0 0
        %1237 = vmatprep.subr.bf16.mxu0 0
        %1238 = vmatpush1.bf16.msra.mxu0 0
        %1239 = vmatprep.subr.bf16.mxu0 0
        %1240 = vmatpush1.bf16.msra.mxu0 0
        %1241 = vmatprep.subr.bf16.mxu0 0
        %1242 = vmatpush1.bf16.msra.mxu0 0
        %1243 = vmatprep.subr.bf16.mxu0 0
        %1244 = vmatpush1.bf16.msra.mxu0 0
        %1245 = vmatprep.mubr.bf16.mxu0 0
        %1246 = vmatmul.mubr.bf16.gmra.mrb[0].mxu0 %v1105
        %v1247 = vpop.f32.mrb[0].mxu0
        %v1248 = vadd.f32 0.0, %v1247
        %v1249 = vpop.f32.mrb[0].mxu0
        %v1250 = vadd.f32 0.0, %v1249
        %v1251 = vpop.f32.mrb[0].mxu0
        %v1252 = vpop.f32.mrb[0].mxu0
        %1253 = vdwg.mxu0
        %1254 = vmatprep.subr.bf16.mxu0 %v1129
        %1255 = vmatpush1.bf16.msra.mxu0 %v1126
        %1256 = vmatprep.subr.bf16.mxu0 0
        %1257 = vmatpush1.bf16.msra.mxu0 0
        %1258 = vmatprep.subr.bf16.mxu0 0
        %1259 = vmatpush1.bf16.msra.mxu0 0
        %1260 = vmatprep.subr.bf16.mxu0 0
        %1261 = vmatpush1.bf16.msra.mxu0 0
        %1262 = vmatprep.subr.bf16.mxu0 0
        %1263 = vmatpush1.bf16.msra.mxu0 0
        %1264 = vmatprep.subr.bf16.mxu0 0
        %1265 = vmatpush1.bf16.msra.mxu0 0
        %1266 = vmatprep.subr.bf16.mxu0 0
        %1267 = vmatpush1.bf16.msra.mxu0 0
        %1268 = vmatprep.subr.bf16.mxu0 0
        %1269 = vmatpush1.bf16.msra.mxu0 0
        %1270 = vmatprep.subr.bf16.mxu0 0
        %1271 = vmatpush1.bf16.msra.mxu0 0
        %1272 = vmatprep.subr.bf16.mxu0 0
        %1273 = vmatpush1.bf16.msra.mxu0 0
        %1274 = vmatprep.subr.bf16.mxu0 0
        %1275 = vmatpush1.bf16.msra.mxu0 0
        %1276 = vmatprep.subr.bf16.mxu0 0
        %1277 = vmatpush1.bf16.msra.mxu0 0
        %1278 = vmatprep.subr.bf16.mxu0 0
        %1279 = vmatpush1.bf16.msra.mxu0 0
        %1280 = vmatprep.subr.bf16.mxu0 0
        %1281 = vmatpush1.bf16.msra.mxu0 0
        %1282 = vmatprep.subr.bf16.mxu0 0
        %1283 = vmatpush1.bf16.msra.mxu0 0
        %1284 = vmatprep.subr.bf16.mxu0 0
        %1285 = vmatpush1.bf16.msra.mxu0 0
        %1286 = vmatprep.mubr.bf16.mxu0 0
        %1287 = vmatmul.mubr.bf16.gmra.mrb[0].mxu0 %v1105
        %v1288 = vpop.f32.mrb[0].mxu0
        %v1289 = vadd.f32 0.0, %v1288
        %v1290 = vpop.f32.mrb[0].mxu0
        %v1291 = vadd.f32 0.0, %v1290
        %v1292 = vpop.f32.mrb[0].mxu0
        %v1293 = vpop.f32.mrb[0].mxu0
        %1294 = vdwg.mxu0
        %v1295 = vadd.f32 %v1038, %v1166
        %v1296 = vadd.f32 %v1039, %v1168
        %v1297 = vadd.f32 %v1040, %v1207
        %v1298 = vadd.f32 %v1041, %v1209
        %v1299 = vadd.f32 %v1042, %v1248
        %v1300 = vadd.f32 %v1043, %v1250
        %v1301 = vadd.f32 %v1044, %v1289
        %v1302 = vadd.f32 %v1045, %v1291
        %1303 = vrot.lane.b32.xlu0 %v322, 1
        %v1304 = vpop.permute.xlu0 %1303
        %1305 = vrot.lane.b32.xlu0 %v330, 1
        %v1306 = vpop.permute.xlu0 %1305
        %1307 = vrot.lane.b32.xlu0 %v323, 1
        %v1308 = vpop.permute.xlu0 %1307
        %1309 = vrot.lane.b32.xlu0 %v331, 1
        %v1310 = vpop.permute.xlu0 %1309
        %1311 = vrot.lane.b32.xlu0 %v324, 1
        %v1312 = vpop.permute.xlu0 %1311
        %1313 = vrot.lane.b32.xlu0 %v332, 1
        %v1314 = vpop.permute.xlu0 %1313
        %1315 = vrot.lane.b32.xlu0 %v325, 1
        %v1316 = vpop.permute.xlu0 %1315
        %1317 = vrot.lane.b32.xlu0 %v333, 1
        %v1318 = vpop.permute.xlu0 %1317
        %vm1319 = vcmp.lt.s32.totalorder %v363, 1
        %v1320 = vsel %vm1319, %v1316, %v1318
        %v1321 = vsel %vm1319, %v1314, %v1316
        %v1322 = vsel %vm1319, %v1312, %v1314
        %v1323 = vsel %vm1319, %v1310, %v1312
        %v1324 = vsel %vm1319, %v1308, %v1310
        %v1325 = vsel %vm1319, %v1306, %v1308
        %v1326 = vsel %vm1319, %v1304, %v1306
        %v1327 = vsel %vm1319, %v1318, %v1304
        %s1328 = scalar_lea.vmem [#allocation5], 96
        %v1329 = vld [vmem:[%s1328] sm:$0xff]
        %v1330 = vld [vmem:[%s1328 + $0x8] sm:$0xff]
        %v1331 = vld [vmem:[%s1328 + $0x10] sm:$0xff]
        %v1332 = vld [vmem:[%s1328 + $0x18] sm:$0xff]
        %v1337 = vcombine.high %v1329, %v1329
        %v1338 = vcombine.high %v1330, %v1330
        %v1339 = vcombine.high %v1331, %v1331
        %v1340 = vcombine.high %v1332, %v1332
        %v1345 = vmul.f32 %v1327, %v1329
        %v1346 = vmul.f32 %v1326, %v1337
        %v1347 = vmul.f32 %v1325, %v1330
        %v1348 = vmul.f32 %v1324, %v1338
        %v1349 = vmul.f32 %v1323, %v1331
        %v1350 = vmul.f32 %v1322, %v1339
        %v1351 = vmul.f32 %v1321, %v1332
        %v1352 = vmul.f32 %v1320, %v1340
        %v1353 = vpack.c.bf16 %v1345, %v1345
        %v1354 = vpack.c.bf16 %v1346, %v1346
        %v1355 = vpack.c.bf16 %v1347, %v1347
        %v1356 = vpack.c.bf16 %v1348, %v1348
        %v1357 = vpack.c.bf16 %v1349, %v1349
        %v1358 = vpack.c.bf16 %v1350, %v1350
        %v1359 = vpack.c.bf16 %v1351, %v1351
        %v1360 = vpack.c.bf16 %v1352, %v1352
        %v1362 = vsel %vm405, %v292, 0
        %v1365 = vsel %vm409, %v1353, 0
        %v1368 = vsel %vm409, %v1354, 0
        %v1371 = vsel %vm409, %v1355, 0
        %v1374 = vsel %vm409, %v1356, 0
        %v1377 = vsel %vm409, %v1357, 0
        %v1380 = vsel %vm409, %v1358, 0
        %v1383 = vsel %vm409, %v1359, 0
        %v1386 = vsel %vm409, %v1360, 0
        %1388 = vmatprep.subr.bf16.mxu0 %v1368
        %1389 = vmatpush1.bf16.msra.mxu0 %v1365
        %1390 = vmatprep.subr.bf16.mxu0 0
        %1391 = vmatpush1.bf16.msra.mxu0 0
        %1392 = vmatprep.subr.bf16.mxu0 0
        %1393 = vmatpush1.bf16.msra.mxu0 0
        %1394 = vmatprep.subr.bf16.mxu0 0
        %1395 = vmatpush1.bf16.msra.mxu0 0
        %1396 = vmatprep.subr.bf16.mxu0 0
        %1397 = vmatpush1.bf16.msra.mxu0 0
        %1398 = vmatprep.subr.bf16.mxu0 0
        %1399 = vmatpush1.bf16.msra.mxu0 0
        %1400 = vmatprep.subr.bf16.mxu0 0
        %1401 = vmatpush1.bf16.msra.mxu0 0
        %1402 = vmatprep.subr.bf16.mxu0 0
        %1403 = vmatpush1.bf16.msra.mxu0 0
        %1404 = vmatprep.subr.bf16.mxu0 0
        %1405 = vmatpush1.bf16.msra.mxu0 0
        %1406 = vmatprep.subr.bf16.mxu0 0
        %1407 = vmatpush1.bf16.msra.mxu0 0
        %1408 = vmatprep.subr.bf16.mxu0 0
        %1409 = vmatpush1.bf16.msra.mxu0 0
        %1410 = vmatprep.subr.bf16.mxu0 0
        %1411 = vmatpush1.bf16.msra.mxu0 0
        %1412 = vmatprep.subr.bf16.mxu0 0
        %1413 = vmatpush1.bf16.msra.mxu0 0
        %1414 = vmatprep.subr.bf16.mxu0 0
        %1415 = vmatpush1.bf16.msra.mxu0 0
        %1416 = vmatprep.subr.bf16.mxu0 0
        %1417 = vmatpush1.bf16.msra.mxu0 0
        %1418 = vmatprep.subr.bf16.mxu0 0
        %1419 = vmatpush1.bf16.msra.mxu0 0
        %1420 = vmatprep.mubr.bf16.mxu0 0
        %1421 = vmatmul.mubr.bf16.gmra.mrb[0].mxu0 %v1362
        %v1422 = vpop.f32.mrb[0].mxu0
        %v1423 = vadd.f32 0.0, %v1422
        %v1424 = vpop.f32.mrb[0].mxu0
        %v1425 = vadd.f32 0.0, %v1424
        %v1426 = vpop.f32.mrb[0].mxu0
        %v1427 = vpop.f32.mrb[0].mxu0
        %1428 = vdwg.mxu0
        %1429 = vmatprep.subr.bf16.mxu0 %v1374
        %1430 = vmatpush1.bf16.msra.mxu0 %v1371
        %1431 = vmatprep.subr.bf16.mxu0 0
        %1432 = vmatpush1.bf16.msra.mxu0 0
        %1433 = vmatprep.subr.bf16.mxu0 0
        %1434 = vmatpush1.bf16.msra.mxu0 0
        %1435 = vmatprep.subr.bf16.mxu0 0
        %1436 = vmatpush1.bf16.msra.mxu0 0
        %1437 = vmatprep.subr.bf16.mxu0 0
        %1438 = vmatpush1.bf16.msra.mxu0 0
        %1439 = vmatprep.subr.bf16.mxu0 0
        %1440 = vmatpush1.bf16.msra.mxu0 0
        %1441 = vmatprep.subr.bf16.mxu0 0
        %1442 = vmatpush1.bf16.msra.mxu0 0
        %1443 = vmatprep.subr.bf16.mxu0 0
        %1444 = vmatpush1.bf16.msra.mxu0 0
        %1445 = vmatprep.subr.bf16.mxu0 0
        %1446 = vmatpush1.bf16.msra.mxu0 0
        %1447 = vmatprep.subr.bf16.mxu0 0
        %1448 = vmatpush1.bf16.msra.mxu0 0
        %1449 = vmatprep.subr.bf16.mxu0 0
        %1450 = vmatpush1.bf16.msra.mxu0 0
        %1451 = vmatprep.subr.bf16.mxu0 0
        %1452 = vmatpush1.bf16.msra.mxu0 0
        %1453 = vmatprep.subr.bf16.mxu0 0
        %1454 = vmatpush1.bf16.msra.mxu0 0
        %1455 = vmatprep.subr.bf16.mxu0 0
        %1456 = vmatpush1.bf16.msra.mxu0 0
        %1457 = vmatprep.subr.bf16.mxu0 0
        %1458 = vmatpush1.bf16.msra.mxu0 0
        %1459 = vmatprep.subr.bf16.mxu0 0
        %1460 = vmatpush1.bf16.msra.mxu0 0
        %1461 = vmatprep.mubr.bf16.mxu0 0
        %1462 = vmatmul.mubr.bf16.gmra.mrb[0].mxu0 %v1362
        %v1463 = vpop.f32.mrb[0].mxu0
        %v1464 = vadd.f32 0.0, %v1463
        %v1465 = vpop.f32.mrb[0].mxu0
        %v1466 = vadd.f32 0.0, %v1465
        %v1467 = vpop.f32.mrb[0].mxu0
        %v1468 = vpop.f32.mrb[0].mxu0
        %1469 = vdwg.mxu0
        %1470 = vmatprep.subr.bf16.mxu0 %v1380
        %1471 = vmatpush1.bf16.msra.mxu0 %v1377
        %1472 = vmatprep.subr.bf16.mxu0 0
        %1473 = vmatpush1.bf16.msra.mxu0 0
        %1474 = vmatprep.subr.bf16.mxu0 0
        %1475 = vmatpush1.bf16.msra.mxu0 0
        %1476 = vmatprep.subr.bf16.mxu0 0
        %1477 = vmatpush1.bf16.msra.mxu0 0
        %1478 = vmatprep.subr.bf16.mxu0 0
        %1479 = vmatpush1.bf16.msra.mxu0 0
        %1480 = vmatprep.subr.bf16.mxu0 0
        %1481 = vmatpush1.bf16.msra.mxu0 0
        %1482 = vmatprep.subr.bf16.mxu0 0
        %1483 = vmatpush1.bf16.msra.mxu0 0
        %1484 = vmatprep.subr.bf16.mxu0 0
        %1485 = vmatpush1.bf16.msra.mxu0 0
        %1486 = vmatprep.subr.bf16.mxu0 0
        %1487 = vmatpush1.bf16.msra.mxu0 0
        %1488 = vmatprep.subr.bf16.mxu0 0
        %1489 = vmatpush1.bf16.msra.mxu0 0
        %1490 = vmatprep.subr.bf16.mxu0 0
        %1491 = vmatpush1.bf16.msra.mxu0 0
        %1492 = vmatprep.subr.bf16.mxu0 0
        %1493 = vmatpush1.bf16.msra.mxu0 0
        %1494 = vmatprep.subr.bf16.mxu0 0
        %1495 = vmatpush1.bf16.msra.mxu0 0
        %1496 = vmatprep.subr.bf16.mxu0 0
        %1497 = vmatpush1.bf16.msra.mxu0 0
        %1498 = vmatprep.subr.bf16.mxu0 0
        %1499 = vmatpush1.bf16.msra.mxu0 0
        %1500 = vmatprep.subr.bf16.mxu0 0
        %1501 = vmatpush1.bf16.msra.mxu0 0
        %1502 = vmatprep.mubr.bf16.mxu0 0
        %1503 = vmatmul.mubr.bf16.gmra.mrb[0].mxu0 %v1362
        %v1504 = vpop.f32.mrb[0].mxu0
        %v1505 = vadd.f32 0.0, %v1504
        %v1506 = vpop.f32.mrb[0].mxu0
        %v1507 = vadd.f32 0.0, %v1506
        %v1508 = vpop.f32.mrb[0].mxu0
        %v1509 = vpop.f32.mrb[0].mxu0
        %1510 = vdwg.mxu0
        %1511 = vmatprep.subr.bf16.mxu0 %v1386
        %1512 = vmatpush1.bf16.msra.mxu0 %v1383
        %1513 = vmatprep.subr.bf16.mxu0 0
        %1514 = vmatpush1.bf16.msra.mxu0 0
        %1515 = vmatprep.subr.bf16.mxu0 0
        %1516 = vmatpush1.bf16.msra.mxu0 0
        %1517 = vmatprep.subr.bf16.mxu0 0
        %1518 = vmatpush1.bf16.msra.mxu0 0
        %1519 = vmatprep.subr.bf16.mxu0 0
        %1520 = vmatpush1.bf16.msra.mxu0 0
        %1521 = vmatprep.subr.bf16.mxu0 0
        %1522 = vmatpush1.bf16.msra.mxu0 0
        %1523 = vmatprep.subr.bf16.mxu0 0
        %1524 = vmatpush1.bf16.msra.mxu0 0
        %1525 = vmatprep.subr.bf16.mxu0 0
        %1526 = vmatpush1.bf16.msra.mxu0 0
        %1527 = vmatprep.subr.bf16.mxu0 0
        %1528 = vmatpush1.bf16.msra.mxu0 0
        %1529 = vmatprep.subr.bf16.mxu0 0
        %1530 = vmatpush1.bf16.msra.mxu0 0
        %1531 = vmatprep.subr.bf16.mxu0 0
        %1532 = vmatpush1.bf16.msra.mxu0 0
        %1533 = vmatprep.subr.bf16.mxu0 0
        %1534 = vmatpush1.bf16.msra.mxu0 0
        %1535 = vmatprep.subr.bf16.mxu0 0
        %1536 = vmatpush1.bf16.msra.mxu0 0
        %1537 = vmatprep.subr.bf16.mxu0 0
        %1538 = vmatpush1.bf16.msra.mxu0 0
        %1539 = vmatprep.subr.bf16.mxu0 0
        %1540 = vmatpush1.bf16.msra.mxu0 0
        %1541 = vmatprep.subr.bf16.mxu0 0
        %1542 = vmatpush1.bf16.msra.mxu0 0
        %1543 = vmatprep.mubr.bf16.mxu0 0
        %1544 = vmatmul.mubr.bf16.gmra.mrb[0].mxu0 %v1362
        %v1545 = vpop.f32.mrb[0].mxu0
        %v1546 = vadd.f32 0.0, %v1545
        %v1547 = vpop.f32.mrb[0].mxu0
        %v1548 = vadd.f32 0.0, %v1547
        %v1549 = vpop.f32.mrb[0].mxu0
        %v1550 = vpop.f32.mrb[0].mxu0
        %1551 = vdwg.mxu0
        %v1552 = vadd.f32 %v1295, %v1423
        %v1553 = vadd.f32 %v1296, %v1425
        %v1554 = vadd.f32 %v1297, %v1464
        %v1555 = vadd.f32 %v1298, %v1466
        %v1556 = vadd.f32 %v1299, %v1505
        %v1557 = vadd.f32 %v1300, %v1507
        %v1558 = vadd.f32 %v1301, %v1546
        %v1559 = vadd.f32 %v1302, %v1548
        %1560 = vrot.lane.b32.xlu0 %v322, 127
        %v1561 = vpop.permute.xlu0 %1560
        %1562 = vrot.lane.b32.xlu0 %v330, 127
        %v1563 = vpop.permute.xlu0 %1562
        %1564 = vrot.lane.b32.xlu0 %v323, 127
        %v1565 = vpop.permute.xlu0 %1564
        %1566 = vrot.lane.b32.xlu0 %v331, 127
        %v1567 = vpop.permute.xlu0 %1566
        %1568 = vrot.lane.b32.xlu0 %v324, 127
        %v1569 = vpop.permute.xlu0 %1568
        %1570 = vrot.lane.b32.xlu0 %v332, 127
        %v1571 = vpop.permute.xlu0 %1570
        %1572 = vrot.lane.b32.xlu0 %v325, 127
        %v1573 = vpop.permute.xlu0 %1572
        %1574 = vrot.lane.b32.xlu0 %v333, 127
        %v1575 = vpop.permute.xlu0 %1574
        %vm1576 = vcmp.lt.s32.totalorder %v363, 127
        %v1577 = vsel %vm1576, %v1573, %v1575
        %v1578 = vsel %vm1576, %v1571, %v1573
        %v1579 = vsel %vm1576, %v1569, %v1571
        %v1580 = vsel %vm1576, %v1567, %v1569
        %v1581 = vsel %vm1576, %v1565, %v1567
        %v1582 = vsel %vm1576, %v1563, %v1565
        %v1583 = vsel %vm1576, %v1561, %v1563
        %v1584 = vsel %vm1576, %v1575, %v1561
        %s1585 = scalar_lea.vmem [#allocation5], 160
        %v1586 = vld [vmem:[%s1585] sm:$0xff]
        %v1587 = vld [vmem:[%s1585 + $0x8] sm:$0xff]
        %v1588 = vld [vmem:[%s1585 + $0x10] sm:$0xff]
        %v1589 = vld [vmem:[%s1585 + $0x18] sm:$0xff]
        %v1594 = vcombine.high %v1586, %v1586
        %v1595 = vcombine.high %v1587, %v1587
        %v1596 = vcombine.high %v1588, %v1588
        %v1597 = vcombine.high %v1589, %v1589
        %v1602 = vmul.f32 %v1583, %v1586
        %v1603 = vmul.f32 %v1582, %v1594
        %v1604 = vmul.f32 %v1581, %v1587
        %v1605 = vmul.f32 %v1580, %v1595
        %v1606 = vmul.f32 %v1579, %v1588
        %v1607 = vmul.f32 %v1578, %v1596
        %v1608 = vmul.f32 %v1577, %v1589
        %v1609 = vmul.f32 %v1584, %v1597
        %v1610 = vpack.c.bf16 %v1602, %v1602
        %v1611 = vpack.c.bf16 %v1603, %v1603
        %v1612 = vpack.c.bf16 %v1604, %v1604
        %v1613 = vpack.c.bf16 %v1605, %v1605
        %v1614 = vpack.c.bf16 %v1606, %v1606
        %v1615 = vpack.c.bf16 %v1607, %v1607
        %v1616 = vpack.c.bf16 %v1608, %v1608
        %v1617 = vpack.c.bf16 %v1609, %v1609
        %v1619 = vsel %vm405, %v296, 0
        %v1622 = vsel %vm409, %v1610, 0
        %v1625 = vsel %vm409, %v1611, 0
        %v1628 = vsel %vm409, %v1612, 0
        %v1631 = vsel %vm409, %v1613, 0
        %v1634 = vsel %vm409, %v1614, 0
        %v1637 = vsel %vm409, %v1615, 0
        %v1640 = vsel %vm409, %v1616, 0
        %v1643 = vsel %vm409, %v1617, 0
        %1645 = vmatprep.subr.bf16.mxu0 %v1625
        %1646 = vmatpush1.bf16.msra.mxu0 %v1622
        %1647 = vmatprep.subr.bf16.mxu0 0
        %1648 = vmatpush1.bf16.msra.mxu0 0
        %1649 = vmatprep.subr.bf16.mxu0 0
        %1650 = vmatpush1.bf16.msra.mxu0 0
        %1651 = vmatprep.subr.bf16.mxu0 0
        %1652 = vmatpush1.bf16.msra.mxu0 0
        %1653 = vmatprep.subr.bf16.mxu0 0
        %1654 = vmatpush1.bf16.msra.mxu0 0
        %1655 = vmatprep.subr.bf16.mxu0 0
        %1656 = vmatpush1.bf16.msra.mxu0 0
        %1657 = vmatprep.subr.bf16.mxu0 0
        %1658 = vmatpush1.bf16.msra.mxu0 0
        %1659 = vmatprep.subr.bf16.mxu0 0
        %1660 = vmatpush1.bf16.msra.mxu0 0
        %1661 = vmatprep.subr.bf16.mxu0 0
        %1662 = vmatpush1.bf16.msra.mxu0 0
        %1663 = vmatprep.subr.bf16.mxu0 0
        %1664 = vmatpush1.bf16.msra.mxu0 0
        %1665 = vmatprep.subr.bf16.mxu0 0
        %1666 = vmatpush1.bf16.msra.mxu0 0
        %1667 = vmatprep.subr.bf16.mxu0 0
        %1668 = vmatpush1.bf16.msra.mxu0 0
        %1669 = vmatprep.subr.bf16.mxu0 0
        %1670 = vmatpush1.bf16.msra.mxu0 0
        %1671 = vmatprep.subr.bf16.mxu0 0
        %1672 = vmatpush1.bf16.msra.mxu0 0
        %1673 = vmatprep.subr.bf16.mxu0 0
        %1674 = vmatpush1.bf16.msra.mxu0 0
        %1675 = vmatprep.subr.bf16.mxu0 0
        %1676 = vmatpush1.bf16.msra.mxu0 0
        %1677 = vmatprep.mubr.bf16.mxu0 0
        %1678 = vmatmul.mubr.bf16.gmra.mrb[0].mxu0 %v1619
        %v1679 = vpop.f32.mrb[0].mxu0
        %v1680 = vadd.f32 0.0, %v1679
        %v1681 = vpop.f32.mrb[0].mxu0
        %v1682 = vadd.f32 0.0, %v1681
        %v1683 = vpop.f32.mrb[0].mxu0
        %v1684 = vpop.f32.mrb[0].mxu0
        %1685 = vdwg.mxu0
        %1686 = vmatprep.subr.bf16.mxu0 %v1631
        %1687 = vmatpush1.bf16.msra.mxu0 %v1628
        %1688 = vmatprep.subr.bf16.mxu0 0
        %1689 = vmatpush1.bf16.msra.mxu0 0
        %1690 = vmatprep.subr.bf16.mxu0 0
        %1691 = vmatpush1.bf16.msra.mxu0 0
        %1692 = vmatprep.subr.bf16.mxu0 0
        %1693 = vmatpush1.bf16.msra.mxu0 0
        %1694 = vmatprep.subr.bf16.mxu0 0
        %1695 = vmatpush1.bf16.msra.mxu0 0
        %1696 = vmatprep.subr.bf16.mxu0 0
        %1697 = vmatpush1.bf16.msra.mxu0 0
        %1698 = vmatprep.subr.bf16.mxu0 0
        %1699 = vmatpush1.bf16.msra.mxu0 0
        %1700 = vmatprep.subr.bf16.mxu0 0
        %1701 = vmatpush1.bf16.msra.mxu0 0
        %1702 = vmatprep.subr.bf16.mxu0 0
        %1703 = vmatpush1.bf16.msra.mxu0 0
        %1704 = vmatprep.subr.bf16.mxu0 0
        %1705 = vmatpush1.bf16.msra.mxu0 0
        %1706 = vmatprep.subr.bf16.mxu0 0
        %1707 = vmatpush1.bf16.msra.mxu0 0
        %1708 = vmatprep.subr.bf16.mxu0 0
        %1709 = vmatpush1.bf16.msra.mxu0 0
        %1710 = vmatprep.subr.bf16.mxu0 0
        %1711 = vmatpush1.bf16.msra.mxu0 0
        %1712 = vmatprep.subr.bf16.mxu0 0
        %1713 = vmatpush1.bf16.msra.mxu0 0
        %1714 = vmatprep.subr.bf16.mxu0 0
        %1715 = vmatpush1.bf16.msra.mxu0 0
        %1716 = vmatprep.subr.bf16.mxu0 0
        %1717 = vmatpush1.bf16.msra.mxu0 0
        %1718 = vmatprep.mubr.bf16.mxu0 0
        %1719 = vmatmul.mubr.bf16.gmra.mrb[0].mxu0 %v1619
        %v1720 = vpop.f32.mrb[0].mxu0
        %v1721 = vadd.f32 0.0, %v1720
        %v1722 = vpop.f32.mrb[0].mxu0
        %v1723 = vadd.f32 0.0, %v1722
        %v1724 = vpop.f32.mrb[0].mxu0
        %v1725 = vpop.f32.mrb[0].mxu0
        %1726 = vdwg.mxu0
        %1727 = vmatprep.subr.bf16.mxu0 %v1637
        %1728 = vmatpush1.bf16.msra.mxu0 %v1634
        %1729 = vmatprep.subr.bf16.mxu0 0
        %1730 = vmatpush1.bf16.msra.mxu0 0
        %1731 = vmatprep.subr.bf16.mxu0 0
        %1732 = vmatpush1.bf16.msra.mxu0 0
        %1733 = vmatprep.subr.bf16.mxu0 0
        %1734 = vmatpush1.bf16.msra.mxu0 0
        %1735 = vmatprep.subr.bf16.mxu0 0
        %1736 = vmatpush1.bf16.msra.mxu0 0
        %1737 = vmatprep.subr.bf16.mxu0 0
        %1738 = vmatpush1.bf16.msra.mxu0 0
        %1739 = vmatprep.subr.bf16.mxu0 0
        %1740 = vmatpush1.bf16.msra.mxu0 0
        %1741 = vmatprep.subr.bf16.mxu0 0
        %1742 = vmatpush1.bf16.msra.mxu0 0
        %1743 = vmatprep.subr.bf16.mxu0 0
        %1744 = vmatpush1.bf16.msra.mxu0 0
        %1745 = vmatprep.subr.bf16.mxu0 0
        %1746 = vmatpush1.bf16.msra.mxu0 0
        %1747 = vmatprep.subr.bf16.mxu0 0
        %1748 = vmatpush1.bf16.msra.mxu0 0
        %1749 = vmatprep.subr.bf16.mxu0 0
        %1750 = vmatpush1.bf16.msra.mxu0 0
        %1751 = vmatprep.subr.bf16.mxu0 0
        %1752 = vmatpush1.bf16.msra.mxu0 0
        %1753 = vmatprep.subr.bf16.mxu0 0
        %1754 = vmatpush1.bf16.msra.mxu0 0
        %1755 = vmatprep.subr.bf16.mxu0 0
        %1756 = vmatpush1.bf16.msra.mxu0 0
        %1757 = vmatprep.subr.bf16.mxu0 0
        %1758 = vmatpush1.bf16.msra.mxu0 0
        %1759 = vmatprep.mubr.bf16.mxu0 0
        %1760 = vmatmul.mubr.bf16.gmra.mrb[0].mxu0 %v1619
        %v1761 = vpop.f32.mrb[0].mxu0
        %v1762 = vadd.f32 0.0, %v1761
        %v1763 = vpop.f32.mrb[0].mxu0
        %v1764 = vadd.f32 0.0, %v1763
        %v1765 = vpop.f32.mrb[0].mxu0
        %v1766 = vpop.f32.mrb[0].mxu0
        %1767 = vdwg.mxu0
        %1768 = vmatprep.subr.bf16.mxu0 %v1643
        %1769 = vmatpush1.bf16.msra.mxu0 %v1640
        %1770 = vmatprep.subr.bf16.mxu0 0
        %1771 = vmatpush1.bf16.msra.mxu0 0
        %1772 = vmatprep.subr.bf16.mxu0 0
        %1773 = vmatpush1.bf16.msra.mxu0 0
        %1774 = vmatprep.subr.bf16.mxu0 0
        %1775 = vmatpush1.bf16.msra.mxu0 0
        %1776 = vmatprep.subr.bf16.mxu0 0
        %1777 = vmatpush1.bf16.msra.mxu0 0
        %1778 = vmatprep.subr.bf16.mxu0 0
        %1779 = vmatpush1.bf16.msra.mxu0 0
        %1780 = vmatprep.subr.bf16.mxu0 0
        %1781 = vmatpush1.bf16.msra.mxu0 0
        %1782 = vmatprep.subr.bf16.mxu0 0
        %1783 = vmatpush1.bf16.msra.mxu0 0
        %1784 = vmatprep.subr.bf16.mxu0 0
        %1785 = vmatpush1.bf16.msra.mxu0 0
        %1786 = vmatprep.subr.bf16.mxu0 0
        %1787 = vmatpush1.bf16.msra.mxu0 0
        %1788 = vmatprep.subr.bf16.mxu0 0
        %1789 = vmatpush1.bf16.msra.mxu0 0
        %1790 = vmatprep.subr.bf16.mxu0 0
        %1791 = vmatpush1.bf16.msra.mxu0 0
        %1792 = vmatprep.subr.bf16.mxu0 0
        %1793 = vmatpush1.bf16.msra.mxu0 0
        %1794 = vmatprep.subr.bf16.mxu0 0
        %1795 = vmatpush1.bf16.msra.mxu0 0
        %1796 = vmatprep.subr.bf16.mxu0 0
        %1797 = vmatpush1.bf16.msra.mxu0 0
        %1798 = vmatprep.subr.bf16.mxu0 0
        %1799 = vmatpush1.bf16.msra.mxu0 0
        %1800 = vmatprep.mubr.bf16.mxu0 0
        %1801 = vmatmul.mubr.bf16.gmra.mrb[0].mxu0 %v1619
        %v1802 = vpop.f32.mrb[0].mxu0
        %v1803 = vadd.f32 0.0, %v1802
        %v1804 = vpop.f32.mrb[0].mxu0
        %v1805 = vadd.f32 0.0, %v1804
        %v1806 = vpop.f32.mrb[0].mxu0
        %v1807 = vpop.f32.mrb[0].mxu0
        %1808 = vdwg.mxu0
        %v1809 = vadd.f32 %v1552, %v1680
        %v1810 = vadd.f32 %v1553, %v1682
        %v1811 = vadd.f32 %v1554, %v1721
        %v1812 = vadd.f32 %v1555, %v1723
        %v1813 = vadd.f32 %v1556, %v1762
        %v1814 = vadd.f32 %v1557, %v1764
        %v1815 = vadd.f32 %v1558, %v1803
        %v1816 = vadd.f32 %v1559, %v1805
        %1817 = vrot.lane.b32.xlu0 %v322, 113
        %v1818 = vpop.permute.xlu0 %1817
        %1819 = vrot.lane.b32.xlu0 %v330, 113
        %v1820 = vpop.permute.xlu0 %1819
        %1821 = vrot.lane.b32.xlu0 %v323, 113
        %v1822 = vpop.permute.xlu0 %1821
        %1823 = vrot.lane.b32.xlu0 %v331, 113
        %v1824 = vpop.permute.xlu0 %1823
        %1825 = vrot.lane.b32.xlu0 %v324, 113
        %v1826 = vpop.permute.xlu0 %1825
        %1827 = vrot.lane.b32.xlu0 %v332, 113
        %v1828 = vpop.permute.xlu0 %1827
        %1829 = vrot.lane.b32.xlu0 %v325, 113
        %v1830 = vpop.permute.xlu0 %1829
        %1831 = vrot.lane.b32.xlu0 %v333, 113
        %v1832 = vpop.permute.xlu0 %1831
        %vm1833 = vcmp.lt.s32.totalorder %v363, 113
        %v1834 = vsel %vm1833, %v1830, %v1832
        %v1835 = vsel %vm1833, %v1828, %v1830
        %v1836 = vsel %vm1833, %v1826, %v1828
        %v1837 = vsel %vm1833, %v1824, %v1826
        %v1838 = vsel %vm1833, %v1822, %v1824
        %v1839 = vsel %vm1833, %v1820, %v1822
        %v1840 = vsel %vm1833, %v1818, %v1820
        %v1841 = vsel %vm1833, %v1832, %v1818
        %s1842 = scalar_lea.vmem [#allocation5], 192
        %v1843 = vld [vmem:[%s1842] sm:$0xff]
        %v1844 = vld [vmem:[%s1842 + $0x8] sm:$0xff]
        %v1845 = vld [vmem:[%s1842 + $0x10] sm:$0xff]
        %v1846 = vld [vmem:[%s1842 + $0x18] sm:$0xff]
        %v1851 = vcombine.high %v1843, %v1843
        %v1852 = vcombine.high %v1844, %v1844
        %v1853 = vcombine.high %v1845, %v1845
        %v1854 = vcombine.high %v1846, %v1846
        %v1859 = vmul.f32 %v1840, %v1843
        %v1860 = vmul.f32 %v1839, %v1851
        %v1861 = vmul.f32 %v1838, %v1844
        %v1862 = vmul.f32 %v1837, %v1852
        %v1863 = vmul.f32 %v1836, %v1845
        %v1864 = vmul.f32 %v1835, %v1853
        %v1865 = vmul.f32 %v1834, %v1846
        %v1866 = vmul.f32 %v1841, %v1854
        %v1867 = vpack.c.bf16 %v1859, %v1859
        %v1868 = vpack.c.bf16 %v1860, %v1860
        %v1869 = vpack.c.bf16 %v1861, %v1861
        %v1870 = vpack.c.bf16 %v1862, %v1862
        %v1871 = vpack.c.bf16 %v1863, %v1863
        %v1872 = vpack.c.bf16 %v1864, %v1864
        %v1873 = vpack.c.bf16 %v1865, %v1865
        %v1874 = vpack.c.bf16 %v1866, %v1866
        %v1876 = vsel %vm405, %v298, 0
        %v1879 = vsel %vm409, %v1867, 0
        %v1882 = vsel %vm409, %v1868, 0
        %v1885 = vsel %vm409, %v1869, 0
        %v1888 = vsel %vm409, %v1870, 0
        %v1891 = vsel %vm409, %v1871, 0
        %v1894 = vsel %vm409, %v1872, 0
        %v1897 = vsel %vm409, %v1873, 0
        %v1900 = vsel %vm409, %v1874, 0
        %1902 = vmatprep.subr.bf16.mxu0 %v1882
        %1903 = vmatpush1.bf16.msra.mxu0 %v1879
        %1904 = vmatprep.subr.bf16.mxu0 0
        %1905 = vmatpush1.bf16.msra.mxu0 0
        %1906 = vmatprep.subr.bf16.mxu0 0
        %1907 = vmatpush1.bf16.msra.mxu0 0
        %1908 = vmatprep.subr.bf16.mxu0 0
        %1909 = vmatpush1.bf16.msra.mxu0 0
        %1910 = vmatprep.subr.bf16.mxu0 0
        %1911 = vmatpush1.bf16.msra.mxu0 0
        %1912 = vmatprep.subr.bf16.mxu0 0
        %1913 = vmatpush1.bf16.msra.mxu0 0
        %1914 = vmatprep.subr.bf16.mxu0 0
        %1915 = vmatpush1.bf16.msra.mxu0 0
        %1916 = vmatprep.subr.bf16.mxu0 0
        %1917 = vmatpush1.bf16.msra.mxu0 0
        %1918 = vmatprep.subr.bf16.mxu0 0
        %1919 = vmatpush1.bf16.msra.mxu0 0
        %1920 = vmatprep.subr.bf16.mxu0 0
        %1921 = vmatpush1.bf16.msra.mxu0 0
        %1922 = vmatprep.subr.bf16.mxu0 0
        %1923 = vmatpush1.bf16.msra.mxu0 0
        %1924 = vmatprep.subr.bf16.mxu0 0
        %1925 = vmatpush1.bf16.msra.mxu0 0
        %1926 = vmatprep.subr.bf16.mxu0 0
        %1927 = vmatpush1.bf16.msra.mxu0 0
        %1928 = vmatprep.subr.bf16.mxu0 0
        %1929 = vmatpush1.bf16.msra.mxu0 0
        %1930 = vmatprep.subr.bf16.mxu0 0
        %1931 = vmatpush1.bf16.msra.mxu0 0
        %1932 = vmatprep.subr.bf16.mxu0 0
        %1933 = vmatpush1.bf16.msra.mxu0 0
        %1934 = vmatprep.mubr.bf16.mxu0 0
        %1935 = vmatmul.mubr.bf16.gmra.mrb[0].mxu0 %v1876
        %v1936 = vpop.f32.mrb[0].mxu0
        %v1937 = vadd.f32 0.0, %v1936
        %v1938 = vpop.f32.mrb[0].mxu0
        %v1939 = vadd.f32 0.0, %v1938
        %v1940 = vpop.f32.mrb[0].mxu0
        %v1941 = vpop.f32.mrb[0].mxu0
        %1942 = vdwg.mxu0
        %1943 = vmatprep.subr.bf16.mxu0 %v1888
        %1944 = vmatpush1.bf16.msra.mxu0 %v1885
        %1945 = vmatprep.subr.bf16.mxu0 0
        %1946 = vmatpush1.bf16.msra.mxu0 0
        %1947 = vmatprep.subr.bf16.mxu0 0
        %1948 = vmatpush1.bf16.msra.mxu0 0
        %1949 = vmatprep.subr.bf16.mxu0 0
        %1950 = vmatpush1.bf16.msra.mxu0 0
        %1951 = vmatprep.subr.bf16.mxu0 0
        %1952 = vmatpush1.bf16.msra.mxu0 0
        %1953 = vmatprep.subr.bf16.mxu0 0
        %1954 = vmatpush1.bf16.msra.mxu0 0
        %1955 = vmatprep.subr.bf16.mxu0 0
        %1956 = vmatpush1.bf16.msra.mxu0 0
        %1957 = vmatprep.subr.bf16.mxu0 0
        %1958 = vmatpush1.bf16.msra.mxu0 0
        %1959 = vmatprep.subr.bf16.mxu0 0
        %1960 = vmatpush1.bf16.msra.mxu0 0
        %1961 = vmatprep.subr.bf16.mxu0 0
        %1962 = vmatpush1.bf16.msra.mxu0 0
        %1963 = vmatprep.subr.bf16.mxu0 0
        %1964 = vmatpush1.bf16.msra.mxu0 0
        %1965 = vmatprep.subr.bf16.mxu0 0
        %1966 = vmatpush1.bf16.msra.mxu0 0
        %1967 = vmatprep.subr.bf16.mxu0 0
        %1968 = vmatpush1.bf16.msra.mxu0 0
        %1969 = vmatprep.subr.bf16.mxu0 0
        %1970 = vmatpush1.bf16.msra.mxu0 0
        %1971 = vmatprep.subr.bf16.mxu0 0
        %1972 = vmatpush1.bf16.msra.mxu0 0
        %1973 = vmatprep.subr.bf16.mxu0 0
        %1974 = vmatpush1.bf16.msra.mxu0 0
        %1975 = vmatprep.mubr.bf16.mxu0 0
        %1976 = vmatmul.mubr.bf16.gmra.mrb[0].mxu0 %v1876
        %v1977 = vpop.f32.mrb[0].mxu0
        %v1978 = vadd.f32 0.0, %v1977
        %v1979 = vpop.f32.mrb[0].mxu0
        %v1980 = vadd.f32 0.0, %v1979
        %v1981 = vpop.f32.mrb[0].mxu0
        %v1982 = vpop.f32.mrb[0].mxu0
        %1983 = vdwg.mxu0
        %1984 = vmatprep.subr.bf16.mxu0 %v1894
        %1985 = vmatpush1.bf16.msra.mxu0 %v1891
        %1986 = vmatprep.subr.bf16.mxu0 0
        %1987 = vmatpush1.bf16.msra.mxu0 0
        %1988 = vmatprep.subr.bf16.mxu0 0
        %1989 = vmatpush1.bf16.msra.mxu0 0
        %1990 = vmatprep.subr.bf16.mxu0 0
        %1991 = vmatpush1.bf16.msra.mxu0 0
        %1992 = vmatprep.subr.bf16.mxu0 0
        %1993 = vmatpush1.bf16.msra.mxu0 0
        %1994 = vmatprep.subr.bf16.mxu0 0
        %1995 = vmatpush1.bf16.msra.mxu0 0
        %1996 = vmatprep.subr.bf16.mxu0 0
        %1997 = vmatpush1.bf16.msra.mxu0 0
        %1998 = vmatprep.subr.bf16.mxu0 0
        %1999 = vmatpush1.bf16.msra.mxu0 0
        %2000 = vmatprep.subr.bf16.mxu0 0
        %2001 = vmatpush1.bf16.msra.mxu0 0
        %2002 = vmatprep.subr.bf16.mxu0 0
        %2003 = vmatpush1.bf16.msra.mxu0 0
        %2004 = vmatprep.subr.bf16.mxu0 0
        %2005 = vmatpush1.bf16.msra.mxu0 0
        %2006 = vmatprep.subr.bf16.mxu0 0
        %2007 = vmatpush1.bf16.msra.mxu0 0
        %2008 = vmatprep.subr.bf16.mxu0 0
        %2009 = vmatpush1.bf16.msra.mxu0 0
        %2010 = vmatprep.subr.bf16.mxu0 0
        %2011 = vmatpush1.bf16.msra.mxu0 0
        %2012 = vmatprep.subr.bf16.mxu0 0
        %2013 = vmatpush1.bf16.msra.mxu0 0
        %2014 = vmatprep.subr.bf16.mxu0 0
        %2015 = vmatpush1.bf16.msra.mxu0 0
        %2016 = vmatprep.mubr.bf16.mxu0 0
        %2017 = vmatmul.mubr.bf16.gmra.mrb[0].mxu0 %v1876
        %v2018 = vpop.f32.mrb[0].mxu0
        %v2019 = vadd.f32 0.0, %v2018
        %v2020 = vpop.f32.mrb[0].mxu0
        %v2021 = vadd.f32 0.0, %v2020
        %v2022 = vpop.f32.mrb[0].mxu0
        %v2023 = vpop.f32.mrb[0].mxu0
        %2024 = vdwg.mxu0
        %2025 = vmatprep.subr.bf16.mxu0 %v1900
        %2026 = vmatpush1.bf16.msra.mxu0 %v1897
        %2027 = vmatprep.subr.bf16.mxu0 0
        %2028 = vmatpush1.bf16.msra.mxu0 0
        %2029 = vmatprep.subr.bf16.mxu0 0
        %2030 = vmatpush1.bf16.msra.mxu0 0
        %2031 = vmatprep.subr.bf16.mxu0 0
        %2032 = vmatpush1.bf16.msra.mxu0 0
        %2033 = vmatprep.subr.bf16.mxu0 0
        %2034 = vmatpush1.bf16.msra.mxu0 0
        %2035 = vmatprep.subr.bf16.mxu0 0
        %2036 = vmatpush1.bf16.msra.mxu0 0
        %2037 = vmatprep.subr.bf16.mxu0 0
        %2038 = vmatpush1.bf16.msra.mxu0 0
        %2039 = vmatprep.subr.bf16.mxu0 0
        %2040 = vmatpush1.bf16.msra.mxu0 0
        %2041 = vmatprep.subr.bf16.mxu0 0
        %2042 = vmatpush1.bf16.msra.mxu0 0
        %2043 = vmatprep.subr.bf16.mxu0 0
        %2044 = vmatpush1.bf16.msra.mxu0 0
        %2045 = vmatprep.subr.bf16.mxu0 0
        %2046 = vmatpush1.bf16.msra.mxu0 0
        %2047 = vmatprep.subr.bf16.mxu0 0
        %2048 = vmatpush1.bf16.msra.mxu0 0
        %2049 = vmatprep.subr.bf16.mxu0 0
        %2050 = vmatpush1.bf16.msra.mxu0 0
        %2051 = vmatprep.subr.bf16.mxu0 0
        %2052 = vmatpush1.bf16.msra.mxu0 0
        %2053 = vmatprep.subr.bf16.mxu0 0
        %2054 = vmatpush1.bf16.msra.mxu0 0
        %2055 = vmatprep.subr.bf16.mxu0 0
        %2056 = vmatpush1.bf16.msra.mxu0 0
        %2057 = vmatprep.mubr.bf16.mxu0 0
        %2058 = vmatmul.mubr.bf16.gmra.mrb[0].mxu0 %v1876
        %v2059 = vpop.f32.mrb[0].mxu0
        %v2060 = vadd.f32 0.0, %v2059
        %v2061 = vpop.f32.mrb[0].mxu0
        %v2062 = vadd.f32 0.0, %v2061
        %v2063 = vpop.f32.mrb[0].mxu0
        %v2064 = vpop.f32.mrb[0].mxu0
        %2065 = vdwg.mxu0
        %v2066 = vadd.f32 %v1809, %v1937
        %v2067 = vadd.f32 %v1810, %v1939
        %v2068 = vadd.f32 %v1811, %v1978
        %v2069 = vadd.f32 %v1812, %v1980
        %v2070 = vadd.f32 %v1813, %v2019
        %v2071 = vadd.f32 %v1814, %v2021
        %v2072 = vadd.f32 %v1815, %v2060
        %v2073 = vadd.f32 %v1816, %v2062
        %2074 = vrot.lane.b32.xlu0 %v322, 112
        %v2075 = vpop.permute.xlu0 %2074
        %2076 = vrot.lane.b32.xlu0 %v330, 112
        %v2077 = vpop.permute.xlu0 %2076
        %2078 = vrot.lane.b32.xlu0 %v323, 112
        %v2079 = vpop.permute.xlu0 %2078
        %2080 = vrot.lane.b32.xlu0 %v331, 112
        %v2081 = vpop.permute.xlu0 %2080
        %2082 = vrot.lane.b32.xlu0 %v324, 112
        %v2083 = vpop.permute.xlu0 %2082
        %2084 = vrot.lane.b32.xlu0 %v332, 112
        %v2085 = vpop.permute.xlu0 %2084
        %2086 = vrot.lane.b32.xlu0 %v325, 112
        %v2087 = vpop.permute.xlu0 %2086
        %2088 = vrot.lane.b32.xlu0 %v333, 112
        %v2089 = vpop.permute.xlu0 %2088
        %vm2090 = vcmp.lt.s32.totalorder %v363, 112
        %v2091 = vsel %vm2090, %v2087, %v2089
        %v2092 = vsel %vm2090, %v2085, %v2087
        %v2093 = vsel %vm2090, %v2083, %v2085
        %v2094 = vsel %vm2090, %v2081, %v2083
        %v2095 = vsel %vm2090, %v2079, %v2081
        %v2096 = vsel %vm2090, %v2077, %v2079
        %v2097 = vsel %vm2090, %v2075, %v2077
        %v2098 = vsel %vm2090, %v2089, %v2075
        %s2099 = scalar_lea.vmem [#allocation5], 224
        %v2100 = vld [vmem:[%s2099] sm:$0xff]
        %v2101 = vld [vmem:[%s2099 + $0x8] sm:$0xff]
        %v2102 = vld [vmem:[%s2099 + $0x10] sm:$0xff]
        %v2103 = vld [vmem:[%s2099 + $0x18] sm:$0xff]
        %v2108 = vcombine.high %v2100, %v2100
        %v2109 = vcombine.high %v2101, %v2101
        %v2110 = vcombine.high %v2102, %v2102
        %v2111 = vcombine.high %v2103, %v2103
        %v2116 = vmul.f32 %v2097, %v2100
        %v2117 = vmul.f32 %v2096, %v2108
        %v2118 = vmul.f32 %v2095, %v2101
        %v2119 = vmul.f32 %v2094, %v2109
        %v2120 = vmul.f32 %v2093, %v2102
        %v2121 = vmul.f32 %v2092, %v2110
        %v2122 = vmul.f32 %v2091, %v2103
        %v2123 = vmul.f32 %v2098, %v2111
        %v2124 = vpack.c.bf16 %v2116, %v2116
        %v2125 = vpack.c.bf16 %v2117, %v2117
        %v2126 = vpack.c.bf16 %v2118, %v2118
        %v2127 = vpack.c.bf16 %v2119, %v2119
        %v2128 = vpack.c.bf16 %v2120, %v2120
        %v2129 = vpack.c.bf16 %v2121, %v2121
        %v2130 = vpack.c.bf16 %v2122, %v2122
        %v2131 = vpack.c.bf16 %v2123, %v2123
        %v2133 = vsel %vm405, %v300, 0
        %v2136 = vsel %vm409, %v2124, 0
        %v2139 = vsel %vm409, %v2125, 0
        %v2142 = vsel %vm409, %v2126, 0
        %v2145 = vsel %vm409, %v2127, 0
        %v2148 = vsel %vm409, %v2128, 0
        %v2151 = vsel %vm409, %v2129, 0
        %v2154 = vsel %vm409, %v2130, 0
        %v2157 = vsel %vm409, %v2131, 0
        %2159 = vmatprep.subr.bf16.mxu0 %v2139
        %2160 = vmatpush1.bf16.msra.mxu0 %v2136
        %2161 = vmatprep.subr.bf16.mxu0 0
        %2162 = vmatpush1.bf16.msra.mxu0 0
        %2163 = vmatprep.subr.bf16.mxu0 0
        %2164 = vmatpush1.bf16.msra.mxu0 0
        %2165 = vmatprep.subr.bf16.mxu0 0
        %2166 = vmatpush1.bf16.msra.mxu0 0
        %2167 = vmatprep.subr.bf16.mxu0 0
        %2168 = vmatpush1.bf16.msra.mxu0 0
        %2169 = vmatprep.subr.bf16.mxu0 0
        %2170 = vmatpush1.bf16.msra.mxu0 0
        %2171 = vmatprep.subr.bf16.mxu0 0
        %2172 = vmatpush1.bf16.msra.mxu0 0
        %2173 = vmatprep.subr.bf16.mxu0 0
        %2174 = vmatpush1.bf16.msra.mxu0 0
        %2175 = vmatprep.subr.bf16.mxu0 0
        %2176 = vmatpush1.bf16.msra.mxu0 0
        %2177 = vmatprep.subr.bf16.mxu0 0
        %2178 = vmatpush1.bf16.msra.mxu0 0
        %2179 = vmatprep.subr.bf16.mxu0 0
        %2180 = vmatpush1.bf16.msra.mxu0 0
        %2181 = vmatprep.subr.bf16.mxu0 0
        %2182 = vmatpush1.bf16.msra.mxu0 0
        %2183 = vmatprep.subr.bf16.mxu0 0
        %2184 = vmatpush1.bf16.msra.mxu0 0
        %2185 = vmatprep.subr.bf16.mxu0 0
        %2186 = vmatpush1.bf16.msra.mxu0 0
        %2187 = vmatprep.subr.bf16.mxu0 0
        %2188 = vmatpush1.bf16.msra.mxu0 0
        %2189 = vmatprep.subr.bf16.mxu0 0
        %2190 = vmatpush1.bf16.msra.mxu0 0
        %2191 = vmatprep.mubr.bf16.mxu0 0
        %2192 = vmatmul.mubr.bf16.gmra.mrb[0].mxu0 %v2133
        %v2193 = vpop.f32.mrb[0].mxu0
        %v2194 = vadd.f32 0.0, %v2193
        %v2195 = vpop.f32.mrb[0].mxu0
        %v2196 = vadd.f32 0.0, %v2195
        %v2197 = vpop.f32.mrb[0].mxu0
        %v2198 = vpop.f32.mrb[0].mxu0
        %2199 = vdwg.mxu0
        %2200 = vmatprep.subr.bf16.mxu0 %v2145
        %2201 = vmatpush1.bf16.msra.mxu0 %v2142
        %2202 = vmatprep.subr.bf16.mxu0 0
        %2203 = vmatpush1.bf16.msra.mxu0 0
        %2204 = vmatprep.subr.bf16.mxu0 0
        %2205 = vmatpush1.bf16.msra.mxu0 0
        %2206 = vmatprep.subr.bf16.mxu0 0
        %2207 = vmatpush1.bf16.msra.mxu0 0
        %2208 = vmatprep.subr.bf16.mxu0 0
        %2209 = vmatpush1.bf16.msra.mxu0 0
        %2210 = vmatprep.subr.bf16.mxu0 0
        %2211 = vmatpush1.bf16.msra.mxu0 0
        %2212 = vmatprep.subr.bf16.mxu0 0
        %2213 = vmatpush1.bf16.msra.mxu0 0
        %2214 = vmatprep.subr.bf16.mxu0 0
        %2215 = vmatpush1.bf16.msra.mxu0 0
        %2216 = vmatprep.subr.bf16.mxu0 0
        %2217 = vmatpush1.bf16.msra.mxu0 0
        %2218 = vmatprep.subr.bf16.mxu0 0
        %2219 = vmatpush1.bf16.msra.mxu0 0
        %2220 = vmatprep.subr.bf16.mxu0 0
        %2221 = vmatpush1.bf16.msra.mxu0 0
        %2222 = vmatprep.subr.bf16.mxu0 0
        %2223 = vmatpush1.bf16.msra.mxu0 0
        %2224 = vmatprep.subr.bf16.mxu0 0
        %2225 = vmatpush1.bf16.msra.mxu0 0
        %2226 = vmatprep.subr.bf16.mxu0 0
        %2227 = vmatpush1.bf16.msra.mxu0 0
        %2228 = vmatprep.subr.bf16.mxu0 0
        %2229 = vmatpush1.bf16.msra.mxu0 0
        %2230 = vmatprep.subr.bf16.mxu0 0
        %2231 = vmatpush1.bf16.msra.mxu0 0
        %2232 = vmatprep.mubr.bf16.mxu0 0
        %2233 = vmatmul.mubr.bf16.gmra.mrb[0].mxu0 %v2133
        %v2234 = vpop.f32.mrb[0].mxu0
        %v2235 = vadd.f32 0.0, %v2234
        %v2236 = vpop.f32.mrb[0].mxu0
        %v2237 = vadd.f32 0.0, %v2236
        %v2238 = vpop.f32.mrb[0].mxu0
        %v2239 = vpop.f32.mrb[0].mxu0
        %2240 = vdwg.mxu0
        %2241 = vmatprep.subr.bf16.mxu0 %v2151
        %2242 = vmatpush1.bf16.msra.mxu0 %v2148
        %2243 = vmatprep.subr.bf16.mxu0 0
        %2244 = vmatpush1.bf16.msra.mxu0 0
        %2245 = vmatprep.subr.bf16.mxu0 0
        %2246 = vmatpush1.bf16.msra.mxu0 0
        %2247 = vmatprep.subr.bf16.mxu0 0
        %2248 = vmatpush1.bf16.msra.mxu0 0
        %2249 = vmatprep.subr.bf16.mxu0 0
        %2250 = vmatpush1.bf16.msra.mxu0 0
        %2251 = vmatprep.subr.bf16.mxu0 0
        %2252 = vmatpush1.bf16.msra.mxu0 0
        %2253 = vmatprep.subr.bf16.mxu0 0
        %2254 = vmatpush1.bf16.msra.mxu0 0
        %2255 = vmatprep.subr.bf16.mxu0 0
        %2256 = vmatpush1.bf16.msra.mxu0 0
        %2257 = vmatprep.subr.bf16.mxu0 0
        %2258 = vmatpush1.bf16.msra.mxu0 0
        %2259 = vmatprep.subr.bf16.mxu0 0
        %2260 = vmatpush1.bf16.msra.mxu0 0
        %2261 = vmatprep.subr.bf16.mxu0 0
        %2262 = vmatpush1.bf16.msra.mxu0 0
        %2263 = vmatprep.subr.bf16.mxu0 0
        %2264 = vmatpush1.bf16.msra.mxu0 0
        %2265 = vmatprep.subr.bf16.mxu0 0
        %2266 = vmatpush1.bf16.msra.mxu0 0
        %2267 = vmatprep.subr.bf16.mxu0 0
        %2268 = vmatpush1.bf16.msra.mxu0 0
        %2269 = vmatprep.subr.bf16.mxu0 0
        %2270 = vmatpush1.bf16.msra.mxu0 0
        %2271 = vmatprep.subr.bf16.mxu0 0
        %2272 = vmatpush1.bf16.msra.mxu0 0
        %2273 = vmatprep.mubr.bf16.mxu0 0
        %2274 = vmatmul.mubr.bf16.gmra.mrb[0].mxu0 %v2133
        %v2275 = vpop.f32.mrb[0].mxu0
        %v2276 = vadd.f32 0.0, %v2275
        %v2277 = vpop.f32.mrb[0].mxu0
        %v2278 = vadd.f32 0.0, %v2277
        %v2279 = vpop.f32.mrb[0].mxu0
        %v2280 = vpop.f32.mrb[0].mxu0
        %2281 = vdwg.mxu0
        %2282 = vmatprep.subr.bf16.mxu0 %v2157
        %2283 = vmatpush1.bf16.msra.mxu0 %v2154
        %2284 = vmatprep.subr.bf16.mxu0 0
        %2285 = vmatpush1.bf16.msra.mxu0 0
        %2286 = vmatprep.subr.bf16.mxu0 0
        %2287 = vmatpush1.bf16.msra.mxu0 0
        %2288 = vmatprep.subr.bf16.mxu0 0
        %2289 = vmatpush1.bf16.msra.mxu0 0
        %2290 = vmatprep.subr.bf16.mxu0 0
        %2291 = vmatpush1.bf16.msra.mxu0 0
        %2292 = vmatprep.subr.bf16.mxu0 0
        %2293 = vmatpush1.bf16.msra.mxu0 0
        %2294 = vmatprep.subr.bf16.mxu0 0
        %2295 = vmatpush1.bf16.msra.mxu0 0
        %2296 = vmatprep.subr.bf16.mxu0 0
        %2297 = vmatpush1.bf16.msra.mxu0 0
        %2298 = vmatprep.subr.bf16.mxu0 0
        %2299 = vmatpush1.bf16.msra.mxu0 0
        %2300 = vmatprep.subr.bf16.mxu0 0
        %2301 = vmatpush1.bf16.msra.mxu0 0
        %2302 = vmatprep.subr.bf16.mxu0 0
        %2303 = vmatpush1.bf16.msra.mxu0 0
        %2304 = vmatprep.subr.bf16.mxu0 0
        %2305 = vmatpush1.bf16.msra.mxu0 0
        %2306 = vmatprep.subr.bf16.mxu0 0
        %2307 = vmatpush1.bf16.msra.mxu0 0
        %2308 = vmatprep.subr.bf16.mxu0 0
        %2309 = vmatpush1.bf16.msra.mxu0 0
        %2310 = vmatprep.subr.bf16.mxu0 0
        %2311 = vmatpush1.bf16.msra.mxu0 0
        %2312 = vmatprep.subr.bf16.mxu0 0
        %2313 = vmatpush1.bf16.msra.mxu0 0
        %2314 = vmatprep.mubr.bf16.mxu0 0
        %2315 = vmatmul.mubr.bf16.gmra.mrb[0].mxu0 %v2133
        %v2316 = vpop.f32.mrb[0].mxu0
        %v2317 = vadd.f32 0.0, %v2316
        %v2318 = vpop.f32.mrb[0].mxu0
        %v2319 = vadd.f32 0.0, %v2318
        %v2320 = vpop.f32.mrb[0].mxu0
        %v2321 = vpop.f32.mrb[0].mxu0
        %2322 = vdwg.mxu0
        %v2323 = vadd.f32 %v2066, %v2194
        %v2324 = vadd.f32 %v2067, %v2196
        %v2325 = vadd.f32 %v2068, %v2235
        %v2326 = vadd.f32 %v2069, %v2237
        %v2327 = vadd.f32 %v2070, %v2276
        %v2328 = vadd.f32 %v2071, %v2278
        %v2329 = vadd.f32 %v2072, %v2317
        %v2330 = vadd.f32 %v2073, %v2319
        %2331 = vrot.lane.b32.xlu0 %v322, 111
        %v2332 = vpop.permute.xlu0 %2331
        %2333 = vrot.lane.b32.xlu0 %v330, 111
        %v2334 = vpop.permute.xlu0 %2333
        %2335 = vrot.lane.b32.xlu0 %v323, 111
        %v2336 = vpop.permute.xlu0 %2335
        %2337 = vrot.lane.b32.xlu0 %v331, 111
        %v2338 = vpop.permute.xlu0 %2337
        %2339 = vrot.lane.b32.xlu0 %v324, 111
        %v2340 = vpop.permute.xlu0 %2339
        %2341 = vrot.lane.b32.xlu0 %v332, 111
        %v2342 = vpop.permute.xlu0 %2341
        %2343 = vrot.lane.b32.xlu0 %v325, 111
        %v2344 = vpop.permute.xlu0 %2343
        %2345 = vrot.lane.b32.xlu0 %v333, 111
        %v2346 = vpop.permute.xlu0 %2345
        %vm2347 = vcmp.lt.s32.totalorder %v363, 111
        %v2348 = vsel %vm2347, %v2344, %v2346
        %v2349 = vsel %vm2347, %v2342, %v2344
        %v2350 = vsel %vm2347, %v2340, %v2342
        %v2351 = vsel %vm2347, %v2338, %v2340
        %v2352 = vsel %vm2347, %v2336, %v2338
        %v2353 = vsel %vm2347, %v2334, %v2336
        %v2354 = vsel %vm2347, %v2332, %v2334
        %v2355 = vsel %vm2347, %v2346, %v2332
        %s2356 = scalar_lea.vmem [#allocation5], 256
        %v2357 = vld [vmem:[%s2356] sm:$0xff]
        %v2358 = vld [vmem:[%s2356 + $0x8] sm:$0xff]
        %v2359 = vld [vmem:[%s2356 + $0x10] sm:$0xff]
        %v2360 = vld [vmem:[%s2356 + $0x18] sm:$0xff]
        %v2365 = vcombine.high %v2357, %v2357
        %v2366 = vcombine.high %v2358, %v2358
        %v2367 = vcombine.high %v2359, %v2359
        %v2368 = vcombine.high %v2360, %v2360
        %v2373 = vmul.f32 %v2354, %v2357
        %v2374 = vmul.f32 %v2353, %v2365
        %v2375 = vmul.f32 %v2352, %v2358
        %v2376 = vmul.f32 %v2351, %v2366
        %v2377 = vmul.f32 %v2350, %v2359
        %v2378 = vmul.f32 %v2349, %v2367
        %v2379 = vmul.f32 %v2348, %v2360
        %v2380 = vmul.f32 %v2355, %v2368
        %v2381 = vpack.c.bf16 %v2373, %v2373
        %v2382 = vpack.c.bf16 %v2374, %v2374
        %v2383 = vpack.c.bf16 %v2375, %v2375
        %v2384 = vpack.c.bf16 %v2376, %v2376
        %v2385 = vpack.c.bf16 %v2377, %v2377
        %v2386 = vpack.c.bf16 %v2378, %v2378
        %v2387 = vpack.c.bf16 %v2379, %v2379
        %v2388 = vpack.c.bf16 %v2380, %v2380
        %v2390 = vsel %vm405, %v302, 0
        %v2393 = vsel %vm409, %v2381, 0
        %v2396 = vsel %vm409, %v2382, 0
        %v2399 = vsel %vm409, %v2383, 0
        %v2402 = vsel %vm409, %v2384, 0
        %v2405 = vsel %vm409, %v2385, 0
        %v2408 = vsel %vm409, %v2386, 0
        %v2411 = vsel %vm409, %v2387, 0
        %v2414 = vsel %vm409, %v2388, 0
        %2416 = vmatprep.subr.bf16.mxu0 %v2396
        %2417 = vmatpush1.bf16.msra.mxu0 %v2393
        %2418 = vmatprep.subr.bf16.mxu0 0
        %2419 = vmatpush1.bf16.msra.mxu0 0
        %2420 = vmatprep.subr.bf16.mxu0 0
        %2421 = vmatpush1.bf16.msra.mxu0 0
        %2422 = vmatprep.subr.bf16.mxu0 0
        %2423 = vmatpush1.bf16.msra.mxu0 0
        %2424 = vmatprep.subr.bf16.mxu0 0
        %2425 = vmatpush1.bf16.msra.mxu0 0
        %2426 = vmatprep.subr.bf16.mxu0 0
        %2427 = vmatpush1.bf16.msra.mxu0 0
        %2428 = vmatprep.subr.bf16.mxu0 0
        %2429 = vmatpush1.bf16.msra.mxu0 0
        %2430 = vmatprep.subr.bf16.mxu0 0
        %2431 = vmatpush1.bf16.msra.mxu0 0
        %2432 = vmatprep.subr.bf16.mxu0 0
        %2433 = vmatpush1.bf16.msra.mxu0 0
        %2434 = vmatprep.subr.bf16.mxu0 0
        %2435 = vmatpush1.bf16.msra.mxu0 0
        %2436 = vmatprep.subr.bf16.mxu0 0
        %2437 = vmatpush1.bf16.msra.mxu0 0
        %2438 = vmatprep.subr.bf16.mxu0 0
        %2439 = vmatpush1.bf16.msra.mxu0 0
        %2440 = vmatprep.subr.bf16.mxu0 0
        %2441 = vmatpush1.bf16.msra.mxu0 0
        %2442 = vmatprep.subr.bf16.mxu0 0
        %2443 = vmatpush1.bf16.msra.mxu0 0
        %2444 = vmatprep.subr.bf16.mxu0 0
        %2445 = vmatpush1.bf16.msra.mxu0 0
        %2446 = vmatprep.subr.bf16.mxu0 0
        %2447 = vmatpush1.bf16.msra.mxu0 0
        %2448 = vmatprep.mubr.bf16.mxu0 0
        %2449 = vmatmul.mubr.bf16.gmra.mrb[0].mxu0 %v2390
        %v2450 = vpop.f32.mrb[0].mxu0
        %v2451 = vadd.f32 0.0, %v2450
        %v2452 = vpop.f32.mrb[0].mxu0
        %v2453 = vadd.f32 0.0, %v2452
        %v2454 = vpop.f32.mrb[0].mxu0
        %v2455 = vpop.f32.mrb[0].mxu0
        %2456 = vdwg.mxu0
        %2457 = vmatprep.subr.bf16.mxu0 %v2402
        %2458 = vmatpush1.bf16.msra.mxu0 %v2399
        %2459 = vmatprep.subr.bf16.mxu0 0
        %2460 = vmatpush1.bf16.msra.mxu0 0
        %2461 = vmatprep.subr.bf16.mxu0 0
        %2462 = vmatpush1.bf16.msra.mxu0 0
        %2463 = vmatprep.subr.bf16.mxu0 0
        %2464 = vmatpush1.bf16.msra.mxu0 0
        %2465 = vmatprep.subr.bf16.mxu0 0
        %2466 = vmatpush1.bf16.msra.mxu0 0
        %2467 = vmatprep.subr.bf16.mxu0 0
        %2468 = vmatpush1.bf16.msra.mxu0 0
        %2469 = vmatprep.subr.bf16.mxu0 0
        %2470 = vmatpush1.bf16.msra.mxu0 0
        %2471 = vmatprep.subr.bf16.mxu0 0
        %2472 = vmatpush1.bf16.msra.mxu0 0
        %2473 = vmatprep.subr.bf16.mxu0 0
        %2474 = vmatpush1.bf16.msra.mxu0 0
        %2475 = vmatprep.subr.bf16.mxu0 0
        %2476 = vmatpush1.bf16.msra.mxu0 0
        %2477 = vmatprep.subr.bf16.mxu0 0
        %2478 = vmatpush1.bf16.msra.mxu0 0
        %2479 = vmatprep.subr.bf16.mxu0 0
        %2480 = vmatpush1.bf16.msra.mxu0 0
        %2481 = vmatprep.subr.bf16.mxu0 0
        %2482 = vmatpush1.bf16.msra.mxu0 0
        %2483 = vmatprep.subr.bf16.mxu0 0
        %2484 = vmatpush1.bf16.msra.mxu0 0
        %2485 = vmatprep.subr.bf16.mxu0 0
        %2486 = vmatpush1.bf16.msra.mxu0 0
        %2487 = vmatprep.subr.bf16.mxu0 0
        %2488 = vmatpush1.bf16.msra.mxu0 0
        %2489 = vmatprep.mubr.bf16.mxu0 0
        %2490 = vmatmul.mubr.bf16.gmra.mrb[0].mxu0 %v2390
        %v2491 = vpop.f32.mrb[0].mxu0
        %v2492 = vadd.f32 0.0, %v2491
        %v2493 = vpop.f32.mrb[0].mxu0
        %v2494 = vadd.f32 0.0, %v2493
        %v2495 = vpop.f32.mrb[0].mxu0
        %v2496 = vpop.f32.mrb[0].mxu0
        %2497 = vdwg.mxu0
        %2498 = vmatprep.subr.bf16.mxu0 %v2408
        %2499 = vmatpush1.bf16.msra.mxu0 %v2405
        %2500 = vmatprep.subr.bf16.mxu0 0
        %2501 = vmatpush1.bf16.msra.mxu0 0
        %2502 = vmatprep.subr.bf16.mxu0 0
        %2503 = vmatpush1.bf16.msra.mxu0 0
        %2504 = vmatprep.subr.bf16.mxu0 0
        %2505 = vmatpush1.bf16.msra.mxu0 0
        %2506 = vmatprep.subr.bf16.mxu0 0
        %2507 = vmatpush1.bf16.msra.mxu0 0
        %2508 = vmatprep.subr.bf16.mxu0 0
        %2509 = vmatpush1.bf16.msra.mxu0 0
        %2510 = vmatprep.subr.bf16.mxu0 0
        %2511 = vmatpush1.bf16.msra.mxu0 0
        %2512 = vmatprep.subr.bf16.mxu0 0
        %2513 = vmatpush1.bf16.msra.mxu0 0
        %2514 = vmatprep.subr.bf16.mxu0 0
        %2515 = vmatpush1.bf16.msra.mxu0 0
        %2516 = vmatprep.subr.bf16.mxu0 0
        %2517 = vmatpush1.bf16.msra.mxu0 0
        %2518 = vmatprep.subr.bf16.mxu0 0
        %2519 = vmatpush1.bf16.msra.mxu0 0
        %2520 = vmatprep.subr.bf16.mxu0 0
        %2521 = vmatpush1.bf16.msra.mxu0 0
        %2522 = vmatprep.subr.bf16.mxu0 0
        %2523 = vmatpush1.bf16.msra.mxu0 0
        %2524 = vmatprep.subr.bf16.mxu0 0
        %2525 = vmatpush1.bf16.msra.mxu0 0
        %2526 = vmatprep.subr.bf16.mxu0 0
        %2527 = vmatpush1.bf16.msra.mxu0 0
        %2528 = vmatprep.subr.bf16.mxu0 0
        %2529 = vmatpush1.bf16.msra.mxu0 0
        %2530 = vmatprep.mubr.bf16.mxu0 0
        %2531 = vmatmul.mubr.bf16.gmra.mrb[0].mxu0 %v2390
        %v2532 = vpop.f32.mrb[0].mxu0
        %v2533 = vadd.f32 0.0, %v2532
        %v2534 = vpop.f32.mrb[0].mxu0
        %v2535 = vadd.f32 0.0, %v2534
        %v2536 = vpop.f32.mrb[0].mxu0
        %v2537 = vpop.f32.mrb[0].mxu0
        %2538 = vdwg.mxu0
        %2539 = vmatprep.subr.bf16.mxu0 %v2414
        %2540 = vmatpush1.bf16.msra.mxu0 %v2411
        %2541 = vmatprep.subr.bf16.mxu0 0
        %2542 = vmatpush1.bf16.msra.mxu0 0
        %2543 = vmatprep.subr.bf16.mxu0 0
        %2544 = vmatpush1.bf16.msra.mxu0 0
        %2545 = vmatprep.subr.bf16.mxu0 0
        %2546 = vmatpush1.bf16.msra.mxu0 0
        %2547 = vmatprep.subr.bf16.mxu0 0
        %2548 = vmatpush1.bf16.msra.mxu0 0
        %2549 = vmatprep.subr.bf16.mxu0 0
        %2550 = vmatpush1.bf16.msra.mxu0 0
        %2551 = vmatprep.subr.bf16.mxu0 0
        %2552 = vmatpush1.bf16.msra.mxu0 0
        %2553 = vmatprep.subr.bf16.mxu0 0
        %2554 = vmatpush1.bf16.msra.mxu0 0
        %2555 = vmatprep.subr.bf16.mxu0 0
        %2556 = vmatpush1.bf16.msra.mxu0 0
        %2557 = vmatprep.subr.bf16.mxu0 0
        %2558 = vmatpush1.bf16.msra.mxu0 0
        %2559 = vmatprep.subr.bf16.mxu0 0
        %2560 = vmatpush1.bf16.msra.mxu0 0
        %2561 = vmatprep.subr.bf16.mxu0 0
        %2562 = vmatpush1.bf16.msra.mxu0 0
        %2563 = vmatprep.subr.bf16.mxu0 0
        %2564 = vmatpush1.bf16.msra.mxu0 0
        %2565 = vmatprep.subr.bf16.mxu0 0
        %2566 = vmatpush1.bf16.msra.mxu0 0
        %2567 = vmatprep.subr.bf16.mxu0 0
        %2568 = vmatpush1.bf16.msra.mxu0 0
        %2569 = vmatprep.subr.bf16.mxu0 0
        %2570 = vmatpush1.bf16.msra.mxu0 0
        %2571 = vmatprep.mubr.bf16.mxu0 0
        %2572 = vmatmul.mubr.bf16.gmra.mrb[0].mxu0 %v2390
        %v2573 = vpop.f32.mrb[0].mxu0
        %v2574 = vadd.f32 0.0, %v2573
        %v2575 = vpop.f32.mrb[0].mxu0
        %v2576 = vadd.f32 0.0, %v2575
        %v2577 = vpop.f32.mrb[0].mxu0
        %v2578 = vpop.f32.mrb[0].mxu0
        %2579 = vdwg.mxu0
        %v2580 = vadd.f32 %v2323, %v2451
        %v2581 = vadd.f32 %v2324, %v2453
        %v2582 = vadd.f32 %v2325, %v2492
        %v2583 = vadd.f32 %v2326, %v2494
        %v2584 = vadd.f32 %v2327, %v2533
        %v2585 = vadd.f32 %v2328, %v2535
        %v2586 = vadd.f32 %v2329, %v2574
        %v2587 = vadd.f32 %v2330, %v2576
        %2589 = vset.pattern.permute.xlu0 0
        %2590 = vperm.xlu0 %2589, %v320
        %v2591 = vpop.permute.xlu0 %2590
        %v2593 = vadd.f32 %v2580, %v2591
        %v2594 = vadd.f32 %v2581, %v2591
        %v2595 = vadd.f32 %v2582, %v2591
        %v2596 = vadd.f32 %v2583, %v2591
        %v2597 = vadd.f32 %v2584, %v2591
        %v2598 = vadd.f32 %v2585, %v2591
        %v2599 = vadd.f32 %v2586, %v2591
        %v2600 = vadd.f32 %v2587, %v2591
        %vm2601 = vcmp.gt.f32.partialorder %v2593, 0.0
        %vm2602 = vcmp.gt.f32.partialorder %v2594, 0.0
        %vm2603 = vcmp.gt.f32.partialorder %v2595, 0.0
        %vm2604 = vcmp.gt.f32.partialorder %v2596, 0.0
        %vm2605 = vcmp.gt.f32.partialorder %v2597, 0.0
        %vm2606 = vcmp.gt.f32.partialorder %v2598, 0.0
        %vm2607 = vcmp.gt.f32.partialorder %v2599, 0.0
        %vm2608 = vcmp.gt.f32.partialorder %v2600, 0.0
        %v2609 = vmul.f32 %v2593, 1.442695
        %v2610 = vpow.pop %v2609
        %v2611 = vmul.f32 %v2594, 1.442695
        %v2612 = vpow.pop %v2611
        %v2613 = vmul.f32 %v2595, 1.442695
        %v2614 = vpow.pop %v2613
        %v2615 = vmul.f32 %v2596, 1.442695
        %v2616 = vpow.pop %v2615
        %v2617 = vmul.f32 %v2597, 1.442695
        %v2618 = vpow.pop %v2617
        %v2619 = vmul.f32 %v2598, 1.442695
        %v2620 = vpow.pop %v2619
        %v2621 = vmul.f32 %v2599, 1.442695
        %v2622 = vpow.pop %v2621
        %v2623 = vmul.f32 %v2600, 1.442695
        %v2624 = vpow.pop %v2623
        %v2625 = vsub.f32 %v2610, 1.0
        %v2626 = vsub.f32 %v2612, 1.0
        %v2627 = vsub.f32 %v2614, 1.0
        %v2628 = vsub.f32 %v2616, 1.0
        %v2629 = vsub.f32 %v2618, 1.0
        %v2630 = vsub.f32 %v2620, 1.0
        %v2631 = vsub.f32 %v2622, 1.0
        %v2632 = vsub.f32 %v2624, 1.0
        %v2633 = vsel %vm2601, %v2593, %v2625
        %v2634 = vsel %vm2602, %v2594, %v2626
        %v2635 = vsel %vm2603, %v2595, %v2627
        %v2636 = vsel %vm2604, %v2596, %v2628
        %v2637 = vsel %vm2605, %v2597, %v2629
        %v2638 = vsel %vm2606, %v2598, %v2630
        %v2639 = vsel %vm2607, %v2599, %v2631
        %v2640 = vsel %vm2608, %v2600, %v2632
        %v2641 = vpack.c.bf16 %v2633, %v2633
        %v2642 = vpack.c.bf16 %v2634, %v2634
        %v2643 = vpack.c.bf16 %v2635, %v2635
        %v2644 = vpack.c.bf16 %v2636, %v2636
        %v2645 = vpack.c.bf16 %v2637, %v2637
        %v2646 = vpack.c.bf16 %v2638, %v2638
        %v2647 = vpack.c.bf16 %v2639, %v2639
        %v2648 = vpack.c.bf16 %v2640, %v2640
        %2649 = vrot.lane.b32.xlu0 %v2633, 17
        %v2650 = vpop.permute.xlu0 %2649
        %2651 = vrot.lane.b32.xlu0 %v2634, 17
        %v2652 = vpop.permute.xlu0 %2651
        %2653 = vrot.lane.b32.xlu0 %v2635, 17
        %v2654 = vpop.permute.xlu0 %2653
        %2655 = vrot.lane.b32.xlu0 %v2636, 17
        %v2656 = vpop.permute.xlu0 %2655
        %2657 = vrot.lane.b32.xlu0 %v2637, 17
        %v2658 = vpop.permute.xlu0 %2657
        %2659 = vrot.lane.b32.xlu0 %v2638, 17
        %v2660 = vpop.permute.xlu0 %2659
        %2661 = vrot.lane.b32.xlu0 %v2639, 17
        %v2662 = vpop.permute.xlu0 %2661
        %2663 = vrot.lane.b32.xlu0 %v2640, 17
        %v2664 = vpop.permute.xlu0 %2663
        %v2665 = vsel %vm364, %v2662, %v2664
        %v2666 = vsel %vm364, %v2660, %v2662
        %v2667 = vsel %vm364, %v2658, %v2660
        %v2668 = vsel %vm364, %v2656, %v2658
        %v2669 = vsel %vm364, %v2654, %v2656
        %v2670 = vsel %vm364, %v2652, %v2654
        %v2671 = vsel %vm364, %v2650, %v2652
        %v2672 = vsel %vm364, %v2664, %v2650
        %v2673 = vmul.f32 %v2672, %v373
        %v2674 = vmul.f32 %v2671, %v381
        %v2675 = vmul.f32 %v2670, %v374
        %v2676 = vmul.f32 %v2669, %v382
        %v2677 = vmul.f32 %v2668, %v375
        %v2678 = vmul.f32 %v2667, %v383
        %v2679 = vmul.f32 %v2666, %v376
        %v2680 = vmul.f32 %v2665, %v384
        %v2681 = vpack.c.bf16 %v2673, %v2673
        %v2682 = vpack.c.bf16 %v2674, %v2674
        %v2683 = vpack.c.bf16 %v2675, %v2675
        %v2684 = vpack.c.bf16 %v2676, %v2676
        %v2685 = vpack.c.bf16 %v2677, %v2677
        %v2686 = vpack.c.bf16 %v2678, %v2678
        %v2687 = vpack.c.bf16 %v2679, %v2679
        %v2688 = vpack.c.bf16 %v2680, %v2680
        %v2690 = vsel %vm405, %v303, 0
        %v2693 = vsel %vm409, %v2681, 0
        %v2696 = vsel %vm409, %v2682, 0
        %v2699 = vsel %vm409, %v2683, 0
        %v2702 = vsel %vm409, %v2684, 0
        %v2705 = vsel %vm409, %v2685, 0
        %v2708 = vsel %vm409, %v2686, 0
        %v2711 = vsel %vm409, %v2687, 0
        %v2714 = vsel %vm409, %v2688, 0
        %2716 = vmatprep.subr.bf16.mxu0 %v2696
        %2717 = vmatpush1.bf16.msra.mxu0 %v2693
        %2718 = vmatprep.subr.bf16.mxu0 0
        %2719 = vmatpush1.bf16.msra.mxu0 0
        %2720 = vmatprep.subr.bf16.mxu0 0
        %2721 = vmatpush1.bf16.msra.mxu0 0
        %2722 = vmatprep.subr.bf16.mxu0 0
        %2723 = vmatpush1.bf16.msra.mxu0 0
        %2724 = vmatprep.subr.bf16.mxu0 0
        %2725 = vmatpush1.bf16.msra.mxu0 0
        %2726 = vmatprep.subr.bf16.mxu0 0
        %2727 = vmatpush1.bf16.msra.mxu0 0
        %2728 = vmatprep.subr.bf16.mxu0 0
        %2729 = vmatpush1.bf16.msra.mxu0 0
        %2730 = vmatprep.subr.bf16.mxu0 0
        %2731 = vmatpush1.bf16.msra.mxu0 0
        %2732 = vmatprep.subr.bf16.mxu0 0
        %2733 = vmatpush1.bf16.msra.mxu0 0
        %2734 = vmatprep.subr.bf16.mxu0 0
        %2735 = vmatpush1.bf16.msra.mxu0 0
        %2736 = vmatprep.subr.bf16.mxu0 0
        %2737 = vmatpush1.bf16.msra.mxu0 0
        %2738 = vmatprep.subr.bf16.mxu0 0
        %2739 = vmatpush1.bf16.msra.mxu0 0
        %2740 = vmatprep.subr.bf16.mxu0 0
        %2741 = vmatpush1.bf16.msra.mxu0 0
        %2742 = vmatprep.subr.bf16.mxu0 0
        %2743 = vmatpush1.bf16.msra.mxu0 0
        %2744 = vmatprep.subr.bf16.mxu0 0
        %2745 = vmatpush1.bf16.msra.mxu0 0
        %2746 = vmatprep.subr.bf16.mxu0 0
        %2747 = vmatpush1.bf16.msra.mxu0 0
        %2748 = vmatprep.mubr.bf16.mxu0 0
        %2749 = vmatmul.mubr.bf16.gmra.mrb[0].mxu0 %v2690
        %v2750 = vpop.f32.mrb[0].mxu0
        %v2751 = vadd.f32 0.0, %v2750
        %v2752 = vpop.f32.mrb[0].mxu0
        %v2753 = vadd.f32 0.0, %v2752
        %v2754 = vpop.f32.mrb[0].mxu0
        %v2755 = vpop.f32.mrb[0].mxu0
        %2756 = vdwg.mxu0
        %2757 = vmatprep.subr.bf16.mxu0 %v2702
        %2758 = vmatpush1.bf16.msra.mxu0 %v2699
        %2759 = vmatprep.subr.bf16.mxu0 0
        %2760 = vmatpush1.bf16.msra.mxu0 0
        %2761 = vmatprep.subr.bf16.mxu0 0
        %2762 = vmatpush1.bf16.msra.mxu0 0
        %2763 = vmatprep.subr.bf16.mxu0 0
        %2764 = vmatpush1.bf16.msra.mxu0 0
        %2765 = vmatprep.subr.bf16.mxu0 0
        %2766 = vmatpush1.bf16.msra.mxu0 0
        %2767 = vmatprep.subr.bf16.mxu0 0
        %2768 = vmatpush1.bf16.msra.mxu0 0
        %2769 = vmatprep.subr.bf16.mxu0 0
        %2770 = vmatpush1.bf16.msra.mxu0 0
        %2771 = vmatprep.subr.bf16.mxu0 0
        %2772 = vmatpush1.bf16.msra.mxu0 0
        %2773 = vmatprep.subr.bf16.mxu0 0
        %2774 = vmatpush1.bf16.msra.mxu0 0
        %2775 = vmatprep.subr.bf16.mxu0 0
        %2776 = vmatpush1.bf16.msra.mxu0 0
        %2777 = vmatprep.subr.bf16.mxu0 0
        %2778 = vmatpush1.bf16.msra.mxu0 0
        %2779 = vmatprep.subr.bf16.mxu0 0
        %2780 = vmatpush1.bf16.msra.mxu0 0
        %2781 = vmatprep.subr.bf16.mxu0 0
        %2782 = vmatpush1.bf16.msra.mxu0 0
        %2783 = vmatprep.subr.bf16.mxu0 0
        %2784 = vmatpush1.bf16.msra.mxu0 0
        %2785 = vmatprep.subr.bf16.mxu0 0
        %2786 = vmatpush1.bf16.msra.mxu0 0
        %2787 = vmatprep.subr.bf16.mxu0 0
        %2788 = vmatpush1.bf16.msra.mxu0 0
        %2789 = vmatprep.mubr.bf16.mxu0 0
        %2790 = vmatmul.mubr.bf16.gmra.mrb[0].mxu0 %v2690
        %v2791 = vpop.f32.mrb[0].mxu0
        %v2792 = vadd.f32 0.0, %v2791
        %v2793 = vpop.f32.mrb[0].mxu0
        %v2794 = vadd.f32 0.0, %v2793
        %v2795 = vpop.f32.mrb[0].mxu0
        %v2796 = vpop.f32.mrb[0].mxu0
        %2797 = vdwg.mxu0
        %2798 = vmatprep.subr.bf16.mxu0 %v2708
        %2799 = vmatpush1.bf16.msra.mxu0 %v2705
        %2800 = vmatprep.subr.bf16.mxu0 0
        %2801 = vmatpush1.bf16.msra.mxu0 0
        %2802 = vmatprep.subr.bf16.mxu0 0
        %2803 = vmatpush1.bf16.msra.mxu0 0
        %2804 = vmatprep.subr.bf16.mxu0 0
        %2805 = vmatpush1.bf16.msra.mxu0 0
        %2806 = vmatprep.subr.bf16.mxu0 0
        %2807 = vmatpush1.bf16.msra.mxu0 0
        %2808 = vmatprep.subr.bf16.mxu0 0
        %2809 = vmatpush1.bf16.msra.mxu0 0
        %2810 = vmatprep.subr.bf16.mxu0 0
        %2811 = vmatpush1.bf16.msra.mxu0 0
        %2812 = vmatprep.subr.bf16.mxu0 0
        %2813 = vmatpush1.bf16.msra.mxu0 0
        %2814 = vmatprep.subr.bf16.mxu0 0
        %2815 = vmatpush1.bf16.msra.mxu0 0
        %2816 = vmatprep.subr.bf16.mxu0 0
        %2817 = vmatpush1.bf16.msra.mxu0 0
        %2818 = vmatprep.subr.bf16.mxu0 0
        %2819 = vmatpush1.bf16.msra.mxu0 0
        %2820 = vmatprep.subr.bf16.mxu0 0
        %2821 = vmatpush1.bf16.msra.mxu0 0
        %2822 = vmatprep.subr.bf16.mxu0 0
        %2823 = vmatpush1.bf16.msra.mxu0 0
        %2824 = vmatprep.subr.bf16.mxu0 0
        %2825 = vmatpush1.bf16.msra.mxu0 0
        %2826 = vmatprep.subr.bf16.mxu0 0
        %2827 = vmatpush1.bf16.msra.mxu0 0
        %2828 = vmatprep.subr.bf16.mxu0 0
        %2829 = vmatpush1.bf16.msra.mxu0 0
        %2830 = vmatprep.mubr.bf16.mxu0 0
        %2831 = vmatmul.mubr.bf16.gmra.mrb[0].mxu0 %v2690
        %v2832 = vpop.f32.mrb[0].mxu0
        %v2833 = vadd.f32 0.0, %v2832
        %v2834 = vpop.f32.mrb[0].mxu0
        %v2835 = vadd.f32 0.0, %v2834
        %v2836 = vpop.f32.mrb[0].mxu0
        %v2837 = vpop.f32.mrb[0].mxu0
        %2838 = vdwg.mxu0
        %2839 = vmatprep.subr.bf16.mxu0 %v2714
        %2840 = vmatpush1.bf16.msra.mxu0 %v2711
        %2841 = vmatprep.subr.bf16.mxu0 0
        %2842 = vmatpush1.bf16.msra.mxu0 0
        %2843 = vmatprep.subr.bf16.mxu0 0
        %2844 = vmatpush1.bf16.msra.mxu0 0
        %2845 = vmatprep.subr.bf16.mxu0 0
        %2846 = vmatpush1.bf16.msra.mxu0 0
        %2847 = vmatprep.subr.bf16.mxu0 0
        %2848 = vmatpush1.bf16.msra.mxu0 0
        %2849 = vmatprep.subr.bf16.mxu0 0
        %2850 = vmatpush1.bf16.msra.mxu0 0
        %2851 = vmatprep.subr.bf16.mxu0 0
        %2852 = vmatpush1.bf16.msra.mxu0 0
        %2853 = vmatprep.subr.bf16.mxu0 0
        %2854 = vmatpush1.bf16.msra.mxu0 0
        %2855 = vmatprep.subr.bf16.mxu0 0
        %2856 = vmatpush1.bf16.msra.mxu0 0
        %2857 = vmatprep.subr.bf16.mxu0 0
        %2858 = vmatpush1.bf16.msra.mxu0 0
        %2859 = vmatprep.subr.bf16.mxu0 0
        %2860 = vmatpush1.bf16.msra.mxu0 0
        %2861 = vmatprep.subr.bf16.mxu0 0
        %2862 = vmatpush1.bf16.msra.mxu0 0
        %2863 = vmatprep.subr.bf16.mxu0 0
        %2864 = vmatpush1.bf16.msra.mxu0 0
        %2865 = vmatprep.subr.bf16.mxu0 0
        %2866 = vmatpush1.bf16.msra.mxu0 0
        %2867 = vmatprep.subr.bf16.mxu0 0
        %2868 = vmatpush1.bf16.msra.mxu0 0
        %2869 = vmatprep.subr.bf16.mxu0 0
        %2870 = vmatpush1.bf16.msra.mxu0 0
        %2871 = vmatprep.mubr.bf16.mxu0 0
        %2872 = vmatmul.mubr.bf16.gmra.mrb[0].mxu0 %v2690
        %v2873 = vpop.f32.mrb[0].mxu0
        %v2874 = vadd.f32 0.0, %v2873
        %v2875 = vpop.f32.mrb[0].mxu0
        %v2876 = vadd.f32 0.0, %v2875
        %v2877 = vpop.f32.mrb[0].mxu0
        %v2878 = vpop.f32.mrb[0].mxu0
        %2879 = vdwg.mxu0
        %v2881 = vsel %vm405, %v311, 0
        %v2884 = vsel %vm409, %v2641, 0
        %v2887 = vsel %vm409, %v2642, 0
        %v2890 = vsel %vm409, %v2643, 0
        %v2893 = vsel %vm409, %v2644, 0
        %v2896 = vsel %vm409, %v2645, 0
        %v2899 = vsel %vm409, %v2646, 0
        %v2902 = vsel %vm409, %v2647, 0
        %v2905 = vsel %vm409, %v2648, 0
        %2907 = vmatprep.subr.bf16.mxu0 %v2887
        %2908 = vmatpush1.bf16.msra.mxu0 %v2884
        %2909 = vmatprep.subr.bf16.mxu0 0
        %2910 = vmatpush1.bf16.msra.mxu0 0
        %2911 = vmatprep.subr.bf16.mxu0 0
        %2912 = vmatpush1.bf16.msra.mxu0 0
        %2913 = vmatprep.subr.bf16.mxu0 0
        %2914 = vmatpush1.bf16.msra.mxu0 0
        %2915 = vmatprep.subr.bf16.mxu0 0
        %2916 = vmatpush1.bf16.msra.mxu0 0
        %2917 = vmatprep.subr.bf16.mxu0 0
        %2918 = vmatpush1.bf16.msra.mxu0 0
        %2919 = vmatprep.subr.bf16.mxu0 0
        %2920 = vmatpush1.bf16.msra.mxu0 0
        %2921 = vmatprep.subr.bf16.mxu0 0
        %2922 = vmatpush1.bf16.msra.mxu0 0
        %2923 = vmatprep.subr.bf16.mxu0 0
        %2924 = vmatpush1.bf16.msra.mxu0 0
        %2925 = vmatprep.subr.bf16.mxu0 0
        %2926 = vmatpush1.bf16.msra.mxu0 0
        %2927 = vmatprep.subr.bf16.mxu0 0
        %2928 = vmatpush1.bf16.msra.mxu0 0
        %2929 = vmatprep.subr.bf16.mxu0 0
        %2930 = vmatpush1.bf16.msra.mxu0 0
        %2931 = vmatprep.subr.bf16.mxu0 0
        %2932 = vmatpush1.bf16.msra.mxu0 0
        %2933 = vmatprep.subr.bf16.mxu0 0
        %2934 = vmatpush1.bf16.msra.mxu0 0
        %2935 = vmatprep.subr.bf16.mxu0 0
        %2936 = vmatpush1.bf16.msra.mxu0 0
        %2937 = vmatprep.subr.bf16.mxu0 0
        %2938 = vmatpush1.bf16.msra.mxu0 0
        %2939 = vmatprep.mubr.bf16.mxu0 0
        %2940 = vmatmul.mubr.bf16.gmra.mrb[0].mxu0 %v2881
        %v2941 = vpop.f32.mrb[0].mxu0
        %v2942 = vadd.f32 %v2751, %v2941
        %v2943 = vpop.f32.mrb[0].mxu0
        %v2944 = vadd.f32 %v2753, %v2943
        %v2945 = vpop.f32.mrb[0].mxu0
        %v2946 = vpop.f32.mrb[0].mxu0
        %2947 = vdwg.mxu0
        %2948 = vmatprep.subr.bf16.mxu0 %v2893
        %2949 = vmatpush1.bf16.msra.mxu0 %v2890
        %2950 = vmatprep.subr.bf16.mxu0 0
        %2951 = vmatpush1.bf16.msra.mxu0 0
        %2952 = vmatprep.subr.bf16.mxu0 0
        %2953 = vmatpush1.bf16.msra.mxu0 0
        %2954 = vmatprep.subr.bf16.mxu0 0
        %2955 = vmatpush1.bf16.msra.mxu0 0
        %2956 = vmatprep.subr.bf16.mxu0 0
        %2957 = vmatpush1.bf16.msra.mxu0 0
        %2958 = vmatprep.subr.bf16.mxu0 0
        %2959 = vmatpush1.bf16.msra.mxu0 0
        %2960 = vmatprep.subr.bf16.mxu0 0
        %2961 = vmatpush1.bf16.msra.mxu0 0
        %2962 = vmatprep.subr.bf16.mxu0 0
        %2963 = vmatpush1.bf16.msra.mxu0 0
        %2964 = vmatprep.subr.bf16.mxu0 0
        %2965 = vmatpush1.bf16.msra.mxu0 0
        %2966 = vmatprep.subr.bf16.mxu0 0
        %2967 = vmatpush1.bf16.msra.mxu0 0
        %2968 = vmatprep.subr.bf16.mxu0 0
        %2969 = vmatpush1.bf16.msra.mxu0 0
        %2970 = vmatprep.subr.bf16.mxu0 0
        %2971 = vmatpush1.bf16.msra.mxu0 0
        %2972 = vmatprep.subr.bf16.mxu0 0
        %2973 = vmatpush1.bf16.msra.mxu0 0
        %2974 = vmatprep.subr.bf16.mxu0 0
        %2975 = vmatpush1.bf16.msra.mxu0 0
        %2976 = vmatprep.subr.bf16.mxu0 0
        %2977 = vmatpush1.bf16.msra.mxu0 0
        %2978 = vmatprep.subr.bf16.mxu0 0
        %2979 = vmatpush1.bf16.msra.mxu0 0
        %2980 = vmatprep.mubr.bf16.mxu0 0
        %2981 = vmatmul.mubr.bf16.gmra.mrb[0].mxu0 %v2881
        %v2982 = vpop.f32.mrb[0].mxu0
        %v2983 = vadd.f32 %v2792, %v2982
        %v2984 = vpop.f32.mrb[0].mxu0
        %v2985 = vadd.f32 %v2794, %v2984
        %v2986 = vpop.f32.mrb[0].mxu0
        %v2987 = vpop.f32.mrb[0].mxu0
        %2988 = vdwg.mxu0
        %2989 = vmatprep.subr.bf16.mxu0 %v2899
        %2990 = vmatpush1.bf16.msra.mxu0 %v2896
        %2991 = vmatprep.subr.bf16.mxu0 0
        %2992 = vmatpush1.bf16.msra.mxu0 0
        %2993 = vmatprep.subr.bf16.mxu0 0
        %2994 = vmatpush1.bf16.msra.mxu0 0
        %2995 = vmatprep.subr.bf16.mxu0 0
        %2996 = vmatpush1.bf16.msra.mxu0 0
        %2997 = vmatprep.subr.bf16.mxu0 0
        %2998 = vmatpush1.bf16.msra.mxu0 0
        %2999 = vmatprep.subr.bf16.mxu0 0
        %3000 = vmatpush1.bf16.msra.mxu0 0
        %3001 = vmatprep.subr.bf16.mxu0 0
        %3002 = vmatpush1.bf16.msra.mxu0 0
        %3003 = vmatprep.subr.bf16.mxu0 0
        %3004 = vmatpush1.bf16.msra.mxu0 0
        %3005 = vmatprep.subr.bf16.mxu0 0
        %3006 = vmatpush1.bf16.msra.mxu0 0
        %3007 = vmatprep.subr.bf16.mxu0 0
        %3008 = vmatpush1.bf16.msra.mxu0 0
        %3009 = vmatprep.subr.bf16.mxu0 0
        %3010 = vmatpush1.bf16.msra.mxu0 0
        %3011 = vmatprep.subr.bf16.mxu0 0
        %3012 = vmatpush1.bf16.msra.mxu0 0
        %3013 = vmatprep.subr.bf16.mxu0 0
        %3014 = vmatpush1.bf16.msra.mxu0 0
        %3015 = vmatprep.subr.bf16.mxu0 0
        %3016 = vmatpush1.bf16.msra.mxu0 0
        %3017 = vmatprep.subr.bf16.mxu0 0
        %3018 = vmatpush1.bf16.msra.mxu0 0
        %3019 = vmatprep.subr.bf16.mxu0 0
        %3020 = vmatpush1.bf16.msra.mxu0 0
        %3021 = vmatprep.mubr.bf16.mxu0 0
        %3022 = vmatmul.mubr.bf16.gmra.mrb[0].mxu0 %v2881
        %v3023 = vpop.f32.mrb[0].mxu0
        %v3024 = vadd.f32 %v2833, %v3023
        %v3025 = vpop.f32.mrb[0].mxu0
        %v3026 = vadd.f32 %v2835, %v3025
        %v3027 = vpop.f32.mrb[0].mxu0
        %v3028 = vpop.f32.mrb[0].mxu0
        %3029 = vdwg.mxu0
        %3030 = vmatprep.subr.bf16.mxu0 %v2905
        %3031 = vmatpush1.bf16.msra.mxu0 %v2902
        %3032 = vmatprep.subr.bf16.mxu0 0
        %3033 = vmatpush1.bf16.msra.mxu0 0
        %3034 = vmatprep.subr.bf16.mxu0 0
        %3035 = vmatpush1.bf16.msra.mxu0 0
        %3036 = vmatprep.subr.bf16.mxu0 0
        %3037 = vmatpush1.bf16.msra.mxu0 0
        %3038 = vmatprep.subr.bf16.mxu0 0
        %3039 = vmatpush1.bf16.msra.mxu0 0
        %3040 = vmatprep.subr.bf16.mxu0 0
        %3041 = vmatpush1.bf16.msra.mxu0 0
        %3042 = vmatprep.subr.bf16.mxu0 0
        %3043 = vmatpush1.bf16.msra.mxu0 0
        %3044 = vmatprep.subr.bf16.mxu0 0
        %3045 = vmatpush1.bf16.msra.mxu0 0
        %3046 = vmatprep.subr.bf16.mxu0 0
        %3047 = vmatpush1.bf16.msra.mxu0 0
        %3048 = vmatprep.subr.bf16.mxu0 0
        %3049 = vmatpush1.bf16.msra.mxu0 0
        %3050 = vmatprep.subr.bf16.mxu0 0
        %3051 = vmatpush1.bf16.msra.mxu0 0
        %3052 = vmatprep.subr.bf16.mxu0 0
        %3053 = vmatpush1.bf16.msra.mxu0 0
        %3054 = vmatprep.subr.bf16.mxu0 0
        %3055 = vmatpush1.bf16.msra.mxu0 0
        %3056 = vmatprep.subr.bf16.mxu0 0
        %3057 = vmatpush1.bf16.msra.mxu0 0
        %3058 = vmatprep.subr.bf16.mxu0 0
        %3059 = vmatpush1.bf16.msra.mxu0 0
        %3060 = vmatprep.subr.bf16.mxu0 0
        %3061 = vmatpush1.bf16.msra.mxu0 0
        %3062 = vmatprep.mubr.bf16.mxu0 0
        %3063 = vmatmul.mubr.bf16.gmra.mrb[0].mxu0 %v2881
        %v3064 = vpop.f32.mrb[0].mxu0
        %v3065 = vadd.f32 %v2874, %v3064
        %v3066 = vpop.f32.mrb[0].mxu0
        %v3067 = vadd.f32 %v2876, %v3066
        %v3068 = vpop.f32.mrb[0].mxu0
        %v3069 = vpop.f32.mrb[0].mxu0
        %3070 = vdwg.mxu0
        %3071 = vrot.lane.b32.xlu0 %v2633, 16
        %v3072 = vpop.permute.xlu0 %3071
        %3073 = vrot.lane.b32.xlu0 %v2634, 16
        %v3074 = vpop.permute.xlu0 %3073
        %3075 = vrot.lane.b32.xlu0 %v2635, 16
        %v3076 = vpop.permute.xlu0 %3075
        %3077 = vrot.lane.b32.xlu0 %v2636, 16
        %v3078 = vpop.permute.xlu0 %3077
        %3079 = vrot.lane.b32.xlu0 %v2637, 16
        %v3080 = vpop.permute.xlu0 %3079
        %3081 = vrot.lane.b32.xlu0 %v2638, 16
        %v3082 = vpop.permute.xlu0 %3081
        %3083 = vrot.lane.b32.xlu0 %v2639, 16
        %v3084 = vpop.permute.xlu0 %3083
        %3085 = vrot.lane.b32.xlu0 %v2640, 16
        %v3086 = vpop.permute.xlu0 %3085
        %v3087 = vsel %vm805, %v3084, %v3086
        %v3088 = vsel %vm805, %v3082, %v3084
        %v3089 = vsel %vm805, %v3080, %v3082
        %v3090 = vsel %vm805, %v3078, %v3080
        %v3091 = vsel %vm805, %v3076, %v3078
        %v3092 = vsel %vm805, %v3074, %v3076
        %v3093 = vsel %vm805, %v3072, %v3074
        %v3094 = vsel %vm805, %v3086, %v3072
        %v3095 = vmul.f32 %v3094, %v815
        %v3096 = vmul.f32 %v3093, %v823
        %v3097 = vmul.f32 %v3092, %v816
        %v3098 = vmul.f32 %v3091, %v824
        %v3099 = vmul.f32 %v3090, %v817
        %v3100 = vmul.f32 %v3089, %v825
        %v3101 = vmul.f32 %v3088, %v818
        %v3102 = vmul.f32 %v3087, %v826
        %v3103 = vpack.c.bf16 %v3095, %v3095
        %v3104 = vpack.c.bf16 %v3096, %v3096
        %v3105 = vpack.c.bf16 %v3097, %v3097
        %v3106 = vpack.c.bf16 %v3098, %v3098
        %v3107 = vpack.c.bf16 %v3099, %v3099
        %v3108 = vpack.c.bf16 %v3100, %v3100
        %v3109 = vpack.c.bf16 %v3101, %v3101
        %v3110 = vpack.c.bf16 %v3102, %v3102
        %v3112 = vsel %vm405, %v305, 0
        %v3115 = vsel %vm409, %v3103, 0
        %v3118 = vsel %vm409, %v3104, 0
        %v3121 = vsel %vm409, %v3105, 0
        %v3124 = vsel %vm409, %v3106, 0
        %v3127 = vsel %vm409, %v3107, 0
        %v3130 = vsel %vm409, %v3108, 0
        %v3133 = vsel %vm409, %v3109, 0
        %v3136 = vsel %vm409, %v3110, 0
        %3138 = vmatprep.subr.bf16.mxu0 %v3118
        %3139 = vmatpush1.bf16.msra.mxu0 %v3115
        %3140 = vmatprep.subr.bf16.mxu0 0
        %3141 = vmatpush1.bf16.msra.mxu0 0
        %3142 = vmatprep.subr.bf16.mxu0 0
        %3143 = vmatpush1.bf16.msra.mxu0 0
        %3144 = vmatprep.subr.bf16.mxu0 0
        %3145 = vmatpush1.bf16.msra.mxu0 0
        %3146 = vmatprep.subr.bf16.mxu0 0
        %3147 = vmatpush1.bf16.msra.mxu0 0
        %3148 = vmatprep.subr.bf16.mxu0 0
        %3149 = vmatpush1.bf16.msra.mxu0 0
        %3150 = vmatprep.subr.bf16.mxu0 0
        %3151 = vmatpush1.bf16.msra.mxu0 0
        %3152 = vmatprep.subr.bf16.mxu0 0
        %3153 = vmatpush1.bf16.msra.mxu0 0
        %3154 = vmatprep.subr.bf16.mxu0 0
        %3155 = vmatpush1.bf16.msra.mxu0 0
        %3156 = vmatprep.subr.bf16.mxu0 0
        %3157 = vmatpush1.bf16.msra.mxu0 0
        %3158 = vmatprep.subr.bf16.mxu0 0
        %3159 = vmatpush1.bf16.msra.mxu0 0
        %3160 = vmatprep.subr.bf16.mxu0 0
        %3161 = vmatpush1.bf16.msra.mxu0 0
        %3162 = vmatprep.subr.bf16.mxu0 0
        %3163 = vmatpush1.bf16.msra.mxu0 0
        %3164 = vmatprep.subr.bf16.mxu0 0
        %3165 = vmatpush1.bf16.msra.mxu0 0
        %3166 = vmatprep.subr.bf16.mxu0 0
        %3167 = vmatpush1.bf16.msra.mxu0 0
        %3168 = vmatprep.subr.bf16.mxu0 0
        %3169 = vmatpush1.bf16.msra.mxu0 0
        %3170 = vmatprep.mubr.bf16.mxu0 0
        %3171 = vmatmul.mubr.bf16.gmra.mrb[0].mxu0 %v3112
        %v3172 = vpop.f32.mrb[0].mxu0
        %v3173 = vadd.f32 0.0, %v3172
        %v3174 = vpop.f32.mrb[0].mxu0
        %v3175 = vadd.f32 0.0, %v3174
        %v3176 = vpop.f32.mrb[0].mxu0
        %v3177 = vpop.f32.mrb[0].mxu0
        %3178 = vdwg.mxu0
        %3179 = vmatprep.subr.bf16.mxu0 %v3124
        %3180 = vmatpush1.bf16.msra.mxu0 %v3121
        %3181 = vmatprep.subr.bf16.mxu0 0
        %3182 = vmatpush1.bf16.msra.mxu0 0
        %3183 = vmatprep.subr.bf16.mxu0 0
        %3184 = vmatpush1.bf16.msra.mxu0 0
        %3185 = vmatprep.subr.bf16.mxu0 0
        %3186 = vmatpush1.bf16.msra.mxu0 0
        %3187 = vmatprep.subr.bf16.mxu0 0
        %3188 = vmatpush1.bf16.msra.mxu0 0
        %3189 = vmatprep.subr.bf16.mxu0 0
        %3190 = vmatpush1.bf16.msra.mxu0 0
        %3191 = vmatprep.subr.bf16.mxu0 0
        %3192 = vmatpush1.bf16.msra.mxu0 0
        %3193 = vmatprep.subr.bf16.mxu0 0
        %3194 = vmatpush1.bf16.msra.mxu0 0
        %3195 = vmatprep.subr.bf16.mxu0 0
        %3196 = vmatpush1.bf16.msra.mxu0 0
        %3197 = vmatprep.subr.bf16.mxu0 0
        %3198 = vmatpush1.bf16.msra.mxu0 0
        %3199 = vmatprep.subr.bf16.mxu0 0
        %3200 = vmatpush1.bf16.msra.mxu0 0
        %3201 = vmatprep.subr.bf16.mxu0 0
        %3202 = vmatpush1.bf16.msra.mxu0 0
        %3203 = vmatprep.subr.bf16.mxu0 0
        %3204 = vmatpush1.bf16.msra.mxu0 0
        %3205 = vmatprep.subr.bf16.mxu0 0
        %3206 = vmatpush1.bf16.msra.mxu0 0
        %3207 = vmatprep.subr.bf16.mxu0 0
        %3208 = vmatpush1.bf16.msra.mxu0 0
        %3209 = vmatprep.subr.bf16.mxu0 0
        %3210 = vmatpush1.bf16.msra.mxu0 0
        %3211 = vmatprep.mubr.bf16.mxu0 0
        %3212 = vmatmul.mubr.bf16.gmra.mrb[0].mxu0 %v3112
        %v3213 = vpop.f32.mrb[0].mxu0
        %v3214 = vadd.f32 0.0, %v3213
        %v3215 = vpop.f32.mrb[0].mxu0
        %v3216 = vadd.f32 0.0, %v3215
        %v3217 = vpop.f32.mrb[0].mxu0
        %v3218 = vpop.f32.mrb[0].mxu0
        %3219 = vdwg.mxu0
        %3220 = vmatprep.subr.bf16.mxu0 %v3130
        %3221 = vmatpush1.bf16.msra.mxu0 %v3127
        %3222 = vmatprep.subr.bf16.mxu0 0
        %3223 = vmatpush1.bf16.msra.mxu0 0
        %3224 = vmatprep.subr.bf16.mxu0 0
        %3225 = vmatpush1.bf16.msra.mxu0 0
        %3226 = vmatprep.subr.bf16.mxu0 0
        %3227 = vmatpush1.bf16.msra.mxu0 0
        %3228 = vmatprep.subr.bf16.mxu0 0
        %3229 = vmatpush1.bf16.msra.mxu0 0
        %3230 = vmatprep.subr.bf16.mxu0 0
        %3231 = vmatpush1.bf16.msra.mxu0 0
        %3232 = vmatprep.subr.bf16.mxu0 0
        %3233 = vmatpush1.bf16.msra.mxu0 0
        %3234 = vmatprep.subr.bf16.mxu0 0
        %3235 = vmatpush1.bf16.msra.mxu0 0
        %3236 = vmatprep.subr.bf16.mxu0 0
        %3237 = vmatpush1.bf16.msra.mxu0 0
        %3238 = vmatprep.subr.bf16.mxu0 0
        %3239 = vmatpush1.bf16.msra.mxu0 0
        %3240 = vmatprep.subr.bf16.mxu0 0
        %3241 = vmatpush1.bf16.msra.mxu0 0
        %3242 = vmatprep.subr.bf16.mxu0 0
        %3243 = vmatpush1.bf16.msra.mxu0 0
        %3244 = vmatprep.subr.bf16.mxu0 0
        %3245 = vmatpush1.bf16.msra.mxu0 0
        %3246 = vmatprep.subr.bf16.mxu0 0
        %3247 = vmatpush1.bf16.msra.mxu0 0
        %3248 = vmatprep.subr.bf16.mxu0 0
        %3249 = vmatpush1.bf16.msra.mxu0 0
        %3250 = vmatprep.subr.bf16.mxu0 0
        %3251 = vmatpush1.bf16.msra.mxu0 0
        %3252 = vmatprep.mubr.bf16.mxu0 0
        %3253 = vmatmul.mubr.bf16.gmra.mrb[0].mxu0 %v3112
        %v3254 = vpop.f32.mrb[0].mxu0
        %v3255 = vadd.f32 0.0, %v3254
        %v3256 = vpop.f32.mrb[0].mxu0
        %v3257 = vadd.f32 0.0, %v3256
        %v3258 = vpop.f32.mrb[0].mxu0
        %v3259 = vpop.f32.mrb[0].mxu0
        %3260 = vdwg.mxu0
        %3261 = vmatprep.subr.bf16.mxu0 %v3136
        %3262 = vmatpush1.bf16.msra.mxu0 %v3133
        %3263 = vmatprep.subr.bf16.mxu0 0
        %3264 = vmatpush1.bf16.msra.mxu0 0
        %3265 = vmatprep.subr.bf16.mxu0 0
        %3266 = vmatpush1.bf16.msra.mxu0 0
        %3267 = vmatprep.subr.bf16.mxu0 0
        %3268 = vmatpush1.bf16.msra.mxu0 0
        %3269 = vmatprep.subr.bf16.mxu0 0
        %3270 = vmatpush1.bf16.msra.mxu0 0
        %3271 = vmatprep.subr.bf16.mxu0 0
        %3272 = vmatpush1.bf16.msra.mxu0 0
        %3273 = vmatprep.subr.bf16.mxu0 0
        %3274 = vmatpush1.bf16.msra.mxu0 0
        %3275 = vmatprep.subr.bf16.mxu0 0
        %3276 = vmatpush1.bf16.msra.mxu0 0
        %3277 = vmatprep.subr.bf16.mxu0 0
        %3278 = vmatpush1.bf16.msra.mxu0 0
        %3279 = vmatprep.subr.bf16.mxu0 0
        %3280 = vmatpush1.bf16.msra.mxu0 0
        %3281 = vmatprep.subr.bf16.mxu0 0
        %3282 = vmatpush1.bf16.msra.mxu0 0
        %3283 = vmatprep.subr.bf16.mxu0 0
        %3284 = vmatpush1.bf16.msra.mxu0 0
        %3285 = vmatprep.subr.bf16.mxu0 0
        %3286 = vmatpush1.bf16.msra.mxu0 0
        %3287 = vmatprep.subr.bf16.mxu0 0
        %3288 = vmatpush1.bf16.msra.mxu0 0
        %3289 = vmatprep.subr.bf16.mxu0 0
        %3290 = vmatpush1.bf16.msra.mxu0 0
        %3291 = vmatprep.subr.bf16.mxu0 0
        %3292 = vmatpush1.bf16.msra.mxu0 0
        %3293 = vmatprep.mubr.bf16.mxu0 0
        %3294 = vmatmul.mubr.bf16.gmra.mrb[0].mxu0 %v3112
        %v3295 = vpop.f32.mrb[0].mxu0
        %v3296 = vadd.f32 0.0, %v3295
        %v3297 = vpop.f32.mrb[0].mxu0
        %v3298 = vadd.f32 0.0, %v3297
        %v3299 = vpop.f32.mrb[0].mxu0
        %v3300 = vpop.f32.mrb[0].mxu0
        %3301 = vdwg.mxu0
        %v3302 = vadd.f32 %v2942, %v3173
        %v3303 = vadd.f32 %v2944, %v3175
        %v3304 = vadd.f32 %v2983, %v3214
        %v3305 = vadd.f32 %v2985, %v3216
        %v3306 = vadd.f32 %v3024, %v3255
        %v3307 = vadd.f32 %v3026, %v3257
        %v3308 = vadd.f32 %v3065, %v3296
        %v3309 = vadd.f32 %v3067, %v3298
        %3310 = vrot.lane.b32.xlu0 %v2633, 15
        %v3311 = vpop.permute.xlu0 %3310
        %3312 = vrot.lane.b32.xlu0 %v2634, 15
        %v3313 = vpop.permute.xlu0 %3312
        %3314 = vrot.lane.b32.xlu0 %v2635, 15
        %v3315 = vpop.permute.xlu0 %3314
        %3316 = vrot.lane.b32.xlu0 %v2636, 15
        %v3317 = vpop.permute.xlu0 %3316
        %3318 = vrot.lane.b32.xlu0 %v2637, 15
        %v3319 = vpop.permute.xlu0 %3318
        %3320 = vrot.lane.b32.xlu0 %v2638, 15
        %v3321 = vpop.permute.xlu0 %3320
        %3322 = vrot.lane.b32.xlu0 %v2639, 15
        %v3323 = vpop.permute.xlu0 %3322
        %3324 = vrot.lane.b32.xlu0 %v2640, 15
        %v3325 = vpop.permute.xlu0 %3324
        %v3326 = vsel %vm1062, %v3323, %v3325
        %v3327 = vsel %vm1062, %v3321, %v3323
        %v3328 = vsel %vm1062, %v3319, %v3321
        %v3329 = vsel %vm1062, %v3317, %v3319
        %v3330 = vsel %vm1062, %v3315, %v3317
        %v3331 = vsel %vm1062, %v3313, %v3315
        %v3332 = vsel %vm1062, %v3311, %v3313
        %v3333 = vsel %vm1062, %v3325, %v3311
        %v3334 = vmul.f32 %v3333, %v1072
        %v3335 = vmul.f32 %v3332, %v1080
        %v3336 = vmul.f32 %v3331, %v1073
        %v3337 = vmul.f32 %v3330, %v1081
        %v3338 = vmul.f32 %v3329, %v1074
        %v3339 = vmul.f32 %v3328, %v1082
        %v3340 = vmul.f32 %v3327, %v1075
        %v3341 = vmul.f32 %v3326, %v1083
        %v3342 = vpack.c.bf16 %v3334, %v3334
        %v3343 = vpack.c.bf16 %v3335, %v3335
        %v3344 = vpack.c.bf16 %v3336, %v3336
        %v3345 = vpack.c.bf16 %v3337, %v3337
        %v3346 = vpack.c.bf16 %v3338, %v3338
        %v3347 = vpack.c.bf16 %v3339, %v3339
        %v3348 = vpack.c.bf16 %v3340, %v3340
        %v3349 = vpack.c.bf16 %v3341, %v3341
        %v3351 = vsel %vm405, %v307, 0
        %v3354 = vsel %vm409, %v3342, 0
        %v3357 = vsel %vm409, %v3343, 0
        %v3360 = vsel %vm409, %v3344, 0
        %v3363 = vsel %vm409, %v3345, 0
        %v3366 = vsel %vm409, %v3346, 0
        %v3369 = vsel %vm409, %v3347, 0
        %v3372 = vsel %vm409, %v3348, 0
        %v3375 = vsel %vm409, %v3349, 0
        %3377 = vmatprep.subr.bf16.mxu0 %v3357
        %3378 = vmatpush1.bf16.msra.mxu0 %v3354
        %3379 = vmatprep.subr.bf16.mxu0 0
        %3380 = vmatpush1.bf16.msra.mxu0 0
        %3381 = vmatprep.subr.bf16.mxu0 0
        %3382 = vmatpush1.bf16.msra.mxu0 0
        %3383 = vmatprep.subr.bf16.mxu0 0
        %3384 = vmatpush1.bf16.msra.mxu0 0
        %3385 = vmatprep.subr.bf16.mxu0 0
        %3386 = vmatpush1.bf16.msra.mxu0 0
        %3387 = vmatprep.subr.bf16.mxu0 0
        %3388 = vmatpush1.bf16.msra.mxu0 0
        %3389 = vmatprep.subr.bf16.mxu0 0
        %3390 = vmatpush1.bf16.msra.mxu0 0
        %3391 = vmatprep.subr.bf16.mxu0 0
        %3392 = vmatpush1.bf16.msra.mxu0 0
        %3393 = vmatprep.subr.bf16.mxu0 0
        %3394 = vmatpush1.bf16.msra.mxu0 0
        %3395 = vmatprep.subr.bf16.mxu0 0
        %3396 = vmatpush1.bf16.msra.mxu0 0
        %3397 = vmatprep.subr.bf16.mxu0 0
        %3398 = vmatpush1.bf16.msra.mxu0 0
        %3399 = vmatprep.subr.bf16.mxu0 0
        %3400 = vmatpush1.bf16.msra.mxu0 0
        %3401 = vmatprep.subr.bf16.mxu0 0
        %3402 = vmatpush1.bf16.msra.mxu0 0
        %3403 = vmatprep.subr.bf16.mxu0 0
        %3404 = vmatpush1.bf16.msra.mxu0 0
        %3405 = vmatprep.subr.bf16.mxu0 0
        %3406 = vmatpush1.bf16.msra.mxu0 0
        %3407 = vmatprep.subr.bf16.mxu0 0
        %3408 = vmatpush1.bf16.msra.mxu0 0
        %3409 = vmatprep.mubr.bf16.mxu0 0
        %3410 = vmatmul.mubr.bf16.gmra.mrb[0].mxu0 %v3351
        %v3411 = vpop.f32.mrb[0].mxu0
        %v3412 = vadd.f32 0.0, %v3411
        %v3413 = vpop.f32.mrb[0].mxu0
        %v3414 = vadd.f32 0.0, %v3413
        %v3415 = vpop.f32.mrb[0].mxu0
        %v3416 = vpop.f32.mrb[0].mxu0
        %3417 = vdwg.mxu0
        %3418 = vmatprep.subr.bf16.mxu0 %v3363
        %3419 = vmatpush1.bf16.msra.mxu0 %v3360
        %3420 = vmatprep.subr.bf16.mxu0 0
        %3421 = vmatpush1.bf16.msra.mxu0 0
        %3422 = vmatprep.subr.bf16.mxu0 0
        %3423 = vmatpush1.bf16.msra.mxu0 0
        %3424 = vmatprep.subr.bf16.mxu0 0
        %3425 = vmatpush1.bf16.msra.mxu0 0
        %3426 = vmatprep.subr.bf16.mxu0 0
        %3427 = vmatpush1.bf16.msra.mxu0 0
        %3428 = vmatprep.subr.bf16.mxu0 0
        %3429 = vmatpush1.bf16.msra.mxu0 0
        %3430 = vmatprep.subr.bf16.mxu0 0
        %3431 = vmatpush1.bf16.msra.mxu0 0
        %3432 = vmatprep.subr.bf16.mxu0 0
        %3433 = vmatpush1.bf16.msra.mxu0 0
        %3434 = vmatprep.subr.bf16.mxu0 0
        %3435 = vmatpush1.bf16.msra.mxu0 0
        %3436 = vmatprep.subr.bf16.mxu0 0
        %3437 = vmatpush1.bf16.msra.mxu0 0
        %3438 = vmatprep.subr.bf16.mxu0 0
        %3439 = vmatpush1.bf16.msra.mxu0 0
        %3440 = vmatprep.subr.bf16.mxu0 0
        %3441 = vmatpush1.bf16.msra.mxu0 0
        %3442 = vmatprep.subr.bf16.mxu0 0
        %3443 = vmatpush1.bf16.msra.mxu0 0
        %3444 = vmatprep.subr.bf16.mxu0 0
        %3445 = vmatpush1.bf16.msra.mxu0 0
        %3446 = vmatprep.subr.bf16.mxu0 0
        %3447 = vmatpush1.bf16.msra.mxu0 0
        %3448 = vmatprep.subr.bf16.mxu0 0
        %3449 = vmatpush1.bf16.msra.mxu0 0
        %3450 = vmatprep.mubr.bf16.mxu0 0
        %3451 = vmatmul.mubr.bf16.gmra.mrb[0].mxu0 %v3351
        %v3452 = vpop.f32.mrb[0].mxu0
        %v3453 = vadd.f32 0.0, %v3452
        %v3454 = vpop.f32.mrb[0].mxu0
        %v3455 = vadd.f32 0.0, %v3454
        %v3456 = vpop.f32.mrb[0].mxu0
        %v3457 = vpop.f32.mrb[0].mxu0
        %3458 = vdwg.mxu0
        %3459 = vmatprep.subr.bf16.mxu0 %v3369
        %3460 = vmatpush1.bf16.msra.mxu0 %v3366
        %3461 = vmatprep.subr.bf16.mxu0 0
        %3462 = vmatpush1.bf16.msra.mxu0 0
        %3463 = vmatprep.subr.bf16.mxu0 0
        %3464 = vmatpush1.bf16.msra.mxu0 0
        %3465 = vmatprep.subr.bf16.mxu0 0
        %3466 = vmatpush1.bf16.msra.mxu0 0
        %3467 = vmatprep.subr.bf16.mxu0 0
        %3468 = vmatpush1.bf16.msra.mxu0 0
        %3469 = vmatprep.subr.bf16.mxu0 0
        %3470 = vmatpush1.bf16.msra.mxu0 0
        %3471 = vmatprep.subr.bf16.mxu0 0
        %3472 = vmatpush1.bf16.msra.mxu0 0
        %3473 = vmatprep.subr.bf16.mxu0 0
        %3474 = vmatpush1.bf16.msra.mxu0 0
        %3475 = vmatprep.subr.bf16.mxu0 0
        %3476 = vmatpush1.bf16.msra.mxu0 0
        %3477 = vmatprep.subr.bf16.mxu0 0
        %3478 = vmatpush1.bf16.msra.mxu0 0
        %3479 = vmatprep.subr.bf16.mxu0 0
        %3480 = vmatpush1.bf16.msra.mxu0 0
        %3481 = vmatprep.subr.bf16.mxu0 0
        %3482 = vmatpush1.bf16.msra.mxu0 0
        %3483 = vmatprep.subr.bf16.mxu0 0
        %3484 = vmatpush1.bf16.msra.mxu0 0
        %3485 = vmatprep.subr.bf16.mxu0 0
        %3486 = vmatpush1.bf16.msra.mxu0 0
        %3487 = vmatprep.subr.bf16.mxu0 0
        %3488 = vmatpush1.bf16.msra.mxu0 0
        %3489 = vmatprep.subr.bf16.mxu0 0
        %3490 = vmatpush1.bf16.msra.mxu0 0
        %3491 = vmatprep.mubr.bf16.mxu0 0
        %3492 = vmatmul.mubr.bf16.gmra.mrb[0].mxu0 %v3351
        %v3493 = vpop.f32.mrb[0].mxu0
        %v3494 = vadd.f32 0.0, %v3493
        %v3495 = vpop.f32.mrb[0].mxu0
        %v3496 = vadd.f32 0.0, %v3495
        %v3497 = vpop.f32.mrb[0].mxu0
        %v3498 = vpop.f32.mrb[0].mxu0
        %3499 = vdwg.mxu0
        %3500 = vmatprep.subr.bf16.mxu0 %v3375
        %3501 = vmatpush1.bf16.msra.mxu0 %v3372
        %3502 = vmatprep.subr.bf16.mxu0 0
        %3503 = vmatpush1.bf16.msra.mxu0 0
        %3504 = vmatprep.subr.bf16.mxu0 0
        %3505 = vmatpush1.bf16.msra.mxu0 0
        %3506 = vmatprep.subr.bf16.mxu0 0
        %3507 = vmatpush1.bf16.msra.mxu0 0
        %3508 = vmatprep.subr.bf16.mxu0 0
        %3509 = vmatpush1.bf16.msra.mxu0 0
        %3510 = vmatprep.subr.bf16.mxu0 0
        %3511 = vmatpush1.bf16.msra.mxu0 0
        %3512 = vmatprep.subr.bf16.mxu0 0
        %3513 = vmatpush1.bf16.msra.mxu0 0
        %3514 = vmatprep.subr.bf16.mxu0 0
        %3515 = vmatpush1.bf16.msra.mxu0 0
        %3516 = vmatprep.subr.bf16.mxu0 0
        %3517 = vmatpush1.bf16.msra.mxu0 0
        %3518 = vmatprep.subr.bf16.mxu0 0
        %3519 = vmatpush1.bf16.msra.mxu0 0
        %3520 = vmatprep.subr.bf16.mxu0 0
        %3521 = vmatpush1.bf16.msra.mxu0 0
        %3522 = vmatprep.subr.bf16.mxu0 0
        %3523 = vmatpush1.bf16.msra.mxu0 0
        %3524 = vmatprep.subr.bf16.mxu0 0
        %3525 = vmatpush1.bf16.msra.mxu0 0
        %3526 = vmatprep.subr.bf16.mxu0 0
        %3527 = vmatpush1.bf16.msra.mxu0 0
        %3528 = vmatprep.subr.bf16.mxu0 0
        %3529 = vmatpush1.bf16.msra.mxu0 0
        %3530 = vmatprep.subr.bf16.mxu0 0
        %3531 = vmatpush1.bf16.msra.mxu0 0
        %3532 = vmatprep.mubr.bf16.mxu0 0
        %3533 = vmatmul.mubr.bf16.gmra.mrb[0].mxu0 %v3351
        %v3534 = vpop.f32.mrb[0].mxu0
        %v3535 = vadd.f32 0.0, %v3534
        %v3536 = vpop.f32.mrb[0].mxu0
        %v3537 = vadd.f32 0.0, %v3536
        %v3538 = vpop.f32.mrb[0].mxu0
        %v3539 = vpop.f32.mrb[0].mxu0
        %3540 = vdwg.mxu0
        %v3541 = vadd.f32 %v3302, %v3412
        %v3542 = vadd.f32 %v3303, %v3414
        %v3543 = vadd.f32 %v3304, %v3453
        %v3544 = vadd.f32 %v3305, %v3455
        %v3545 = vadd.f32 %v3306, %v3494
        %v3546 = vadd.f32 %v3307, %v3496
        %v3547 = vadd.f32 %v3308, %v3535
        %v3548 = vadd.f32 %v3309, %v3537
        %3549 = vrot.lane.b32.xlu0 %v2633, 1
        %v3550 = vpop.permute.xlu0 %3549
        %3551 = vrot.lane.b32.xlu0 %v2634, 1
        %v3552 = vpop.permute.xlu0 %3551
        %3553 = vrot.lane.b32.xlu0 %v2635, 1
        %v3554 = vpop.permute.xlu0 %3553
        %3555 = vrot.lane.b32.xlu0 %v2636, 1
        %v3556 = vpop.permute.xlu0 %3555
        %3557 = vrot.lane.b32.xlu0 %v2637, 1
        %v3558 = vpop.permute.xlu0 %3557
        %3559 = vrot.lane.b32.xlu0 %v2638, 1
        %v3560 = vpop.permute.xlu0 %3559
        %3561 = vrot.lane.b32.xlu0 %v2639, 1
        %v3562 = vpop.permute.xlu0 %3561
        %3563 = vrot.lane.b32.xlu0 %v2640, 1
        %v3564 = vpop.permute.xlu0 %3563
        %v3565 = vsel %vm1319, %v3562, %v3564
        %v3566 = vsel %vm1319, %v3560, %v3562
        %v3567 = vsel %vm1319, %v3558, %v3560
        %v3568 = vsel %vm1319, %v3556, %v3558
        %v3569 = vsel %vm1319, %v3554, %v3556
        %v3570 = vsel %vm1319, %v3552, %v3554
        %v3571 = vsel %vm1319, %v3550, %v3552
        %v3572 = vsel %vm1319, %v3564, %v3550
        %v3573 = vmul.f32 %v3572, %v1329
        %v3574 = vmul.f32 %v3571, %v1337
        %v3575 = vmul.f32 %v3570, %v1330
        %v3576 = vmul.f32 %v3569, %v1338
        %v3577 = vmul.f32 %v3568, %v1331
        %v3578 = vmul.f32 %v3567, %v1339
        %v3579 = vmul.f32 %v3566, %v1332
        %v3580 = vmul.f32 %v3565, %v1340
        %v3581 = vpack.c.bf16 %v3573, %v3573
        %v3582 = vpack.c.bf16 %v3574, %v3574
        %v3583 = vpack.c.bf16 %v3575, %v3575
        %v3584 = vpack.c.bf16 %v3576, %v3576
        %v3585 = vpack.c.bf16 %v3577, %v3577
        %v3586 = vpack.c.bf16 %v3578, %v3578
        %v3587 = vpack.c.bf16 %v3579, %v3579
        %v3588 = vpack.c.bf16 %v3580, %v3580
        %v3590 = vsel %vm405, %v309, 0
        %v3593 = vsel %vm409, %v3581, 0
        %v3596 = vsel %vm409, %v3582, 0
        %v3599 = vsel %vm409, %v3583, 0
        %v3602 = vsel %vm409, %v3584, 0
        %v3605 = vsel %vm409, %v3585, 0
        %v3608 = vsel %vm409, %v3586, 0
        %v3611 = vsel %vm409, %v3587, 0
        %v3614 = vsel %vm409, %v3588, 0
        %3616 = vmatprep.subr.bf16.mxu0 %v3596
        %3617 = vmatpush1.bf16.msra.mxu0 %v3593
        %3618 = vmatprep.subr.bf16.mxu0 0
        %3619 = vmatpush1.bf16.msra.mxu0 0
        %3620 = vmatprep.subr.bf16.mxu0 0
        %3621 = vmatpush1.bf16.msra.mxu0 0
        %3622 = vmatprep.subr.bf16.mxu0 0
        %3623 = vmatpush1.bf16.msra.mxu0 0
        %3624 = vmatprep.subr.bf16.mxu0 0
        %3625 = vmatpush1.bf16.msra.mxu0 0
        %3626 = vmatprep.subr.bf16.mxu0 0
        %3627 = vmatpush1.bf16.msra.mxu0 0
        %3628 = vmatprep.subr.bf16.mxu0 0
        %3629 = vmatpush1.bf16.msra.mxu0 0
        %3630 = vmatprep.subr.bf16.mxu0 0
        %3631 = vmatpush1.bf16.msra.mxu0 0
        %3632 = vmatprep.subr.bf16.mxu0 0
        %3633 = vmatpush1.bf16.msra.mxu0 0
        %3634 = vmatprep.subr.bf16.mxu0 0
        %3635 = vmatpush1.bf16.msra.mxu0 0
        %3636 = vmatprep.subr.bf16.mxu0 0
        %3637 = vmatpush1.bf16.msra.mxu0 0
        %3638 = vmatprep.subr.bf16.mxu0 0
        %3639 = vmatpush1.bf16.msra.mxu0 0
        %3640 = vmatprep.subr.bf16.mxu0 0
        %3641 = vmatpush1.bf16.msra.mxu0 0
        %3642 = vmatprep.subr.bf16.mxu0 0
        %3643 = vmatpush1.bf16.msra.mxu0 0
        %3644 = vmatprep.subr.bf16.mxu0 0
        %3645 = vmatpush1.bf16.msra.mxu0 0
        %3646 = vmatprep.subr.bf16.mxu0 0
        %3647 = vmatpush1.bf16.msra.mxu0 0
        %3648 = vmatprep.mubr.bf16.mxu0 0
        %3649 = vmatmul.mubr.bf16.gmra.mrb[0].mxu0 %v3590
        %v3650 = vpop.f32.mrb[0].mxu0
        %v3651 = vadd.f32 0.0, %v3650
        %v3652 = vpop.f32.mrb[0].mxu0
        %v3653 = vadd.f32 0.0, %v3652
        %v3654 = vpop.f32.mrb[0].mxu0
        %v3655 = vpop.f32.mrb[0].mxu0
        %3656 = vdwg.mxu0
        %3657 = vmatprep.subr.bf16.mxu0 %v3602
        %3658 = vmatpush1.bf16.msra.mxu0 %v3599
        %3659 = vmatprep.subr.bf16.mxu0 0
        %3660 = vmatpush1.bf16.msra.mxu0 0
        %3661 = vmatprep.subr.bf16.mxu0 0
        %3662 = vmatpush1.bf16.msra.mxu0 0
        %3663 = vmatprep.subr.bf16.mxu0 0
        %3664 = vmatpush1.bf16.msra.mxu0 0
        %3665 = vmatprep.subr.bf16.mxu0 0
        %3666 = vmatpush1.bf16.msra.mxu0 0
        %3667 = vmatprep.subr.bf16.mxu0 0
        %3668 = vmatpush1.bf16.msra.mxu0 0
        %3669 = vmatprep.subr.bf16.mxu0 0
        %3670 = vmatpush1.bf16.msra.mxu0 0
        %3671 = vmatprep.subr.bf16.mxu0 0
        %3672 = vmatpush1.bf16.msra.mxu0 0
        %3673 = vmatprep.subr.bf16.mxu0 0
        %3674 = vmatpush1.bf16.msra.mxu0 0
        %3675 = vmatprep.subr.bf16.mxu0 0
        %3676 = vmatpush1.bf16.msra.mxu0 0
        %3677 = vmatprep.subr.bf16.mxu0 0
        %3678 = vmatpush1.bf16.msra.mxu0 0
        %3679 = vmatprep.subr.bf16.mxu0 0
        %3680 = vmatpush1.bf16.msra.mxu0 0
        %3681 = vmatprep.subr.bf16.mxu0 0
        %3682 = vmatpush1.bf16.msra.mxu0 0
        %3683 = vmatprep.subr.bf16.mxu0 0
        %3684 = vmatpush1.bf16.msra.mxu0 0
        %3685 = vmatprep.subr.bf16.mxu0 0
        %3686 = vmatpush1.bf16.msra.mxu0 0
        %3687 = vmatprep.subr.bf16.mxu0 0
        %3688 = vmatpush1.bf16.msra.mxu0 0
        %3689 = vmatprep.mubr.bf16.mxu0 0
        %3690 = vmatmul.mubr.bf16.gmra.mrb[0].mxu0 %v3590
        %v3691 = vpop.f32.mrb[0].mxu0
        %v3692 = vadd.f32 0.0, %v3691
        %v3693 = vpop.f32.mrb[0].mxu0
        %v3694 = vadd.f32 0.0, %v3693
        %v3695 = vpop.f32.mrb[0].mxu0
        %v3696 = vpop.f32.mrb[0].mxu0
        %3697 = vdwg.mxu0
        %3698 = vmatprep.subr.bf16.mxu0 %v3608
        %3699 = vmatpush1.bf16.msra.mxu0 %v3605
        %3700 = vmatprep.subr.bf16.mxu0 0
        %3701 = vmatpush1.bf16.msra.mxu0 0
        %3702 = vmatprep.subr.bf16.mxu0 0
        %3703 = vmatpush1.bf16.msra.mxu0 0
        %3704 = vmatprep.subr.bf16.mxu0 0
        %3705 = vmatpush1.bf16.msra.mxu0 0
        %3706 = vmatprep.subr.bf16.mxu0 0
        %3707 = vmatpush1.bf16.msra.mxu0 0
        %3708 = vmatprep.subr.bf16.mxu0 0
        %3709 = vmatpush1.bf16.msra.mxu0 0
        %3710 = vmatprep.subr.bf16.mxu0 0
        %3711 = vmatpush1.bf16.msra.mxu0 0
        %3712 = vmatprep.subr.bf16.mxu0 0
        %3713 = vmatpush1.bf16.msra.mxu0 0
        %3714 = vmatprep.subr.bf16.mxu0 0
        %3715 = vmatpush1.bf16.msra.mxu0 0
        %3716 = vmatprep.subr.bf16.mxu0 0
        %3717 = vmatpush1.bf16.msra.mxu0 0
        %3718 = vmatprep.subr.bf16.mxu0 0
        %3719 = vmatpush1.bf16.msra.mxu0 0
        %3720 = vmatprep.subr.bf16.mxu0 0
        %3721 = vmatpush1.bf16.msra.mxu0 0
        %3722 = vmatprep.subr.bf16.mxu0 0
        %3723 = vmatpush1.bf16.msra.mxu0 0
        %3724 = vmatprep.subr.bf16.mxu0 0
        %3725 = vmatpush1.bf16.msra.mxu0 0
        %3726 = vmatprep.subr.bf16.mxu0 0
        %3727 = vmatpush1.bf16.msra.mxu0 0
        %3728 = vmatprep.subr.bf16.mxu0 0
        %3729 = vmatpush1.bf16.msra.mxu0 0
        %3730 = vmatprep.mubr.bf16.mxu0 0
        %3731 = vmatmul.mubr.bf16.gmra.mrb[0].mxu0 %v3590
        %v3732 = vpop.f32.mrb[0].mxu0
        %v3733 = vadd.f32 0.0, %v3732
        %v3734 = vpop.f32.mrb[0].mxu0
        %v3735 = vadd.f32 0.0, %v3734
        %v3736 = vpop.f32.mrb[0].mxu0
        %v3737 = vpop.f32.mrb[0].mxu0
        %3738 = vdwg.mxu0
        %3739 = vmatprep.subr.bf16.mxu0 %v3614
        %3740 = vmatpush1.bf16.msra.mxu0 %v3611
        %3741 = vmatprep.subr.bf16.mxu0 0
        %3742 = vmatpush1.bf16.msra.mxu0 0
        %3743 = vmatprep.subr.bf16.mxu0 0
        %3744 = vmatpush1.bf16.msra.mxu0 0
        %3745 = vmatprep.subr.bf16.mxu0 0
        %3746 = vmatpush1.bf16.msra.mxu0 0
        %3747 = vmatprep.subr.bf16.mxu0 0
        %3748 = vmatpush1.bf16.msra.mxu0 0
        %3749 = vmatprep.subr.bf16.mxu0 0
        %3750 = vmatpush1.bf16.msra.mxu0 0
        %3751 = vmatprep.subr.bf16.mxu0 0
        %3752 = vmatpush1.bf16.msra.mxu0 0
        %3753 = vmatprep.subr.bf16.mxu0 0
        %3754 = vmatpush1.bf16.msra.mxu0 0
        %3755 = vmatprep.subr.bf16.mxu0 0
        %3756 = vmatpush1.bf16.msra.mxu0 0
        %3757 = vmatprep.subr.bf16.mxu0 0
        %3758 = vmatpush1.bf16.msra.mxu0 0
        %3759 = vmatprep.subr.bf16.mxu0 0
        %3760 = vmatpush1.bf16.msra.mxu0 0
        %3761 = vmatprep.subr.bf16.mxu0 0
        %3762 = vmatpush1.bf16.msra.mxu0 0
        %3763 = vmatprep.subr.bf16.mxu0 0
        %3764 = vmatpush1.bf16.msra.mxu0 0
        %3765 = vmatprep.subr.bf16.mxu0 0
        %3766 = vmatpush1.bf16.msra.mxu0 0
        %3767 = vmatprep.subr.bf16.mxu0 0
        %3768 = vmatpush1.bf16.msra.mxu0 0
        %3769 = vmatprep.subr.bf16.mxu0 0
        %3770 = vmatpush1.bf16.msra.mxu0 0
        %3771 = vmatprep.mubr.bf16.mxu0 0
        %3772 = vmatmul.mubr.bf16.gmra.mrb[0].mxu0 %v3590
        %v3773 = vpop.f32.mrb[0].mxu0
        %v3774 = vadd.f32 0.0, %v3773
        %v3775 = vpop.f32.mrb[0].mxu0
        %v3776 = vadd.f32 0.0, %v3775
        %v3777 = vpop.f32.mrb[0].mxu0
        %v3778 = vpop.f32.mrb[0].mxu0
        %3779 = vdwg.mxu0
        %v3780 = vadd.f32 %v3541, %v3651
        %v3781 = vadd.f32 %v3542, %v3653
        %v3782 = vadd.f32 %v3543, %v3692
        %v3783 = vadd.f32 %v3544, %v3694
        %v3784 = vadd.f32 %v3545, %v3733
        %v3785 = vadd.f32 %v3546, %v3735
        %v3786 = vadd.f32 %v3547, %v3774
        %v3787 = vadd.f32 %v3548, %v3776
        %3788 = vrot.lane.b32.xlu0 %v2633, 127
        %v3789 = vpop.permute.xlu0 %3788
        %3790 = vrot.lane.b32.xlu0 %v2634, 127
        %v3791 = vpop.permute.xlu0 %3790
        %3792 = vrot.lane.b32.xlu0 %v2635, 127
        %v3793 = vpop.permute.xlu0 %3792
        %3794 = vrot.lane.b32.xlu0 %v2636, 127
        %v3795 = vpop.permute.xlu0 %3794
        %3796 = vrot.lane.b32.xlu0 %v2637, 127
        %v3797 = vpop.permute.xlu0 %3796
        %3798 = vrot.lane.b32.xlu0 %v2638, 127
        %v3799 = vpop.permute.xlu0 %3798
        %3800 = vrot.lane.b32.xlu0 %v2639, 127
        %v3801 = vpop.permute.xlu0 %3800
        %3802 = vrot.lane.b32.xlu0 %v2640, 127
        %v3803 = vpop.permute.xlu0 %3802
        %v3804 = vsel %vm1576, %v3801, %v3803
        %v3805 = vsel %vm1576, %v3799, %v3801
        %v3806 = vsel %vm1576, %v3797, %v3799
        %v3807 = vsel %vm1576, %v3795, %v3797
        %v3808 = vsel %vm1576, %v3793, %v3795
        %v3809 = vsel %vm1576, %v3791, %v3793
        %v3810 = vsel %vm1576, %v3789, %v3791
        %v3811 = vsel %vm1576, %v3803, %v3789
        %v3812 = vmul.f32 %v3810, %v1586
        %v3813 = vmul.f32 %v3809, %v1594
        %v3814 = vmul.f32 %v3808, %v1587
        %v3815 = vmul.f32 %v3807, %v1595
        %v3816 = vmul.f32 %v3806, %v1588
        %v3817 = vmul.f32 %v3805, %v1596
        %v3818 = vmul.f32 %v3804, %v1589
        %v3819 = vmul.f32 %v3811, %v1597
        %v3820 = vpack.c.bf16 %v3812, %v3812
        %v3821 = vpack.c.bf16 %v3813, %v3813
        %v3822 = vpack.c.bf16 %v3814, %v3814
        %v3823 = vpack.c.bf16 %v3815, %v3815
        %v3824 = vpack.c.bf16 %v3816, %v3816
        %v3825 = vpack.c.bf16 %v3817, %v3817
        %v3826 = vpack.c.bf16 %v3818, %v3818
        %v3827 = vpack.c.bf16 %v3819, %v3819
        %v3829 = vsel %vm405, %v313, 0
        %v3832 = vsel %vm409, %v3820, 0
        %v3835 = vsel %vm409, %v3821, 0
        %v3838 = vsel %vm409, %v3822, 0
        %v3841 = vsel %vm409, %v3823, 0
        %v3844 = vsel %vm409, %v3824, 0
        %v3847 = vsel %vm409, %v3825, 0
        %v3850 = vsel %vm409, %v3826, 0
        %v3853 = vsel %vm409, %v3827, 0
        %3855 = vmatprep.subr.bf16.mxu0 %v3835
        %3856 = vmatpush1.bf16.msra.mxu0 %v3832
        %3857 = vmatprep.subr.bf16.mxu0 0
        %3858 = vmatpush1.bf16.msra.mxu0 0
        %3859 = vmatprep.subr.bf16.mxu0 0
        %3860 = vmatpush1.bf16.msra.mxu0 0
        %3861 = vmatprep.subr.bf16.mxu0 0
        %3862 = vmatpush1.bf16.msra.mxu0 0
        %3863 = vmatprep.subr.bf16.mxu0 0
        %3864 = vmatpush1.bf16.msra.mxu0 0
        %3865 = vmatprep.subr.bf16.mxu0 0
        %3866 = vmatpush1.bf16.msra.mxu0 0
        %3867 = vmatprep.subr.bf16.mxu0 0
        %3868 = vmatpush1.bf16.msra.mxu0 0
        %3869 = vmatprep.subr.bf16.mxu0 0
        %3870 = vmatpush1.bf16.msra.mxu0 0
        %3871 = vmatprep.subr.bf16.mxu0 0
        %3872 = vmatpush1.bf16.msra.mxu0 0
        %3873 = vmatprep.subr.bf16.mxu0 0
        %3874 = vmatpush1.bf16.msra.mxu0 0
        %3875 = vmatprep.subr.bf16.mxu0 0
        %3876 = vmatpush1.bf16.msra.mxu0 0
        %3877 = vmatprep.subr.bf16.mxu0 0
        %3878 = vmatpush1.bf16.msra.mxu0 0
        %3879 = vmatprep.subr.bf16.mxu0 0
        %3880 = vmatpush1.bf16.msra.mxu0 0
        %3881 = vmatprep.subr.bf16.mxu0 0
        %3882 = vmatpush1.bf16.msra.mxu0 0
        %3883 = vmatprep.subr.bf16.mxu0 0
        %3884 = vmatpush1.bf16.msra.mxu0 0
        %3885 = vmatprep.subr.bf16.mxu0 0
        %3886 = vmatpush1.bf16.msra.mxu0 0
        %3887 = vmatprep.mubr.bf16.mxu0 0
        %3888 = vmatmul.mubr.bf16.gmra.mrb[0].mxu0 %v3829
        %v3889 = vpop.f32.mrb[0].mxu0
        %v3890 = vadd.f32 0.0, %v3889
        %v3891 = vpop.f32.mrb[0].mxu0
        %v3892 = vadd.f32 0.0, %v3891
        %v3893 = vpop.f32.mrb[0].mxu0
        %v3894 = vpop.f32.mrb[0].mxu0
        %3895 = vdwg.mxu0
        %3896 = vmatprep.subr.bf16.mxu0 %v3841
        %3897 = vmatpush1.bf16.msra.mxu0 %v3838
        %3898 = vmatprep.subr.bf16.mxu0 0
        %3899 = vmatpush1.bf16.msra.mxu0 0
        %3900 = vmatprep.subr.bf16.mxu0 0
        %3901 = vmatpush1.bf16.msra.mxu0 0
        %3902 = vmatprep.subr.bf16.mxu0 0
        %3903 = vmatpush1.bf16.msra.mxu0 0
        %3904 = vmatprep.subr.bf16.mxu0 0
        %3905 = vmatpush1.bf16.msra.mxu0 0
        %3906 = vmatprep.subr.bf16.mxu0 0
        %3907 = vmatpush1.bf16.msra.mxu0 0
        %3908 = vmatprep.subr.bf16.mxu0 0
        %3909 = vmatpush1.bf16.msra.mxu0 0
        %3910 = vmatprep.subr.bf16.mxu0 0
        %3911 = vmatpush1.bf16.msra.mxu0 0
        %3912 = vmatprep.subr.bf16.mxu0 0
        %3913 = vmatpush1.bf16.msra.mxu0 0
        %3914 = vmatprep.subr.bf16.mxu0 0
        %3915 = vmatpush1.bf16.msra.mxu0 0
        %3916 = vmatprep.subr.bf16.mxu0 0
        %3917 = vmatpush1.bf16.msra.mxu0 0
        %3918 = vmatprep.subr.bf16.mxu0 0
        %3919 = vmatpush1.bf16.msra.mxu0 0
        %3920 = vmatprep.subr.bf16.mxu0 0
        %3921 = vmatpush1.bf16.msra.mxu0 0
        %3922 = vmatprep.subr.bf16.mxu0 0
        %3923 = vmatpush1.bf16.msra.mxu0 0
        %3924 = vmatprep.subr.bf16.mxu0 0
        %3925 = vmatpush1.bf16.msra.mxu0 0
        %3926 = vmatprep.subr.bf16.mxu0 0
        %3927 = vmatpush1.bf16.msra.mxu0 0
        %3928 = vmatprep.mubr.bf16.mxu0 0
        %3929 = vmatmul.mubr.bf16.gmra.mrb[0].mxu0 %v3829
        %v3930 = vpop.f32.mrb[0].mxu0
        %v3931 = vadd.f32 0.0, %v3930
        %v3932 = vpop.f32.mrb[0].mxu0
        %v3933 = vadd.f32 0.0, %v3932
        %v3934 = vpop.f32.mrb[0].mxu0
        %v3935 = vpop.f32.mrb[0].mxu0
        %3936 = vdwg.mxu0
        %3937 = vmatprep.subr.bf16.mxu0 %v3847
        %3938 = vmatpush1.bf16.msra.mxu0 %v3844
        %3939 = vmatprep.subr.bf16.mxu0 0
        %3940 = vmatpush1.bf16.msra.mxu0 0
        %3941 = vmatprep.subr.bf16.mxu0 0
        %3942 = vmatpush1.bf16.msra.mxu0 0
        %3943 = vmatprep.subr.bf16.mxu0 0
        %3944 = vmatpush1.bf16.msra.mxu0 0
        %3945 = vmatprep.subr.bf16.mxu0 0
        %3946 = vmatpush1.bf16.msra.mxu0 0
        %3947 = vmatprep.subr.bf16.mxu0 0
        %3948 = vmatpush1.bf16.msra.mxu0 0
        %3949 = vmatprep.subr.bf16.mxu0 0
        %3950 = vmatpush1.bf16.msra.mxu0 0
        %3951 = vmatprep.subr.bf16.mxu0 0
        %3952 = vmatpush1.bf16.msra.mxu0 0
        %3953 = vmatprep.subr.bf16.mxu0 0
        %3954 = vmatpush1.bf16.msra.mxu0 0
        %3955 = vmatprep.subr.bf16.mxu0 0
        %3956 = vmatpush1.bf16.msra.mxu0 0
        %3957 = vmatprep.subr.bf16.mxu0 0
        %3958 = vmatpush1.bf16.msra.mxu0 0
        %3959 = vmatprep.subr.bf16.mxu0 0
        %3960 = vmatpush1.bf16.msra.mxu0 0
        %3961 = vmatprep.subr.bf16.mxu0 0
        %3962 = vmatpush1.bf16.msra.mxu0 0
        %3963 = vmatprep.subr.bf16.mxu0 0
        %3964 = vmatpush1.bf16.msra.mxu0 0
        %3965 = vmatprep.subr.bf16.mxu0 0
        %3966 = vmatpush1.bf16.msra.mxu0 0
        %3967 = vmatprep.subr.bf16.mxu0 0
        %3968 = vmatpush1.bf16.msra.mxu0 0
        %3969 = vmatprep.mubr.bf16.mxu0 0
        %3970 = vmatmul.mubr.bf16.gmra.mrb[0].mxu0 %v3829
        %v3971 = vpop.f32.mrb[0].mxu0
        %v3972 = vadd.f32 0.0, %v3971
        %v3973 = vpop.f32.mrb[0].mxu0
        %v3974 = vadd.f32 0.0, %v3973
        %v3975 = vpop.f32.mrb[0].mxu0
        %v3976 = vpop.f32.mrb[0].mxu0
        %3977 = vdwg.mxu0
        %3978 = vmatprep.subr.bf16.mxu0 %v3853
        %3979 = vmatpush1.bf16.msra.mxu0 %v3850
        %3980 = vmatprep.subr.bf16.mxu0 0
        %3981 = vmatpush1.bf16.msra.mxu0 0
        %3982 = vmatprep.subr.bf16.mxu0 0
        %3983 = vmatpush1.bf16.msra.mxu0 0
        %3984 = vmatprep.subr.bf16.mxu0 0
        %3985 = vmatpush1.bf16.msra.mxu0 0
        %3986 = vmatprep.subr.bf16.mxu0 0
        %3987 = vmatpush1.bf16.msra.mxu0 0
        %3988 = vmatprep.subr.bf16.mxu0 0
        %3989 = vmatpush1.bf16.msra.mxu0 0
        %3990 = vmatprep.subr.bf16.mxu0 0
        %3991 = vmatpush1.bf16.msra.mxu0 0
        %3992 = vmatprep.subr.bf16.mxu0 0
        %3993 = vmatpush1.bf16.msra.mxu0 0
        %3994 = vmatprep.subr.bf16.mxu0 0
        %3995 = vmatpush1.bf16.msra.mxu0 0
        %3996 = vmatprep.subr.bf16.mxu0 0
        %3997 = vmatpush1.bf16.msra.mxu0 0
        %3998 = vmatprep.subr.bf16.mxu0 0
        %3999 = vmatpush1.bf16.msra.mxu0 0
        %4000 = vmatprep.subr.bf16.mxu0 0
        %4001 = vmatpush1.bf16.msra.mxu0 0
        %4002 = vmatprep.subr.bf16.mxu0 0
        %4003 = vmatpush1.bf16.msra.mxu0 0
        %4004 = vmatprep.subr.bf16.mxu0 0
        %4005 = vmatpush1.bf16.msra.mxu0 0
        %4006 = vmatprep.subr.bf16.mxu0 0
        %4007 = vmatpush1.bf16.msra.mxu0 0
        %4008 = vmatprep.subr.bf16.mxu0 0
        %4009 = vmatpush1.bf16.msra.mxu0 0
        %4010 = vmatprep.mubr.bf16.mxu0 0
        %4011 = vmatmul.mubr.bf16.gmra.mrb[0].mxu0 %v3829
        %v4012 = vpop.f32.mrb[0].mxu0
        %v4013 = vadd.f32 0.0, %v4012
        %v4014 = vpop.f32.mrb[0].mxu0
        %v4015 = vadd.f32 0.0, %v4014
        %v4016 = vpop.f32.mrb[0].mxu0
        %v4017 = vpop.f32.mrb[0].mxu0
        %4018 = vdwg.mxu0
        %v4019 = vadd.f32 %v3780, %v3890
        %v4020 = vadd.f32 %v3781, %v3892
        %v4021 = vadd.f32 %v3782, %v3931
        %v4022 = vadd.f32 %v3783, %v3933
        %v4023 = vadd.f32 %v3784, %v3972
        %v4024 = vadd.f32 %v3785, %v3974
        %v4025 = vadd.f32 %v3786, %v4013
        %v4026 = vadd.f32 %v3787, %v4015
        %4027 = vrot.lane.b32.xlu0 %v2633, 113
        %v4028 = vpop.permute.xlu0 %4027
        %4029 = vrot.lane.b32.xlu0 %v2634, 113
        %v4030 = vpop.permute.xlu0 %4029
        %4031 = vrot.lane.b32.xlu0 %v2635, 113
        %v4032 = vpop.permute.xlu0 %4031
        %4033 = vrot.lane.b32.xlu0 %v2636, 113
        %v4034 = vpop.permute.xlu0 %4033
        %4035 = vrot.lane.b32.xlu0 %v2637, 113
        %v4036 = vpop.permute.xlu0 %4035
        %4037 = vrot.lane.b32.xlu0 %v2638, 113
        %v4038 = vpop.permute.xlu0 %4037
        %4039 = vrot.lane.b32.xlu0 %v2639, 113
        %v4040 = vpop.permute.xlu0 %4039
        %4041 = vrot.lane.b32.xlu0 %v2640, 113
        %v4042 = vpop.permute.xlu0 %4041
        %v4043 = vsel %vm1833, %v4040, %v4042
        %v4044 = vsel %vm1833, %v4038, %v4040
        %v4045 = vsel %vm1833, %v4036, %v4038
        %v4046 = vsel %vm1833, %v4034, %v4036
        %v4047 = vsel %vm1833, %v4032, %v4034
        %v4048 = vsel %vm1833, %v4030, %v4032
        %v4049 = vsel %vm1833, %v4028, %v4030
        %v4050 = vsel %vm1833, %v4042, %v4028
        %v4051 = vmul.f32 %v4049, %v1843
        %v4052 = vmul.f32 %v4048, %v1851
        %v4053 = vmul.f32 %v4047, %v1844
        %v4054 = vmul.f32 %v4046, %v1852
        %v4055 = vmul.f32 %v4045, %v1845
        %v4056 = vmul.f32 %v4044, %v1853
        %v4057 = vmul.f32 %v4043, %v1846
        %v4058 = vmul.f32 %v4050, %v1854
        %v4059 = vpack.c.bf16 %v4051, %v4051
        %v4060 = vpack.c.bf16 %v4052, %v4052
        %v4061 = vpack.c.bf16 %v4053, %v4053
        %v4062 = vpack.c.bf16 %v4054, %v4054
        %v4063 = vpack.c.bf16 %v4055, %v4055
        %v4064 = vpack.c.bf16 %v4056, %v4056
        %v4065 = vpack.c.bf16 %v4057, %v4057
        %v4066 = vpack.c.bf16 %v4058, %v4058
        %v4068 = vsel %vm405, %v315, 0
        %v4071 = vsel %vm409, %v4059, 0
        %v4074 = vsel %vm409, %v4060, 0
        %v4077 = vsel %vm409, %v4061, 0
        %v4080 = vsel %vm409, %v4062, 0
        %v4083 = vsel %vm409, %v4063, 0
        %v4086 = vsel %vm409, %v4064, 0
        %v4089 = vsel %vm409, %v4065, 0
        %v4092 = vsel %vm409, %v4066, 0
        %4094 = vmatprep.subr.bf16.mxu0 %v4074
        %4095 = vmatpush1.bf16.msra.mxu0 %v4071
        %4096 = vmatprep.subr.bf16.mxu0 0
        %4097 = vmatpush1.bf16.msra.mxu0 0
        %4098 = vmatprep.subr.bf16.mxu0 0
        %4099 = vmatpush1.bf16.msra.mxu0 0
        %4100 = vmatprep.subr.bf16.mxu0 0
        %4101 = vmatpush1.bf16.msra.mxu0 0
        %4102 = vmatprep.subr.bf16.mxu0 0
        %4103 = vmatpush1.bf16.msra.mxu0 0
        %4104 = vmatprep.subr.bf16.mxu0 0
        %4105 = vmatpush1.bf16.msra.mxu0 0
        %4106 = vmatprep.subr.bf16.mxu0 0
        %4107 = vmatpush1.bf16.msra.mxu0 0
        %4108 = vmatprep.subr.bf16.mxu0 0
        %4109 = vmatpush1.bf16.msra.mxu0 0
        %4110 = vmatprep.subr.bf16.mxu0 0
        %4111 = vmatpush1.bf16.msra.mxu0 0
        %4112 = vmatprep.subr.bf16.mxu0 0
        %4113 = vmatpush1.bf16.msra.mxu0 0
        %4114 = vmatprep.subr.bf16.mxu0 0
        %4115 = vmatpush1.bf16.msra.mxu0 0
        %4116 = vmatprep.subr.bf16.mxu0 0
        %4117 = vmatpush1.bf16.msra.mxu0 0
        %4118 = vmatprep.subr.bf16.mxu0 0
        %4119 = vmatpush1.bf16.msra.mxu0 0
        %4120 = vmatprep.subr.bf16.mxu0 0
        %4121 = vmatpush1.bf16.msra.mxu0 0
        %4122 = vmatprep.subr.bf16.mxu0 0
        %4123 = vmatpush1.bf16.msra.mxu0 0
        %4124 = vmatprep.subr.bf16.mxu0 0
        %4125 = vmatpush1.bf16.msra.mxu0 0
        %4126 = vmatprep.mubr.bf16.mxu0 0
        %4127 = vmatmul.mubr.bf16.gmra.mrb[0].mxu0 %v4068
        %v4128 = vpop.f32.mrb[0].mxu0
        %v4129 = vadd.f32 0.0, %v4128
        %v4130 = vpop.f32.mrb[0].mxu0
        %v4131 = vadd.f32 0.0, %v4130
        %v4132 = vpop.f32.mrb[0].mxu0
        %v4133 = vpop.f32.mrb[0].mxu0
        %4134 = vdwg.mxu0
        %4135 = vmatprep.subr.bf16.mxu0 %v4080
        %4136 = vmatpush1.bf16.msra.mxu0 %v4077
        %4137 = vmatprep.subr.bf16.mxu0 0
        %4138 = vmatpush1.bf16.msra.mxu0 0
        %4139 = vmatprep.subr.bf16.mxu0 0
        %4140 = vmatpush1.bf16.msra.mxu0 0
        %4141 = vmatprep.subr.bf16.mxu0 0
        %4142 = vmatpush1.bf16.msra.mxu0 0
        %4143 = vmatprep.subr.bf16.mxu0 0
        %4144 = vmatpush1.bf16.msra.mxu0 0
        %4145 = vmatprep.subr.bf16.mxu0 0
        %4146 = vmatpush1.bf16.msra.mxu0 0
        %4147 = vmatprep.subr.bf16.mxu0 0
        %4148 = vmatpush1.bf16.msra.mxu0 0
        %4149 = vmatprep.subr.bf16.mxu0 0
        %4150 = vmatpush1.bf16.msra.mxu0 0
        %4151 = vmatprep.subr.bf16.mxu0 0
        %4152 = vmatpush1.bf16.msra.mxu0 0
        %4153 = vmatprep.subr.bf16.mxu0 0
        %4154 = vmatpush1.bf16.msra.mxu0 0
        %4155 = vmatprep.subr.bf16.mxu0 0
        %4156 = vmatpush1.bf16.msra.mxu0 0
        %4157 = vmatprep.subr.bf16.mxu0 0
        %4158 = vmatpush1.bf16.msra.mxu0 0
        %4159 = vmatprep.subr.bf16.mxu0 0
        %4160 = vmatpush1.bf16.msra.mxu0 0
        %4161 = vmatprep.subr.bf16.mxu0 0
        %4162 = vmatpush1.bf16.msra.mxu0 0
        %4163 = vmatprep.subr.bf16.mxu0 0
        %4164 = vmatpush1.bf16.msra.mxu0 0
        %4165 = vmatprep.subr.bf16.mxu0 0
        %4166 = vmatpush1.bf16.msra.mxu0 0
        %4167 = vmatprep.mubr.bf16.mxu0 0
        %4168 = vmatmul.mubr.bf16.gmra.mrb[0].mxu0 %v4068
        %v4169 = vpop.f32.mrb[0].mxu0
        %v4170 = vadd.f32 0.0, %v4169
        %v4171 = vpop.f32.mrb[0].mxu0
        %v4172 = vadd.f32 0.0, %v4171
        %v4173 = vpop.f32.mrb[0].mxu0
        %v4174 = vpop.f32.mrb[0].mxu0
        %4175 = vdwg.mxu0
        %4176 = vmatprep.subr.bf16.mxu0 %v4086
        %4177 = vmatpush1.bf16.msra.mxu0 %v4083
        %4178 = vmatprep.subr.bf16.mxu0 0
        %4179 = vmatpush1.bf16.msra.mxu0 0
        %4180 = vmatprep.subr.bf16.mxu0 0
        %4181 = vmatpush1.bf16.msra.mxu0 0
        %4182 = vmatprep.subr.bf16.mxu0 0
        %4183 = vmatpush1.bf16.msra.mxu0 0
        %4184 = vmatprep.subr.bf16.mxu0 0
        %4185 = vmatpush1.bf16.msra.mxu0 0
        %4186 = vmatprep.subr.bf16.mxu0 0
        %4187 = vmatpush1.bf16.msra.mxu0 0
        %4188 = vmatprep.subr.bf16.mxu0 0
        %4189 = vmatpush1.bf16.msra.mxu0 0
        %4190 = vmatprep.subr.bf16.mxu0 0
        %4191 = vmatpush1.bf16.msra.mxu0 0
        %4192 = vmatprep.subr.bf16.mxu0 0
        %4193 = vmatpush1.bf16.msra.mxu0 0
        %4194 = vmatprep.subr.bf16.mxu0 0
        %4195 = vmatpush1.bf16.msra.mxu0 0
        %4196 = vmatprep.subr.bf16.mxu0 0
        %4197 = vmatpush1.bf16.msra.mxu0 0
        %4198 = vmatprep.subr.bf16.mxu0 0
        %4199 = vmatpush1.bf16.msra.mxu0 0
        %4200 = vmatprep.subr.bf16.mxu0 0
        %4201 = vmatpush1.bf16.msra.mxu0 0
        %4202 = vmatprep.subr.bf16.mxu0 0
        %4203 = vmatpush1.bf16.msra.mxu0 0
        %4204 = vmatprep.subr.bf16.mxu0 0
        %4205 = vmatpush1.bf16.msra.mxu0 0
        %4206 = vmatprep.subr.bf16.mxu0 0
        %4207 = vmatpush1.bf16.msra.mxu0 0
        %4208 = vmatprep.mubr.bf16.mxu0 0
        %4209 = vmatmul.mubr.bf16.gmra.mrb[0].mxu0 %v4068
        %v4210 = vpop.f32.mrb[0].mxu0
        %v4211 = vadd.f32 0.0, %v4210
        %v4212 = vpop.f32.mrb[0].mxu0
        %v4213 = vadd.f32 0.0, %v4212
        %v4214 = vpop.f32.mrb[0].mxu0
        %v4215 = vpop.f32.mrb[0].mxu0
        %4216 = vdwg.mxu0
        %4217 = vmatprep.subr.bf16.mxu0 %v4092
        %4218 = vmatpush1.bf16.msra.mxu0 %v4089
        %4219 = vmatprep.subr.bf16.mxu0 0
        %4220 = vmatpush1.bf16.msra.mxu0 0
        %4221 = vmatprep.subr.bf16.mxu0 0
        %4222 = vmatpush1.bf16.msra.mxu0 0
        %4223 = vmatprep.subr.bf16.mxu0 0
        %4224 = vmatpush1.bf16.msra.mxu0 0
        %4225 = vmatprep.subr.bf16.mxu0 0
        %4226 = vmatpush1.bf16.msra.mxu0 0
        %4227 = vmatprep.subr.bf16.mxu0 0
        %4228 = vmatpush1.bf16.msra.mxu0 0
        %4229 = vmatprep.subr.bf16.mxu0 0
        %4230 = vmatpush1.bf16.msra.mxu0 0
        %4231 = vmatprep.subr.bf16.mxu0 0
        %4232 = vmatpush1.bf16.msra.mxu0 0
        %4233 = vmatprep.subr.bf16.mxu0 0
        %4234 = vmatpush1.bf16.msra.mxu0 0
        %4235 = vmatprep.subr.bf16.mxu0 0
        %4236 = vmatpush1.bf16.msra.mxu0 0
        %4237 = vmatprep.subr.bf16.mxu0 0
        %4238 = vmatpush1.bf16.msra.mxu0 0
        %4239 = vmatprep.subr.bf16.mxu0 0
        %4240 = vmatpush1.bf16.msra.mxu0 0
        %4241 = vmatprep.subr.bf16.mxu0 0
        %4242 = vmatpush1.bf16.msra.mxu0 0
        %4243 = vmatprep.subr.bf16.mxu0 0
        %4244 = vmatpush1.bf16.msra.mxu0 0
        %4245 = vmatprep.subr.bf16.mxu0 0
        %4246 = vmatpush1.bf16.msra.mxu0 0
        %4247 = vmatprep.subr.bf16.mxu0 0
        %4248 = vmatpush1.bf16.msra.mxu0 0
        %4249 = vmatprep.mubr.bf16.mxu0 0
        %4250 = vmatmul.mubr.bf16.gmra.mrb[0].mxu0 %v4068
        %v4251 = vpop.f32.mrb[0].mxu0
        %v4252 = vadd.f32 0.0, %v4251
        %v4253 = vpop.f32.mrb[0].mxu0
        %v4254 = vadd.f32 0.0, %v4253
        %v4255 = vpop.f32.mrb[0].mxu0
        %v4256 = vpop.f32.mrb[0].mxu0
        %4257 = vdwg.mxu0
        %v4258 = vadd.f32 %v4019, %v4129
        %v4259 = vadd.f32 %v4020, %v4131
        %v4260 = vadd.f32 %v4021, %v4170
        %v4261 = vadd.f32 %v4022, %v4172
        %v4262 = vadd.f32 %v4023, %v4211
        %v4263 = vadd.f32 %v4024, %v4213
        %v4264 = vadd.f32 %v4025, %v4252
        %v4265 = vadd.f32 %v4026, %v4254
        %4266 = vrot.lane.b32.xlu0 %v2633, 112
        %v4267 = vpop.permute.xlu0 %4266
        %4268 = vrot.lane.b32.xlu0 %v2634, 112
        %v4269 = vpop.permute.xlu0 %4268
        %4270 = vrot.lane.b32.xlu0 %v2635, 112
        %v4271 = vpop.permute.xlu0 %4270
        %4272 = vrot.lane.b32.xlu0 %v2636, 112
        %v4273 = vpop.permute.xlu0 %4272
        %4274 = vrot.lane.b32.xlu0 %v2637, 112
        %v4275 = vpop.permute.xlu0 %4274
        %4276 = vrot.lane.b32.xlu0 %v2638, 112
        %v4277 = vpop.permute.xlu0 %4276
        %4278 = vrot.lane.b32.xlu0 %v2639, 112
        %v4279 = vpop.permute.xlu0 %4278
        %4280 = vrot.lane.b32.xlu0 %v2640, 112
        %v4281 = vpop.permute.xlu0 %4280
        %v4282 = vsel %vm2090, %v4279, %v4281
        %v4283 = vsel %vm2090, %v4277, %v4279
        %v4284 = vsel %vm2090, %v4275, %v4277
        %v4285 = vsel %vm2090, %v4273, %v4275
        %v4286 = vsel %vm2090, %v4271, %v4273
        %v4287 = vsel %vm2090, %v4269, %v4271
        %v4288 = vsel %vm2090, %v4267, %v4269
        %v4289 = vsel %vm2090, %v4281, %v4267
        %v4290 = vmul.f32 %v4288, %v2100
        %v4291 = vmul.f32 %v4287, %v2108
        %v4292 = vmul.f32 %v4286, %v2101
        %v4293 = vmul.f32 %v4285, %v2109
        %v4294 = vmul.f32 %v4284, %v2102
        %v4295 = vmul.f32 %v4283, %v2110
        %v4296 = vmul.f32 %v4282, %v2103
        %v4297 = vmul.f32 %v4289, %v2111
        %v4298 = vpack.c.bf16 %v4290, %v4290
        %v4299 = vpack.c.bf16 %v4291, %v4291
        %v4300 = vpack.c.bf16 %v4292, %v4292
        %v4301 = vpack.c.bf16 %v4293, %v4293
        %v4302 = vpack.c.bf16 %v4294, %v4294
        %v4303 = vpack.c.bf16 %v4295, %v4295
        %v4304 = vpack.c.bf16 %v4296, %v4296
        %v4305 = vpack.c.bf16 %v4297, %v4297
        %v4307 = vsel %vm405, %v317, 0
        %v4310 = vsel %vm409, %v4298, 0
        %v4313 = vsel %vm409, %v4299, 0
        %v4316 = vsel %vm409, %v4300, 0
        %v4319 = vsel %vm409, %v4301, 0
        %v4322 = vsel %vm409, %v4302, 0
        %v4325 = vsel %vm409, %v4303, 0
        %v4328 = vsel %vm409, %v4304, 0
        %v4331 = vsel %vm409, %v4305, 0
        %4333 = vmatprep.subr.bf16.mxu0 %v4313
        %4334 = vmatpush1.bf16.msra.mxu0 %v4310
        %4335 = vmatprep.subr.bf16.mxu0 0
        %4336 = vmatpush1.bf16.msra.mxu0 0
        %4337 = vmatprep.subr.bf16.mxu0 0
        %4338 = vmatpush1.bf16.msra.mxu0 0
        %4339 = vmatprep.subr.bf16.mxu0 0
        %4340 = vmatpush1.bf16.msra.mxu0 0
        %4341 = vmatprep.subr.bf16.mxu0 0
        %4342 = vmatpush1.bf16.msra.mxu0 0
        %4343 = vmatprep.subr.bf16.mxu0 0
        %4344 = vmatpush1.bf16.msra.mxu0 0
        %4345 = vmatprep.subr.bf16.mxu0 0
        %4346 = vmatpush1.bf16.msra.mxu0 0
        %4347 = vmatprep.subr.bf16.mxu0 0
        %4348 = vmatpush1.bf16.msra.mxu0 0
        %4349 = vmatprep.subr.bf16.mxu0 0
        %4350 = vmatpush1.bf16.msra.mxu0 0
        %4351 = vmatprep.subr.bf16.mxu0 0
        %4352 = vmatpush1.bf16.msra.mxu0 0
        %4353 = vmatprep.subr.bf16.mxu0 0
        %4354 = vmatpush1.bf16.msra.mxu0 0
        %4355 = vmatprep.subr.bf16.mxu0 0
        %4356 = vmatpush1.bf16.msra.mxu0 0
        %4357 = vmatprep.subr.bf16.mxu0 0
        %4358 = vmatpush1.bf16.msra.mxu0 0
        %4359 = vmatprep.subr.bf16.mxu0 0
        %4360 = vmatpush1.bf16.msra.mxu0 0
        %4361 = vmatprep.subr.bf16.mxu0 0
        %4362 = vmatpush1.bf16.msra.mxu0 0
        %4363 = vmatprep.subr.bf16.mxu0 0
        %4364 = vmatpush1.bf16.msra.mxu0 0
        %4365 = vmatprep.mubr.bf16.mxu0 0
        %4366 = vmatmul.mubr.bf16.gmra.mrb[0].mxu0 %v4307
        %v4367 = vpop.f32.mrb[0].mxu0
        %v4368 = vadd.f32 0.0, %v4367
        %v4369 = vpop.f32.mrb[0].mxu0
        %v4370 = vadd.f32 0.0, %v4369
        %v4371 = vpop.f32.mrb[0].mxu0
        %v4372 = vpop.f32.mrb[0].mxu0
        %4373 = vdwg.mxu0
        %4374 = vmatprep.subr.bf16.mxu0 %v4319
        %4375 = vmatpush1.bf16.msra.mxu0 %v4316
        %4376 = vmatprep.subr.bf16.mxu0 0
        %4377 = vmatpush1.bf16.msra.mxu0 0
        %4378 = vmatprep.subr.bf16.mxu0 0
        %4379 = vmatpush1.bf16.msra.mxu0 0
        %4380 = vmatprep.subr.bf16.mxu0 0
        %4381 = vmatpush1.bf16.msra.mxu0 0
        %4382 = vmatprep.subr.bf16.mxu0 0
        %4383 = vmatpush1.bf16.msra.mxu0 0
        %4384 = vmatprep.subr.bf16.mxu0 0
        %4385 = vmatpush1.bf16.msra.mxu0 0
        %4386 = vmatprep.subr.bf16.mxu0 0
        %4387 = vmatpush1.bf16.msra.mxu0 0
        %4388 = vmatprep.subr.bf16.mxu0 0
        %4389 = vmatpush1.bf16.msra.mxu0 0
        %4390 = vmatprep.subr.bf16.mxu0 0
        %4391 = vmatpush1.bf16.msra.mxu0 0
        %4392 = vmatprep.subr.bf16.mxu0 0
        %4393 = vmatpush1.bf16.msra.mxu0 0
        %4394 = vmatprep.subr.bf16.mxu0 0
        %4395 = vmatpush1.bf16.msra.mxu0 0
        %4396 = vmatprep.subr.bf16.mxu0 0
        %4397 = vmatpush1.bf16.msra.mxu0 0
        %4398 = vmatprep.subr.bf16.mxu0 0
        %4399 = vmatpush1.bf16.msra.mxu0 0
        %4400 = vmatprep.subr.bf16.mxu0 0
        %4401 = vmatpush1.bf16.msra.mxu0 0
        %4402 = vmatprep.subr.bf16.mxu0 0
        %4403 = vmatpush1.bf16.msra.mxu0 0
        %4404 = vmatprep.subr.bf16.mxu0 0
        %4405 = vmatpush1.bf16.msra.mxu0 0
        %4406 = vmatprep.mubr.bf16.mxu0 0
        %4407 = vmatmul.mubr.bf16.gmra.mrb[0].mxu0 %v4307
        %v4408 = vpop.f32.mrb[0].mxu0
        %v4409 = vadd.f32 0.0, %v4408
        %v4410 = vpop.f32.mrb[0].mxu0
        %v4411 = vadd.f32 0.0, %v4410
        %v4412 = vpop.f32.mrb[0].mxu0
        %v4413 = vpop.f32.mrb[0].mxu0
        %4414 = vdwg.mxu0
        %4415 = vmatprep.subr.bf16.mxu0 %v4325
        %4416 = vmatpush1.bf16.msra.mxu0 %v4322
        %4417 = vmatprep.subr.bf16.mxu0 0
        %4418 = vmatpush1.bf16.msra.mxu0 0
        %4419 = vmatprep.subr.bf16.mxu0 0
        %4420 = vmatpush1.bf16.msra.mxu0 0
        %4421 = vmatprep.subr.bf16.mxu0 0
        %4422 = vmatpush1.bf16.msra.mxu0 0
        %4423 = vmatprep.subr.bf16.mxu0 0
        %4424 = vmatpush1.bf16.msra.mxu0 0
        %4425 = vmatprep.subr.bf16.mxu0 0
        %4426 = vmatpush1.bf16.msra.mxu0 0
        %4427 = vmatprep.subr.bf16.mxu0 0
        %4428 = vmatpush1.bf16.msra.mxu0 0
        %4429 = vmatprep.subr.bf16.mxu0 0
        %4430 = vmatpush1.bf16.msra.mxu0 0
        %4431 = vmatprep.subr.bf16.mxu0 0
        %4432 = vmatpush1.bf16.msra.mxu0 0
        %4433 = vmatprep.subr.bf16.mxu0 0
        %4434 = vmatpush1.bf16.msra.mxu0 0
        %4435 = vmatprep.subr.bf16.mxu0 0
        %4436 = vmatpush1.bf16.msra.mxu0 0
        %4437 = vmatprep.subr.bf16.mxu0 0
        %4438 = vmatpush1.bf16.msra.mxu0 0
        %4439 = vmatprep.subr.bf16.mxu0 0
        %4440 = vmatpush1.bf16.msra.mxu0 0
        %4441 = vmatprep.subr.bf16.mxu0 0
        %4442 = vmatpush1.bf16.msra.mxu0 0
        %4443 = vmatprep.subr.bf16.mxu0 0
        %4444 = vmatpush1.bf16.msra.mxu0 0
        %4445 = vmatprep.subr.bf16.mxu0 0
        %4446 = vmatpush1.bf16.msra.mxu0 0
        %4447 = vmatprep.mubr.bf16.mxu0 0
        %4448 = vmatmul.mubr.bf16.gmra.mrb[0].mxu0 %v4307
        %v4449 = vpop.f32.mrb[0].mxu0
        %v4450 = vadd.f32 0.0, %v4449
        %v4451 = vpop.f32.mrb[0].mxu0
        %v4452 = vadd.f32 0.0, %v4451
        %v4453 = vpop.f32.mrb[0].mxu0
        %v4454 = vpop.f32.mrb[0].mxu0
        %4455 = vdwg.mxu0
        %4456 = vmatprep.subr.bf16.mxu0 %v4331
        %4457 = vmatpush1.bf16.msra.mxu0 %v4328
        %4458 = vmatprep.subr.bf16.mxu0 0
        %4459 = vmatpush1.bf16.msra.mxu0 0
        %4460 = vmatprep.subr.bf16.mxu0 0
        %4461 = vmatpush1.bf16.msra.mxu0 0
        %4462 = vmatprep.subr.bf16.mxu0 0
        %4463 = vmatpush1.bf16.msra.mxu0 0
        %4464 = vmatprep.subr.bf16.mxu0 0
        %4465 = vmatpush1.bf16.msra.mxu0 0
        %4466 = vmatprep.subr.bf16.mxu0 0
        %4467 = vmatpush1.bf16.msra.mxu0 0
        %4468 = vmatprep.subr.bf16.mxu0 0
        %4469 = vmatpush1.bf16.msra.mxu0 0
        %4470 = vmatprep.subr.bf16.mxu0 0
        %4471 = vmatpush1.bf16.msra.mxu0 0
        %4472 = vmatprep.subr.bf16.mxu0 0
        %4473 = vmatpush1.bf16.msra.mxu0 0
        %4474 = vmatprep.subr.bf16.mxu0 0
        %4475 = vmatpush1.bf16.msra.mxu0 0
        %4476 = vmatprep.subr.bf16.mxu0 0
        %4477 = vmatpush1.bf16.msra.mxu0 0
        %4478 = vmatprep.subr.bf16.mxu0 0
        %4479 = vmatpush1.bf16.msra.mxu0 0
        %4480 = vmatprep.subr.bf16.mxu0 0
        %4481 = vmatpush1.bf16.msra.mxu0 0
        %4482 = vmatprep.subr.bf16.mxu0 0
        %4483 = vmatpush1.bf16.msra.mxu0 0
        %4484 = vmatprep.subr.bf16.mxu0 0
        %4485 = vmatpush1.bf16.msra.mxu0 0
        %4486 = vmatprep.subr.bf16.mxu0 0
        %4487 = vmatpush1.bf16.msra.mxu0 0
        %4488 = vmatprep.mubr.bf16.mxu0 0
        %4489 = vmatmul.mubr.bf16.gmra.mrb[0].mxu0 %v4307
        %v4490 = vpop.f32.mrb[0].mxu0
        %v4491 = vadd.f32 0.0, %v4490
        %v4492 = vpop.f32.mrb[0].mxu0
        %v4493 = vadd.f32 0.0, %v4492
        %v4494 = vpop.f32.mrb[0].mxu0
        %v4495 = vpop.f32.mrb[0].mxu0
        %4496 = vdwg.mxu0
        %v4497 = vadd.f32 %v4258, %v4368
        %v4498 = vadd.f32 %v4259, %v4370
        %v4499 = vadd.f32 %v4260, %v4409
        %v4500 = vadd.f32 %v4261, %v4411
        %v4501 = vadd.f32 %v4262, %v4450
        %v4502 = vadd.f32 %v4263, %v4452
        %v4503 = vadd.f32 %v4264, %v4491
        %v4504 = vadd.f32 %v4265, %v4493
        %4505 = vrot.lane.b32.xlu0 %v2633, 111
        %v4506 = vpop.permute.xlu0 %4505
        %4507 = vrot.lane.b32.xlu0 %v2634, 111
        %v4508 = vpop.permute.xlu0 %4507
        %4509 = vrot.lane.b32.xlu0 %v2635, 111
        %v4510 = vpop.permute.xlu0 %4509
        %4511 = vrot.lane.b32.xlu0 %v2636, 111
        %v4512 = vpop.permute.xlu0 %4511
        %4513 = vrot.lane.b32.xlu0 %v2637, 111
        %v4514 = vpop.permute.xlu0 %4513
        %4515 = vrot.lane.b32.xlu0 %v2638, 111
        %v4516 = vpop.permute.xlu0 %4515
        %4517 = vrot.lane.b32.xlu0 %v2639, 111
        %v4518 = vpop.permute.xlu0 %4517
        %4519 = vrot.lane.b32.xlu0 %v2640, 111
        %v4520 = vpop.permute.xlu0 %4519
        %v4521 = vsel %vm2347, %v4518, %v4520
        %v4522 = vsel %vm2347, %v4516, %v4518
        %v4523 = vsel %vm2347, %v4514, %v4516
        %v4524 = vsel %vm2347, %v4512, %v4514
        %v4525 = vsel %vm2347, %v4510, %v4512
        %v4526 = vsel %vm2347, %v4508, %v4510
        %v4527 = vsel %vm2347, %v4506, %v4508
        %v4528 = vsel %vm2347, %v4520, %v4506
        %v4529 = vmul.f32 %v4527, %v2357
        %v4530 = vmul.f32 %v4526, %v2365
        %v4531 = vmul.f32 %v4525, %v2358
        %v4532 = vmul.f32 %v4524, %v2366
        %v4533 = vmul.f32 %v4523, %v2359
        %v4534 = vmul.f32 %v4522, %v2367
        %v4535 = vmul.f32 %v4521, %v2360
        %v4536 = vmul.f32 %v4528, %v2368
        %v4537 = vpack.c.bf16 %v4529, %v4529
        %v4538 = vpack.c.bf16 %v4530, %v4530
        %v4539 = vpack.c.bf16 %v4531, %v4531
        %v4540 = vpack.c.bf16 %v4532, %v4532
        %v4541 = vpack.c.bf16 %v4533, %v4533
        %v4542 = vpack.c.bf16 %v4534, %v4534
        %v4543 = vpack.c.bf16 %v4535, %v4535
        %v4544 = vpack.c.bf16 %v4536, %v4536
        %v4546 = vsel %vm405, %v319, 0
        %v4549 = vsel %vm409, %v4537, 0
        %v4552 = vsel %vm409, %v4538, 0
        %v4555 = vsel %vm409, %v4539, 0
        %v4558 = vsel %vm409, %v4540, 0
        %v4561 = vsel %vm409, %v4541, 0
        %v4564 = vsel %vm409, %v4542, 0
        %v4567 = vsel %vm409, %v4543, 0
        %v4570 = vsel %vm409, %v4544, 0
        %4572 = vmatprep.subr.bf16.mxu0 %v4552
        %4573 = vmatpush1.bf16.msra.mxu0 %v4549
        %4574 = vmatprep.subr.bf16.mxu0 0
        %4575 = vmatpush1.bf16.msra.mxu0 0
        %4576 = vmatprep.subr.bf16.mxu0 0
        %4577 = vmatpush1.bf16.msra.mxu0 0
        %4578 = vmatprep.subr.bf16.mxu0 0
        %4579 = vmatpush1.bf16.msra.mxu0 0
        %4580 = vmatprep.subr.bf16.mxu0 0
        %4581 = vmatpush1.bf16.msra.mxu0 0
        %4582 = vmatprep.subr.bf16.mxu0 0
        %4583 = vmatpush1.bf16.msra.mxu0 0
        %4584 = vmatprep.subr.bf16.mxu0 0
        %4585 = vmatpush1.bf16.msra.mxu0 0
        %4586 = vmatprep.subr.bf16.mxu0 0
        %4587 = vmatpush1.bf16.msra.mxu0 0
        %4588 = vmatprep.subr.bf16.mxu0 0
        %4589 = vmatpush1.bf16.msra.mxu0 0
        %4590 = vmatprep.subr.bf16.mxu0 0
        %4591 = vmatpush1.bf16.msra.mxu0 0
        %4592 = vmatprep.subr.bf16.mxu0 0
        %4593 = vmatpush1.bf16.msra.mxu0 0
        %4594 = vmatprep.subr.bf16.mxu0 0
        %4595 = vmatpush1.bf16.msra.mxu0 0
        %4596 = vmatprep.subr.bf16.mxu0 0
        %4597 = vmatpush1.bf16.msra.mxu0 0
        %4598 = vmatprep.subr.bf16.mxu0 0
        %4599 = vmatpush1.bf16.msra.mxu0 0
        %4600 = vmatprep.subr.bf16.mxu0 0
        %4601 = vmatpush1.bf16.msra.mxu0 0
        %4602 = vmatprep.subr.bf16.mxu0 0
        %4603 = vmatpush1.bf16.msra.mxu0 0
        %4604 = vmatprep.mubr.bf16.mxu0 0
        %4605 = vmatmul.mubr.bf16.gmra.mrb[0].mxu0 %v4546
        %v4606 = vpop.f32.mrb[0].mxu0
        %v4607 = vadd.f32 0.0, %v4606
        %v4608 = vpop.f32.mrb[0].mxu0
        %v4609 = vadd.f32 0.0, %v4608
        %v4610 = vpop.f32.mrb[0].mxu0
        %v4611 = vpop.f32.mrb[0].mxu0
        %4612 = vdwg.mxu0
        %4613 = vmatprep.subr.bf16.mxu0 %v4558
        %4614 = vmatpush1.bf16.msra.mxu0 %v4555
        %4615 = vmatprep.subr.bf16.mxu0 0
        %4616 = vmatpush1.bf16.msra.mxu0 0
        %4617 = vmatprep.subr.bf16.mxu0 0
        %4618 = vmatpush1.bf16.msra.mxu0 0
        %4619 = vmatprep.subr.bf16.mxu0 0
        %4620 = vmatpush1.bf16.msra.mxu0 0
        %4621 = vmatprep.subr.bf16.mxu0 0
        %4622 = vmatpush1.bf16.msra.mxu0 0
        %4623 = vmatprep.subr.bf16.mxu0 0
        %4624 = vmatpush1.bf16.msra.mxu0 0
        %4625 = vmatprep.subr.bf16.mxu0 0
        %4626 = vmatpush1.bf16.msra.mxu0 0
        %4627 = vmatprep.subr.bf16.mxu0 0
        %4628 = vmatpush1.bf16.msra.mxu0 0
        %4629 = vmatprep.subr.bf16.mxu0 0
        %4630 = vmatpush1.bf16.msra.mxu0 0
        %4631 = vmatprep.subr.bf16.mxu0 0
        %4632 = vmatpush1.bf16.msra.mxu0 0
        %4633 = vmatprep.subr.bf16.mxu0 0
        %4634 = vmatpush1.bf16.msra.mxu0 0
        %4635 = vmatprep.subr.bf16.mxu0 0
        %4636 = vmatpush1.bf16.msra.mxu0 0
        %4637 = vmatprep.subr.bf16.mxu0 0
        %4638 = vmatpush1.bf16.msra.mxu0 0
        %4639 = vmatprep.subr.bf16.mxu0 0
        %4640 = vmatpush1.bf16.msra.mxu0 0
        %4641 = vmatprep.subr.bf16.mxu0 0
        %4642 = vmatpush1.bf16.msra.mxu0 0
        %4643 = vmatprep.subr.bf16.mxu0 0
        %4644 = vmatpush1.bf16.msra.mxu0 0
        %4645 = vmatprep.mubr.bf16.mxu0 0
        %4646 = vmatmul.mubr.bf16.gmra.mrb[0].mxu0 %v4546
        %v4647 = vpop.f32.mrb[0].mxu0
        %v4648 = vadd.f32 0.0, %v4647
        %v4649 = vpop.f32.mrb[0].mxu0
        %v4650 = vadd.f32 0.0, %v4649
        %v4651 = vpop.f32.mrb[0].mxu0
        %v4652 = vpop.f32.mrb[0].mxu0
        %4653 = vdwg.mxu0
        %4654 = vmatprep.subr.bf16.mxu0 %v4564
        %4655 = vmatpush1.bf16.msra.mxu0 %v4561
        %4656 = vmatprep.subr.bf16.mxu0 0
        %4657 = vmatpush1.bf16.msra.mxu0 0
        %4658 = vmatprep.subr.bf16.mxu0 0
        %4659 = vmatpush1.bf16.msra.mxu0 0
        %4660 = vmatprep.subr.bf16.mxu0 0
        %4661 = vmatpush1.bf16.msra.mxu0 0
        %4662 = vmatprep.subr.bf16.mxu0 0
        %4663 = vmatpush1.bf16.msra.mxu0 0
        %4664 = vmatprep.subr.bf16.mxu0 0
        %4665 = vmatpush1.bf16.msra.mxu0 0
        %4666 = vmatprep.subr.bf16.mxu0 0
        %4667 = vmatpush1.bf16.msra.mxu0 0
        %4668 = vmatprep.subr.bf16.mxu0 0
        %4669 = vmatpush1.bf16.msra.mxu0 0
        %4670 = vmatprep.subr.bf16.mxu0 0
        %4671 = vmatpush1.bf16.msra.mxu0 0
        %4672 = vmatprep.subr.bf16.mxu0 0
        %4673 = vmatpush1.bf16.msra.mxu0 0
        %4674 = vmatprep.subr.bf16.mxu0 0
        %4675 = vmatpush1.bf16.msra.mxu0 0
        %4676 = vmatprep.subr.bf16.mxu0 0
        %4677 = vmatpush1.bf16.msra.mxu0 0
        %4678 = vmatprep.subr.bf16.mxu0 0
        %4679 = vmatpush1.bf16.msra.mxu0 0
        %4680 = vmatprep.subr.bf16.mxu0 0
        %4681 = vmatpush1.bf16.msra.mxu0 0
        %4682 = vmatprep.subr.bf16.mxu0 0
        %4683 = vmatpush1.bf16.msra.mxu0 0
        %4684 = vmatprep.subr.bf16.mxu0 0
        %4685 = vmatpush1.bf16.msra.mxu0 0
        %4686 = vmatprep.mubr.bf16.mxu0 0
        %4687 = vmatmul.mubr.bf16.gmra.mrb[0].mxu0 %v4546
        %v4688 = vpop.f32.mrb[0].mxu0
        %v4689 = vadd.f32 0.0, %v4688
        %v4690 = vpop.f32.mrb[0].mxu0
        %v4691 = vadd.f32 0.0, %v4690
        %v4692 = vpop.f32.mrb[0].mxu0
        %v4693 = vpop.f32.mrb[0].mxu0
        %4694 = vdwg.mxu0
        %4695 = vmatprep.subr.bf16.mxu0 %v4570
        %4696 = vmatpush1.bf16.msra.mxu0 %v4567
        %4697 = vmatprep.subr.bf16.mxu0 0
        %4698 = vmatpush1.bf16.msra.mxu0 0
        %4699 = vmatprep.subr.bf16.mxu0 0
        %4700 = vmatpush1.bf16.msra.mxu0 0
        %4701 = vmatprep.subr.bf16.mxu0 0
        %4702 = vmatpush1.bf16.msra.mxu0 0
        %4703 = vmatprep.subr.bf16.mxu0 0
        %4704 = vmatpush1.bf16.msra.mxu0 0
        %4705 = vmatprep.subr.bf16.mxu0 0
        %4706 = vmatpush1.bf16.msra.mxu0 0
        %4707 = vmatprep.subr.bf16.mxu0 0
        %4708 = vmatpush1.bf16.msra.mxu0 0
        %4709 = vmatprep.subr.bf16.mxu0 0
        %4710 = vmatpush1.bf16.msra.mxu0 0
        %4711 = vmatprep.subr.bf16.mxu0 0
        %4712 = vmatpush1.bf16.msra.mxu0 0
        %4713 = vmatprep.subr.bf16.mxu0 0
        %4714 = vmatpush1.bf16.msra.mxu0 0
        %4715 = vmatprep.subr.bf16.mxu0 0
        %4716 = vmatpush1.bf16.msra.mxu0 0
        %4717 = vmatprep.subr.bf16.mxu0 0
        %4718 = vmatpush1.bf16.msra.mxu0 0
        %4719 = vmatprep.subr.bf16.mxu0 0
        %4720 = vmatpush1.bf16.msra.mxu0 0
        %4721 = vmatprep.subr.bf16.mxu0 0
        %4722 = vmatpush1.bf16.msra.mxu0 0
        %4723 = vmatprep.subr.bf16.mxu0 0
        %4724 = vmatpush1.bf16.msra.mxu0 0
        %4725 = vmatprep.subr.bf16.mxu0 0
        %4726 = vmatpush1.bf16.msra.mxu0 0
        %4727 = vmatprep.mubr.bf16.mxu0 0
        %4728 = vmatmul.mubr.bf16.gmra.mrb[0].mxu0 %v4546
        %v4729 = vpop.f32.mrb[0].mxu0
        %v4730 = vadd.f32 0.0, %v4729
        %v4731 = vpop.f32.mrb[0].mxu0
        %v4732 = vadd.f32 0.0, %v4731
        %v4733 = vpop.f32.mrb[0].mxu0
        %v4734 = vpop.f32.mrb[0].mxu0
        %4735 = vdwg.mxu0
        %v4736 = vadd.f32 %v4497, %v4607
        %v4737 = vadd.f32 %v4498, %v4609
        %v4738 = vadd.f32 %v4499, %v4648
        %v4739 = vadd.f32 %v4500, %v4650
        %v4740 = vadd.f32 %v4501, %v4689
        %v4741 = vadd.f32 %v4502, %v4691
        %v4742 = vadd.f32 %v4503, %v4730
        %v4743 = vadd.f32 %v4504, %v4732
        %4745 = vset.pattern.permute.xlu0 0
        %4746 = vperm.xlu0 %4745, %v321
        %v4747 = vpop.permute.xlu0 %4746
        %v4749 = vadd.f32 %v4736, %v4747
        %v4750 = vadd.f32 %v4737, %v4747
        %v4751 = vadd.f32 %v4738, %v4747
        %v4752 = vadd.f32 %v4739, %v4747
        %v4753 = vadd.f32 %v4740, %v4747
        %v4754 = vadd.f32 %v4741, %v4747
        %v4755 = vadd.f32 %v4742, %v4747
        %v4756 = vadd.f32 %v4743, %v4747
        %v4757 = vadd.f32 %v4749, %v322
        %v4758 = vadd.f32 %v4750, %v330
        %v4759 = vadd.f32 %v4751, %v323
        %v4760 = vadd.f32 %v4752, %v331
        %v4761 = vadd.f32 %v4753, %v324
        %v4762 = vadd.f32 %v4754, %v332
        %v4763 = vadd.f32 %v4755, %v325
        %v4764 = vadd.f32 %v4756, %v333
        %vm4765 = vcmp.gt.f32.partialorder %v4757, 0.0
        %vm4766 = vcmp.gt.f32.partialorder %v4758, 0.0
        %vm4767 = vcmp.gt.f32.partialorder %v4759, 0.0
        %vm4768 = vcmp.gt.f32.partialorder %v4760, 0.0
        %vm4769 = vcmp.gt.f32.partialorder %v4761, 0.0
        %vm4770 = vcmp.gt.f32.partialorder %v4762, 0.0
        %vm4771 = vcmp.gt.f32.partialorder %v4763, 0.0
        %vm4772 = vcmp.gt.f32.partialorder %v4764, 0.0
        %v4773 = vmul.f32 %v4757, 1.442695
        %v4774 = vpow.pop %v4773
        %v4775 = vmul.f32 %v4758, 1.442695
        %v4776 = vpow.pop %v4775
        %v4777 = vmul.f32 %v4759, 1.442695
        %v4778 = vpow.pop %v4777
        %v4779 = vmul.f32 %v4760, 1.442695
        %v4780 = vpow.pop %v4779
        %v4781 = vmul.f32 %v4761, 1.442695
        %v4782 = vpow.pop %v4781
        %v4783 = vmul.f32 %v4762, 1.442695
        %v4784 = vpow.pop %v4783
        %v4785 = vmul.f32 %v4763, 1.442695
        %v4786 = vpow.pop %v4785
        %v4787 = vmul.f32 %v4764, 1.442695
        %v4788 = vpow.pop %v4787
        %v4789 = vsub.f32 %v4774, 1.0
        %v4790 = vsub.f32 %v4776, 1.0
        %v4791 = vsub.f32 %v4778, 1.0
        %v4792 = vsub.f32 %v4780, 1.0
        %v4793 = vsub.f32 %v4782, 1.0
        %v4794 = vsub.f32 %v4784, 1.0
        %v4795 = vsub.f32 %v4786, 1.0
        %v4796 = vsub.f32 %v4788, 1.0
        %v4797 = vsel %vm4765, %v4757, %v4789
        %v4798 = vsel %vm4766, %v4758, %v4790
        %v4799 = vsel %vm4767, %v4759, %v4791
        %v4800 = vsel %vm4768, %v4760, %v4792
        %v4801 = vsel %vm4769, %v4761, %v4793
        %v4802 = vsel %vm4770, %v4762, %v4794
        %v4803 = vsel %vm4771, %v4763, %v4795
        %v4804 = vsel %vm4772, %v4764, %v4796
        %v4813 = vcombine.low %v4797, %v4798
        %v4814 = vcombine.low %v4799, %v4800
        %v4815 = vcombine.low %v4801, %v4802
        %v4816 = vcombine.low %v4803, %v4804
        %4821 = vst [vmem:[%s282] sm:$0xff] %v4813
        %4822 = vst [vmem:[%s282 + $0x8] sm:$0xff] %v4814
        %4823 = vst [vmem:[%s282 + $0x10] sm:$0xff] %v4815
        %4824 = vst [vmem:[%s282 + $0x18] sm:$0xff] %v4816
        %s4825 = sand.u32 %s163, 1
        %s4826 = scalar_lea.sflag [#allocation4], %s4825
        %s4827 = sand.u32 %s163, 1
        %s4828 = smul.addr %s4827, 32
        %s4829 = scalar_lea.vmem [#allocation7], %s4828
        // Predicated region
        $region53: #{tpu_custom_call.1} parent=43 // pred_check
          %p4830 = pneg %p173
        $region54: #{tpu_custom_call.1} parent=43 // pred_check_branch
          %4832 = sbr.rel (%p4830) target = $region56
        $region55: #{tpu_custom_call.1} parent=43 // pred_region
          %s4833 = smul.u32 8, %s24
          %s4835 = ssub.s32 512, 512
          %4836 = vsyncadd %s4826, %s4835
          %s4837 = smul.addr %s4833, 64
          %s4838 = scalar_lea.hbm %s6, %s4837
          %s4840 = sshll.u32 %s4829, 4
          %s4841 = int_to_ptr.vmem [resolvable:$true] %s4840
          %4843 = dma.vmem_to_hbm [thread:$0]  %s4841, 512, %s4838, %s4826
        $region56: #{tpu_custom_call.1} parent=43 // pred_fallthru
          _
      $region44: #{tpu_custom_call.1} parent=5 // pred_fallthru
        _
      %p4844 = scmp.le.s32.totalorder 2, %s19
      // Predicated region
      $region57: #{tpu_custom_call.1} parent=5 // pred_check
        %p4845 = pneg %p4844
      $region58: #{tpu_custom_call.1} parent=5 // pred_check_branch
        %4847 = sbr.rel (%p4845) target = $region60
      $region59: #{tpu_custom_call.1} parent=5 // pred_region
        %s4848 = ssub.s32 %s19, 2
        // Predicated region
        $region61: #{tpu_custom_call.1} parent=59 // pred_check
          %p4849 = pneg %p179
        $region62: #{tpu_custom_call.1} parent=59 // pred_check_branch
          %4851 = sbr.rel (%p4849) target = $region64
        $region63: #{tpu_custom_call.1} parent=59 // pred_region
          %s4852 = sand.u32 %s164, 1
          %s4853 = scalar_lea.sflag [#allocation4], %s4852
          %s4854 = sand.u32 %s164, 1
          %s4855 = smul.addr %s4854, 32
          %s4856 = scalar_lea.vmem [#allocation7], %s4855
          %4857 = dma.done %s4853, 512
        $region64: #{tpu_custom_call.1} parent=59 // pred_fallthru
          _
      $region60: #{tpu_custom_call.1} parent=5 // pred_fallthru
        _
    $region6: #{tpu_custom_call.1} parent=1 // loop_footer
      %s23 = sadd.s32 1, %s19
    $region7: #{tpu_custom_call.1} parent=1 // loop_footer_branch
      %18 = sbr.rel target = $region3
    $region8: #{tpu_custom_call.1} parent=1 // loop_exit
      _
    %4858 = vsyncpa [#allocation3], 1
    %s4859 = scalar_lea.sflag [#allocation3], 1
    %4860 = vsyncpa %s4859, 1
    %4861 = vsyncpa [#allocation6], 1
    %4862 = vsyncpa [#allocation4], 1
    %s4863 = scalar_lea.sflag [#allocation4], 1
    %4864 = vsyncpa %s4863, 1

</llo_original>
